<compile_context>
chip_gen: v7x
topology: tpu7x:2x2x1
jax: 0.10.0
libtpu: 0.0.40
codegen_flags: <defaults>
</compile_context>

<pallas_src>
import functools

import jax
import jax.numpy as jnp
import numpy as np
from jax.experimental import pallas as pl
from jax.experimental.pallas import tpu as pltpu

LANE = 128


# ----------------------------------------------------------------------------
# chip-adaptive limits
# ----------------------------------------------------------------------------
def _query_vmem_capacity():
    try:
        return int(pltpu.get_tpu_info().vmem_capacity_bytes)
    except Exception:
        return 64 * 1024 * 1024          # conservative (v7x-sized) fallback


_VMEM_CAP = _query_vmem_capacity()
_VMEM_LIMIT = max(32 << 20, min((_VMEM_CAP * 3) // 4, 100 << 20))   # 48MiB v7x, 96MiB v5e/v6e
_MAX_TM = 512 if _VMEM_CAP >= (100 << 20) else 256


# ----------------------------------------------------------------------------
# small helpers
# ----------------------------------------------------------------------------
def round_up(x, m):
    return (x + m - 1) // m * m


def pad_axis(a, axis, target):
    if a.shape[axis] == target:
        return a
    cfg = [(0, 0)] * a.ndim
    cfg[axis] = (0, target - a.shape[axis])
    return jnp.pad(a, cfg)


def pick_tm(M, max_tm=_MAX_TM):
    """16-aligned M tile; guarantees >=2 grid steps on the parallel axis when possible."""
    M16 = round_up(max(M, 1), 16)
    tm = min(max_tm, M16)
    if M16 > 16 and (round_up(M16, tm) // tm) < 2:
        tm = round_up((M16 + 1) // 2, 16)
    return tm


# ----------------------------------------------------------------------------
# Pallas kernel 1: matmul + bias (+ ReLU6), resident weights, in-kernel bf16 cast
#   out = act(cast_bf16(X) @ W + b)     X:(M,K) f32/bf16, W:(K,N) bf16 (BN folded)
# ----------------------------------------------------------------------------
def _mm_bias_act_kernel(x_ref, w_ref, b_ref, o_ref, *, relu6):
    x = x_ref[...].astype(jnp.bfloat16)                       # pad/cast fused in-kernel
    y = jnp.dot(x, w_ref[...], preferred_element_type=jnp.float32) + b_ref[...]
    if relu6:
        y = jnp.clip(y, 0.0, 6.0)
    o_ref[...] = y.astype(o_ref.dtype)


def matmul_bias_act(x, w, bias, relu6, out_dtype=jnp.bfloat16):
    M, K = x.shape
    Kw, N = w.shape
    assert K == Kw and N % LANE == 0, (x.shape, w.shape)

    tm = pick_tm(M)
    M_pad = round_up(M, tm)
    if M_pad != M:
        x = pad_axis(x, 0, M_pad)

    out = pl.pallas_call(
        functools.partial(_mm_bias_act_kernel, relu6=relu6),
        out_shape=jax.ShapeDtypeStruct((M_pad, N), out_dtype),
        grid=(M_pad // tm,),
        in_specs=[
            pl.BlockSpec((tm, K), lambda i: (i, 0)),
            pl.BlockSpec((K, N), lambda i: (0, 0)),     # resident weight (constant index)
            pl.BlockSpec((1, N), lambda i: (0, 0)),
        ],
        out_specs=pl.BlockSpec((tm, N), lambda i: (i, 0)),
        compiler_params=pltpu.CompilerParams(
            dimension_semantics=("parallel",),
            vmem_limit_bytes=_VMEM_LIMIT,
        ),
    )(x, w, bias)
    return out[:M] if M_pad != M else out


# ----------------------------------------------------------------------------
# Pallas kernel 2: halo-fused 3x3 stride-s conv + BN + ReLU6 (no im2col in HBM)
#   One grid step per batch image; whole padded image resident in VMEM.
#   For each output row: acc = b; acc += sum_{kh,kw} patch(kh,kw) @ W[kh*3+kw]; clip.
#   plan[kw] = (input_index, col_offset) describes where kernel column kw reads from
#   (stride=1: single padded image; stride=2: even/odd column-parity slabs).
# ----------------------------------------------------------------------------
def _conv3x3_kernel(*refs, n_img, plan, stride, Ho, Wo, N):
    img_refs = refs[:n_img]
    w_ref = refs[n_img]
    b_ref = refs[n_img + 1]
    o_ref = refs[n_img + 2]

    bias_full = jnp.broadcast_to(b_ref[...], (Wo, N)).astype(jnp.float32)

    def row_body(oh, carry):
        acc = bias_full
        for kh in range(3):
            ih = oh * stride + kh
            for kw in range(3):
                src, off = plan[kw]
                patch = img_refs[src][0, ih, pl.ds(off, Wo), :]        # (Wo, C) bf16
                acc = acc + jnp.dot(patch, w_ref[kh * 3 + kw],
                                    preferred_element_type=jnp.float32)
        o_ref[0, oh, :, :] = jnp.clip(acc, 0.0, 6.0).astype(o_ref.dtype)
        return carry

    if Ho <= 16:                       # fully static (unrolled) path for small images
        for oh in range(Ho):
            row_body(oh, 0)
    else:
        jax.lax.fori_loop(0, Ho, row_body, 0)


def conv3x3_bn_relu6(imgs, w, b, stride, Ho, Wo, out_dtype=jnp.bfloat16):
    B, Hp, _, C = imgs[0].shape
    N = w.shape[-1]
    n_img = len(imgs)
    plan = [(0, 0), (0, 1), (0, 2)] if stride == 1 else [(0, 0), (1, 0), (0, 1)]

    in_specs = [pl.BlockSpec((1, Hp, img.shape[2], C), lambda bi: (bi, 0, 0, 0))
                for img in imgs]
    in_specs += [
        pl.BlockSpec((9, C, N), lambda bi: (0, 0, 0)),   # resident conv weights
        pl.BlockSpec((1, N), lambda bi: (0, 0)),
    ]

    kernel = functools.partial(_conv3x3_kernel, n_img=n_img, plan=plan,
                               stride=stride, Ho=Ho, Wo=Wo, N=N)
    return pl.pallas_call(
        kernel,
        out_shape=jax.ShapeDtypeStruct((B, Ho, Wo, N), out_dtype),
        grid=(B,),
        in_specs=in_specs,
        out_specs=pl.BlockSpec((1, Ho, Wo, N), lambda bi: (bi, 0, 0, 0)),
        compiler_params=pltpu.CompilerParams(
            dimension_semantics=("parallel",),
            vmem_limit_bytes=_VMEM_LIMIT,
        ),
    )(*imgs, w, b)


# ----------------------------------------------------------------------------
# Pallas kernel 3: final 1x1 conv fused with shortcut add and ReLU6
#   projection: out = clip((Y @ W3 + b3) + (cast_bf16(Xs) @ Ws + bs), 0, 6)
#   identity  : out = clip((Y @ W3 + b3) + R, 0, 6)
# ----------------------------------------------------------------------------
def _final_proj_kernel(y_ref, w3_ref, b3_ref, xs_ref, ws_ref, bs_ref, o_ref):
    acc = jnp.dot(y_ref[...], w3_ref[...], preferred_element_type=jnp.float32) + b3_ref[...]
    xs = xs_ref[...].astype(jnp.bfloat16)
    acc = acc + jnp.dot(xs, ws_ref[...], preferred_element_type=jnp.float32) + bs_ref[...]
    o_ref[...] = jnp.clip(acc, 0.0, 6.0).astype(o_ref.dtype)


def _final_identity_kernel(y_ref, w3_ref, b3_ref, r_ref, o_ref):
    acc = jnp.dot(y_ref[...], w3_ref[...], preferred_element_type=jnp.float32)
    acc = acc + b3_ref[...] + r_ref[...].astype(jnp.float32)
    o_ref[...] = jnp.clip(acc, 0.0, 6.0).astype(o_ref.dtype)


def final_stage(y, w3, b3, shortcut, out_dtype=jnp.float32):
    """shortcut: ('proj', xs_f32, ws, bs)  or  ('identity', residual_f32)."""
    M, K3 = y.shape
    N = w3.shape[1]
    tm = pick_tm(M)
    M_pad = round_up(M, tm)
    if M_pad != M:
        y = pad_axis(y, 0, M_pad)

    common = dict(
        out_shape=jax.ShapeDtypeStruct((M_pad, N), out_dtype),
        grid=(M_pad // tm,),
        out_specs=pl.BlockSpec((tm, N), lambda i: (i, 0)),
        compiler_params=pltpu.CompilerParams(
            dimension_semantics=("parallel",),
            vmem_limit_bytes=_VMEM_LIMIT,
        ),
    )

    if shortcut[0] == "proj":
        _, xs, ws, bs = shortcut
        Ks = xs.shape[1]
        if M_pad != M:
            xs = pad_axis(xs, 0, M_pad)
        out = pl.pallas_call(
            _final_proj_kernel,
            in_specs=[
                pl.BlockSpec((tm, K3), lambda i: (i, 0)),
                pl.BlockSpec((K3, N), lambda i: (0, 0)),
                pl.BlockSpec((1, N), lambda i: (0, 0)),
                pl.BlockSpec((tm, Ks), lambda i: (i, 0)),
                pl.BlockSpec((Ks, N), lambda i: (0, 0)),
                pl.BlockSpec((1, N), lambda i: (0, 0)),
            ],
            **common,
        )(y, w3, b3, xs, ws, bs)
    else:
        _, res = shortcut
        if M_pad != M:
            res = pad_axis(res, 0, M_pad)
        out = pl.pallas_call(
            _final_identity_kernel,
            in_specs=[
                pl.BlockSpec((tm, K3), lambda i: (i, 0)),
                pl.BlockSpec((K3, N), lambda i: (0, 0)),
                pl.BlockSpec((1, N), lambda i: (0, 0)),
                pl.BlockSpec((tm, N), lambda i: (i, 0)),
            ],
            **common,
        )(y, w3, b3, res)
    return out[:M] if M_pad != M else out


# ----------------------------------------------------------------------------
# Parameter preparation (hoisted once: BN fold, scale-into-weight, padding, bf16 cast)
# ----------------------------------------------------------------------------
def bn_fold(gamma, beta, mean, var, eps=1e-5):
    scale = gamma / jnp.sqrt(var + eps)
    bias = beta - mean * scale
    return scale, bias


def _prep_1x1(w, bn, out_p, in_p=None):
    O, I = w.shape[0], w.shape[1]
    scale, bias = bn_fold(*bn)
    wm = jnp.transpose(w.reshape(O, I), (1, 0)) * scale[None, :]      # (I, O)
    if in_p is not None:
        wm = pad_axis(wm, 0, in_p)
    wm = pad_axis(wm, 1, out_p).astype(jnp.bfloat16)
    b = pad_axis(bias, 0, out_p).reshape(1, out_p).astype(jnp.float32)
    return wm, b


def _prep_3x3(w, bn, cin_p, cout_p):
    scale, bias = bn_fold(*bn)
    wm = jnp.transpose(w, (2, 3, 1, 0)) * scale[None, None, None, :]  # (kh, kw, I, O)
    wm = pad_axis(pad_axis(wm, 2, cin_p), 3, cout_p)
    wm = wm.reshape(9, cin_p, cout_p).astype(jnp.bfloat16)
    b = pad_axis(bias, 0, cout_p).reshape(1, cout_p).astype(jnp.float32)
    return wm, b


def prepare_params(params, in_channels, out_channels, stride):
    Cexp = 4 * out_channels
    Cout_p = round_up(out_channels, LANE)
    Cexp_p = round_up(Cexp, LANE)
    projection = (stride != 1) or (in_channels != Cexp)

    w1, b1 = _prep_1x1(params["w1"], params["bn1"], Cout_p)                 # K = Cin (raw)
    w2, b2 = _prep_3x3(params["w2"], params["bn2"], Cout_p, Cout_p)         # K = Cout_p
    w3, b3 = _prep_1x1(params["w3"], params["bn3"], Cexp_p, in_p=Cout_p)    # K = Cout_p

    prep = dict(Cexp=Cexp, Cout_p=Cout_p, Cexp_p=Cexp_p, projection=projection,
                w1=w1, b1=b1, w2=w2, b2=b2, w3=w3, b3=b3)
    if projection:
        ws, bs = _prep_1x1(params["ws"], params["bns"], Cexp_p)             # K = Cin (raw)
        prep["ws"], prep["bs"] = ws, bs
    return prep


# ----------------------------------------------------------------------------
# Forward
# ----------------------------------------------------------------------------
def bottleneck_forward(x_nchw, prep, stride):
    x = jnp.transpose(x_nchw, (0, 2, 3, 1))            # NCHW -> NHWC, f32
    B, H, W, Cin = x.shape
    Cout_p, Cexp_p, Cexp = prep["Cout_p"], prep["Cexp_p"], prep["Cexp"]

    # stage 1: 1x1 conv + BN + ReLU6   (channel-pad + bf16 cast fused in-kernel)
    M1 = B * H * W
    y1 = matmul_bias_act(x.reshape(M1, Cin), prep["w1"], prep["b1"], relu6=True)
    y1 = y1.reshape(B, H, W, Cout_p)

    # stage 2: 3x3 stride-s conv + BN + ReLU6, halo-fused (no im2col in HBM)
    y1p = jnp.pad(y1, ((0, 0), (1, 1), (1, 1), (0, 0)))           # spatial pad=1, bf16
    Ho = (H - 1) // stride + 1
    Wo = (W - 1) // stride + 1
    if stride == 1:
        imgs = [y1p]
    else:
        # column-parity split (total ~1x traffic) so the kernel only does contiguous reads
        imgs = [y1p[:, :, 0::2, :], y1p[:, :, 1::2, :]]
    y2 = conv3x3_bn_relu6(imgs, prep["w2"], prep["b2"], stride, Ho, Wo)
    M2 = B * Ho * Wo
    y2_2d = y2.reshape(M2, Cout_p)

    # stage 3: 1x1 conv + BN fused with shortcut add and final ReLU6
    if prep["projection"]:
        xs = x[:, ::stride, ::stride, :].reshape(M2, Cin)          # f32, cast in-kernel
        out = final_stage(y2_2d, prep["w3"], prep["b3"],
                          ("proj", xs, prep["ws"], prep["bs"]))
    else:
        res = pad_axis(x.reshape(M2, Cin), 1, Cexp_p)              # identity (Cin == Cexp)
        out = final_stage(y2_2d, prep["w3"], prep["b3"], ("identity", res))

    out = out.reshape(B, Ho, Wo, Cexp_p)[:, :, :, :Cexp]
    return jnp.transpose(out, (0, 3, 1, 2))                        # back to NCHW


# ----------------------------------------------------------------------------
# Pure-JAX reference (lax conv), matching the PyTorch module semantics
# ----------------------------------------------------------------------------
def reference_forward(x, params, stride, eps=1e-5):
    def conv(x, w, s=1, padding='VALID'):
        return jax.lax.conv_general_dilated(
            x, w, (s, s), padding, dimension_numbers=('NCHW', 'OIHW', 'NCHW'))

    def bn(x, p):
        gamma, beta, mean, var = p
        scale = gamma / jnp.sqrt(var + eps)
        return (x * scale[None, :, None, None]
                + (beta - mean * scale)[None, :, None, None])

    def relu6(v):
        return jnp.clip(v, 0.0, 6.0)

    y = relu6(bn(conv(x, params["w1"]), params["bn1"]))
    y = relu6(bn(conv(y, params["w2"], stride, ((1, 1), (1, 1))), params["bn2"]))
    y = bn(conv(y, params["w3"]), params["bn3"])
    if "ws" in params:
        sc = bn(conv(x, params["ws"], stride), params["bns"])
    else:
        sc = x
    return relu6(y + sc)


# ----------------------------------------------------------------------------
# Deterministic parameter construction + run
# ----------------------------------------------------------------------------
def make_params(key, in_channels, out_channels, stride):
    Cexp = out_channels * 4
    ks = jax.random.split(key, 8)

    def bn_params(k, C):
        k1, k2, k3, k4 = jax.random.split(k, 4)
        gamma = 1.0 + 0.1 * jax.random.normal(k1, (C,), jnp.float32)
        beta = 0.1 * jax.random.normal(k2, (C,), jnp.float32)
        mean = 0.1 * jax.random.normal(k3, (C,), jnp.float32)
        var = jnp.abs(1.0 + 0.1 * jax.random.normal(k4, (C,), jnp.float32))
        return (gamma, beta, mean, var)

    params = {
        "w1": 0.1 * jax.random.normal(ks[0], (out_channels, in_channels, 1, 1), jnp.float32),
        "bn1": bn_params(ks[1], out_channels),
        "w2": 0.1 * jax.random.normal(ks[2], (out_channels, out_channels, 3, 3), jnp.float32),
        "bn2": bn_params(ks[3], out_channels),
        "w3": 0.1 * jax.random.normal(ks[4], (Cexp, out_channels, 1, 1), jnp.float32),
        "bn3": bn_params(ks[5], Cexp),
    }
    if stride != 1 or in_channels != Cexp:
        params["ws"] = 0.1 * jax.random.normal(ks[6], (Cexp, in_channels, 1, 1), jnp.float32)
        params["bns"] = bn_params(ks[7], Cexp)
    return params


if __name__ == "__main__":
    key = jax.random.PRNGKey(0)

    configs = [
        # (in_channels, out_channels, stride, B, H, W)
        (16, 8, 2, 2, 8, 8),   # projection shortcut (1x1 conv + BN), stride 2
        (32, 8, 1, 2, 8, 8),   # identity shortcut (stride=1, Cin == 4*Cout)
    ]

    for (cin, cout, stride, B, H, W) in configs:
        key, kx, kp = jax.random.split(key, 3)
        x = jax.random.normal(kx, (B, cin, H, W), jnp.float32)       # NCHW input
        params = make_params(kp, cin, cout, stride)
        prep = prepare_params(params, cin, cout, stride)             # hoisted once

        fwd = jax.jit(lambda x_, _p=prep, _s=stride: bottleneck_forward(x_, _p, _s))
        out = jax.block_until_ready(fwd(x))
        ref = jax.block_until_ready(reference_forward(x, params, stride))

        Ho, Wo = H // stride, W // stride
        assert out.shape == (B, cout * 4, Ho, Wo), out.shape
        np.testing.assert_allclose(np.asarray(out), np.asarray(ref),
                                   rtol=2e-2, atol=2e-2)

    print("KERNEL_OK")
</pallas_src>

<mosaic_0001>
module attributes {stable_mosaic.version = 11 : i64} {
  func.func @_mm_bias_act_kernel(%arg0: i32, %arg1: memref<64x16xf32, #tpu.memory_space<vmem>>, %arg2: memref<16x128xbf16, #tpu.memory_space<vmem>>, %arg3: memref<1x128xf32, #tpu.memory_space<vmem>>, %arg4: memref<64x128xbf16, #tpu.memory_space<vmem>>) attributes {dimension_semantics = [#tpu.dimension_semantics<parallel>], iteration_bounds = array<i64: 2>, scalar_prefetch = 0 : i64, scratch_operands = 0 : i64, tpu.core_type = #tpu.core_type<tc>, window_params = [{transform_indices = @transform_0, window_bounds = array<i64: 64, 16>}, {pipeline_mode = #tpu.pipeline_mode<synchronous>, transform_indices = @transform_1, window_bounds = array<i64: 16, 128>}, {pipeline_mode = #tpu.pipeline_mode<synchronous>, transform_indices = @transform_2, window_bounds = array<i64: 1, 128>}, {transform_indices = @transform_3, window_bounds = array<i64: 64, 128>}]} {
    %c0 = arith.constant 0 : index
    %c0_0 = arith.constant 0 : index
    %0 = vector.load %arg1[%c0, %c0_0] : memref<64x16xf32, #tpu.memory_space<vmem>>, vector<64x16xf32>
    %1 = arith.truncf %0 : vector<64x16xf32> to vector<64x16xbf16>
    %c0_1 = arith.constant 0 : index
    %c0_2 = arith.constant 0 : index
    %2 = vector.load %arg2[%c0_1, %c0_2] : memref<16x128xbf16, #tpu.memory_space<vmem>>, vector<16x128xbf16>
    %cst = arith.constant dense<0.000000e+00> : vector<64x128xf32>
    %3 = tpu.matmul %1, %2, %cst {dimension_numbers = #tpu.dot_dimension_numbers<[1], [0], [0], [1], [0, 0, 1, 1], [], []>} : vector<64x16xbf16>, vector<16x128xbf16>, vector<64x128xf32> -> vector<64x128xf32>
    %c0_3 = arith.constant 0 : index
    %c0_4 = arith.constant 0 : index
    %4 = vector.load %arg3[%c0_3, %c0_4] : memref<1x128xf32, #tpu.memory_space<vmem>>, vector<1x128xf32>
    %5 = vector.broadcast %4 : vector<1x128xf32> to vector<64x128xf32>
    %6 = arith.addf %3, %5 : vector<64x128xf32>
    %cst_5 = arith.constant 0.000000e+00 : f32
    %cst_6 = arith.constant 6.000000e+00 : f32
    %7 = vector.broadcast %cst_5 : f32 to vector<64x128xf32>
    %8 = arith.maximumf %7, %6 : vector<64x128xf32>
    %9 = vector.broadcast %cst_6 : f32 to vector<64x128xf32>
    %10 = arith.minimumf %9, %8 : vector<64x128xf32>
    %11 = arith.truncf %10 : vector<64x128xf32> to vector<64x128xbf16>
    %c0_7 = arith.constant 0 : index
    %c0_8 = arith.constant 0 : index
    %12 = vector.load %arg4[%c0_7, %c0_8] : memref<64x128xbf16, #tpu.memory_space<vmem>>, vector<64x128xbf16>
    tpu.vector_store %arg4[%c0_7, %c0_8], %11 {strides = array<i32>} : memref<64x128xbf16, #tpu.memory_space<vmem>>, vector<64x128xbf16>,
    return
  }
  func.func @transform_0(%arg0: i32) -> (i32, i32) {
    %c0_i32 = arith.constant 0 : i32
    %c0_i32_0 = arith.constant 0 : i32
    return %arg0, %c0_i32 : i32, i32
  }
  func.func @transform_1(%arg0: i32) -> (i32, i32) {
    %c0_i32 = arith.constant 0 : i32
    %c0_i32_0 = arith.constant 0 : i32
    %c0_i32_1 = arith.constant 0 : i32
    return %c0_i32, %c0_i32_0 : i32, i32
  }
  func.func @transform_2(%arg0: i32) -> (i32, i32) {
    %c0_i32 = arith.constant 0 : i32
    %c0_i32_0 = arith.constant 0 : i32
    %c0_i32_1 = arith.constant 0 : i32
    return %c0_i32, %c0_i32_0 : i32, i32
  }
  func.func @transform_3(%arg0: i32) -> (i32, i32) {
    %c0_i32 = arith.constant 0 : i32
    %c0_i32_0 = arith.constant 0 : i32
    return %arg0, %c0_i32 : i32, i32
  }
}

module attributes {stable_mosaic.version = 11 : i64} {
  func.func @_final_proj_kernel(%arg0: i32, %arg1: memref<16x128xbf16, #tpu.memory_space<vmem>>, %arg2: memref<128x128xbf16, #tpu.memory_space<vmem>>, %arg3: memref<1x128xf32, #tpu.memory_space<vmem>>, %arg4: memref<16x16xf32, #tpu.memory_space<vmem>>, %arg5: memref<16x128xbf16, #tpu.memory_space<vmem>>, %arg6: memref<1x128xf32, #tpu.memory_space<vmem>>, %arg7: memref<16x128xf32, #tpu.memory_space<vmem>>) attributes {dimension_semantics = [#tpu.dimension_semantics<parallel>], iteration_bounds = array<i64: 2>, scalar_prefetch = 0 : i64, scratch_operands = 0 : i64, tpu.core_type = #tpu.core_type<tc>, window_params = [{transform_indices = @transform_0, window_bounds = array<i64: 16, 128>}, {pipeline_mode = #tpu.pipeline_mode<synchronous>, transform_indices = @transform_1, window_bounds = array<i64: 128, 128>}, {pipeline_mode = #tpu.pipeline_mode<synchronous>, transform_indices = @transform_2, window_bounds = array<i64: 1, 128>}, {transform_indices = @transform_3, window_bounds = array<i64: 16, 16>}, {pipeline_mode = #tpu.pipeline_mode<synchronous>, transform_indices = @transform_4, window_bounds = array<i64: 16, 128>}, {pipeline_mode = #tpu.pipeline_mode<synchronous>, transform_indices = @transform_5, window_bounds = array<i64: 1, 128>}, {transform_indices = @transform_6, window_bounds = array<i64: 16, 128>}]} {
    %c0 = arith.constant 0 : index
    %c0_0 = arith.constant 0 : index
    %0 = vector.load %arg1[%c0, %c0_0] : memref<16x128xbf16, #tpu.memory_space<vmem>>, vector<16x128xbf16>
    %c0_1 = arith.constant 0 : index
    %c0_2 = arith.constant 0 : index
    %1 = vector.load %arg2[%c0_1, %c0_2] : memref<128x128xbf16, #tpu.memory_space<vmem>>, vector<128x128xbf16>
    %cst = arith.constant dense<0.000000e+00> : vector<16x128xf32>
    %2 = tpu.matmul %0, %1, %cst {dimension_numbers = #tpu.dot_dimension_numbers<[1], [0], [0], [1], [0, 0, 1, 1], [], []>} : vector<16x128xbf16>, vector<128x128xbf16>, vector<16x128xf32> -> vector<16x128xf32>
    %c0_3 = arith.constant 0 : index
    %c0_4 = arith.constant 0 : index
    %3 = vector.load %arg3[%c0_3, %c0_4] : memref<1x128xf32, #tpu.memory_space<vmem>>, vector<1x128xf32>
    %4 = vector.broadcast %3 : vector<1x128xf32> to vector<16x128xf32>
    %5 = arith.addf %2, %4 : vector<16x128xf32>
    %c0_5 = arith.constant 0 : index
    %c0_6 = arith.constant 0 : index
    %6 = vector.load %arg4[%c0_5, %c0_6] : memref<16x16xf32, #tpu.memory_space<vmem>>, vector<16x16xf32>
    %7 = arith.truncf %6 : vector<16x16xf32> to vector<16x16xbf16>
    %c0_7 = arith.constant 0 : index
    %c0_8 = arith.constant 0 : index
    %8 = vector.load %arg5[%c0_7, %c0_8] : memref<16x128xbf16, #tpu.memory_space<vmem>>, vector<16x128xbf16>
    %cst_9 = arith.constant dense<0.000000e+00> : vector<16x128xf32>
    %9 = tpu.matmul %7, %8, %cst_9 {dimension_numbers = #tpu.dot_dimension_numbers<[1], [0], [0], [1], [0, 0, 1, 1], [], []>} : vector<16x16xbf16>, vector<16x128xbf16>, vector<16x128xf32> -> vector<16x128xf32>
    %10 = arith.addf %5, %9 : vector<16x128xf32>
    %c0_10 = arith.constant 0 : index
    %c0_11 = arith.constant 0 : index
    %11 = vector.load %arg6[%c0_10, %c0_11] : memref<1x128xf32, #tpu.memory_space<vmem>>, vector<1x128xf32>
    %12 = vector.broadcast %11 : vector<1x128xf32> to vector<16x128xf32>
    %13 = arith.addf %10, %12 : vector<16x128xf32>
    %cst_12 = arith.constant 0.000000e+00 : f32
    %cst_13 = arith.constant 6.000000e+00 : f32
    %14 = vector.broadcast %cst_12 : f32 to vector<16x128xf32>
    %15 = arith.maximumf %14, %13 : vector<16x128xf32>
    %16 = vector.broadcast %cst_13 : f32 to vector<16x128xf32>
    %17 = arith.minimumf %16, %15 : vector<16x128xf32>
    %c0_14 = arith.constant 0 : index
    %c0_15 = arith.constant 0 : index
    %18 = vector.load %arg7[%c0_14, %c0_15] : memref<16x128xf32, #tpu.memory_space<vmem>>, vector<16x128xf32>
    tpu.vector_store %arg7[%c0_14, %c0_15], %17 {strides = array<i32>} : memref<16x128xf32, #tpu.memory_space<vmem>>, vector<16x128xf32>,
    return
  }
  func.func @transform_0(%arg0: i32) -> (i32, i32) {
    %c0_i32 = arith.constant 0 : i32
    %c0_i32_0 = arith.constant 0 : i32
    return %arg0, %c0_i32 : i32, i32
  }
  func.func @transform_1(%arg0: i32) -> (i32, i32) {
    %c0_i32 = arith.constant 0 : i32
    %c0_i32_0 = arith.constant 0 : i32
    %c0_i32_1 = arith.constant 0 : i32
    return %c0_i32, %c0_i32_0 : i32, i32
  }
  func.func @transform_2(%arg0: i32) -> (i32, i32) {
    %c0_i32 = arith.constant 0 : i32
    %c0_i32_0 = arith.constant 0 : i32
    %c0_i32_1 = arith.constant 0 : i32
    return %c0_i32, %c0_i32_0 : i32, i32
  }
  func.func @transform_3(%arg0: i32) -> (i32, i32) {
    %c0_i32 = arith.constant 0 : i32
    %c0_i32_0 = arith.constant 0 : i32
    return %arg0, %c0_i32 : i32, i32
  }
  func.func @transform_4(%arg0: i32) -> (i32, i32) {
    %c0_i32 = arith.constant 0 : i32
    %c0_i32_0 = arith.constant 0 : i32
    %c0_i32_1 = arith.constant 0 : i32
    return %c0_i32, %c0_i32_0 : i32, i32
  }
  func.func @transform_5(%arg0: i32) -> (i32, i32) {
    %c0_i32 = arith.constant 0 : i32
    %c0_i32_0 = arith.constant 0 : i32
    %c0_i32_1 = arith.constant 0 : i32
    return %c0_i32, %c0_i32_0 : i32, i32
  }
  func.func @transform_6(%arg0: i32) -> (i32, i32) {
    %c0_i32 = arith.constant 0 : i32
    %c0_i32_0 = arith.constant 0 : i32
    return %arg0, %c0_i32 : i32, i32
  }
}

module attributes {stable_mosaic.version = 11 : i64} {
  func.func @_conv3x3_kernel(%arg0: i32, %arg1: memref<1x10x5x128xbf16, #tpu.memory_space<vmem>>, %arg2: memref<1x10x5x128xbf16, #tpu.memory_space<vmem>>, %arg3: memref<9x128x128xbf16, #tpu.memory_space<vmem>>, %arg4: memref<1x128xf32, #tpu.memory_space<vmem>>, %arg5: memref<1x4x4x128xbf16, #tpu.memory_space<vmem>>) attributes {dimension_semantics = [#tpu.dimension_semantics<parallel>], iteration_bounds = array<i64: 2>, scalar_prefetch = 0 : i64, scratch_operands = 0 : i64, tpu.core_type = #tpu.core_type<tc>, window_params = [{transform_indices = @transform_0, window_bounds = array<i64: 1, 10, 5, 128>}, {transform_indices = @transform_1, window_bounds = array<i64: 1, 10, 5, 128>}, {pipeline_mode = #tpu.pipeline_mode<synchronous>, transform_indices = @transform_2, window_bounds = array<i64: 9, 128, 128>}, {pipeline_mode = #tpu.pipeline_mode<synchronous>, transform_indices = @transform_3, window_bounds = array<i64: 1, 128>}, {transform_indices = @transform_4, window_bounds = array<i64: 1, 4, 4, 128>}]} {
    %c0 = arith.constant 0 : index
    %c0_0 = arith.constant 0 : index
    %0 = vector.load %arg4[%c0, %c0_0] : memref<1x128xf32, #tpu.memory_space<vmem>>, vector<1x128xf32>
    %1 = vector.shape_cast %0 : vector<1x128xf32> to vector<1x128xf32>
    %2 = vector.broadcast %1 : vector<1x128xf32> to vector<4x128xf32>
    %c0_1 = arith.constant 0 : index
    %c0_2 = arith.constant 0 : index
    %c0_3 = arith.constant 0 : index
    %c0_4 = arith.constant 0 : index
    %3 = vector.load %arg1[%c0_1, %c0_2, %c0_3, %c0_4] : memref<1x10x5x128xbf16, #tpu.memory_space<vmem>>, vector<1x1x4x128xbf16>
    %4 = vector.shape_cast %3 : vector<1x1x4x128xbf16> to vector<4x128xbf16>
    %c0_5 = arith.constant 0 : index
    %c0_6 = arith.constant 0 : index
    %c0_7 = arith.constant 0 : index
    %5 = vector.load %arg3[%c0_5, %c0_6, %c0_7] : memref<9x128x128xbf16, #tpu.memory_space<vmem>>, vector<1x128x128xbf16>
    %6 = vector.shape_cast %5 : vector<1x128x128xbf16> to vector<128x128xbf16>
    %cst = arith.constant dense<0.000000e+00> : vector<4x128xf32>
    %7 = tpu.matmul %4, %6, %cst {dimension_numbers = #tpu.dot_dimension_numbers<[1], [0], [0], [1], [0, 0, 1, 1], [], []>} : vector<4x128xbf16>, vector<128x128xbf16>, vector<4x128xf32> -> vector<4x128xf32>
    %8 = arith.addf %2, %7 : vector<4x128xf32>
    %c0_8 = arith.constant 0 : index
    %c0_9 = arith.constant 0 : index
    %c0_10 = arith.constant 0 : index
    %c0_11 = arith.constant 0 : index
    %9 = vector.load %arg2[%c0_8, %c0_9, %c0_10, %c0_11] : memref<1x10x5x128xbf16, #tpu.memory_space<vmem>>, vector<1x1x4x128xbf16>
    %10 = vector.shape_cast %9 : vector<1x1x4x128xbf16> to vector<4x128xbf16>
    %c1 = arith.constant 1 : index
    %c0_12 = arith.constant 0 : index
    %c0_13 = arith.constant 0 : index
    %11 = vector.load %arg3[%c1, %c0_12, %c0_13] : memref<9x128x128xbf16, #tpu.memory_space<vmem>>, vector<1x128x128xbf16>
    %12 = vector.shape_cast %11 : vector<1x128x128xbf16> to vector<128x128xbf16>
    %cst_14 = arith.constant dense<0.000000e+00> : vector<4x128xf32>
    %13 = tpu.matmul %10, %12, %cst_14 {dimension_numbers = #tpu.dot_dimension_numbers<[1], [0], [0], [1], [0, 0, 1, 1], [], []>} : vector<4x128xbf16>, vector<128x128xbf16>, vector<4x128xf32> -> vector<4x128xf32>
    %14 = arith.addf %8, %13 : vector<4x128xf32>
    %c0_15 = arith.constant 0 : index
    %c0_16 = arith.constant 0 : index
    %c1_17 = arith.constant 1 : index
    %c0_18 = arith.constant 0 : index
    %15 = vector.load %arg1[%c0_15, %c0_16, %c1_17, %c0_18] : memref<1x10x5x128xbf16, #tpu.memory_space<vmem>>, vector<1x1x4x128xbf16>
    %16 = vector.shape_cast %15 : vector<1x1x4x128xbf16> to vector<4x128xbf16>
    %c2 = arith.constant 2 : index
    %c0_19 = arith.constant 0 : index
    %c0_20 = arith.constant 0 : index
    %17 = vector.load %arg3[%c2, %c0_19, %c0_20] : memref<9x128x128xbf16, #tpu.memory_space<vmem>>, vector<1x128x128xbf16>
    %18 = vector.shape_cast %17 : vector<1x128x128xbf16> to vector<128x128xbf16>
    %cst_21 = arith.constant dense<0.000000e+00> : vector<4x128xf32>
    %19 = tpu.matmul %16, %18, %cst_21 {dimension_numbers = #tpu.dot_dimension_numbers<[1], [0], [0], [1], [0, 0, 1, 1], [], []>} : vector<4x128xbf16>, vector<128x128xbf16>, vector<4x128xf32> -> vector<4x128xf32>
    %20 = arith.addf %14, %19 : vector<4x128xf32>
    %c0_22 = arith.constant 0 : index
    %c1_23 = arith.constant 1 : index
    %c0_24 = arith.constant 0 : index
    %c0_25 = arith.constant 0 : index
    %21 = vector.load %arg1[%c0_22, %c1_23, %c0_24, %c0_25] : memref<1x10x5x128xbf16, #tpu.memory_space<vmem>>, vector<1x1x4x128xbf16>
    %22 = vector.shape_cast %21 : vector<1x1x4x128xbf16> to vector<4x128xbf16>
    %c3 = arith.constant 3 : index
    %c0_26 = arith.constant 0 : index
    %c0_27 = arith.constant 0 : index
    %23 = vector.load %arg3[%c3, %c0_26, %c0_27] : memref<9x128x128xbf16, #tpu.memory_space<vmem>>, vector<1x128x128xbf16>
    %24 = vector.shape_cast %23 : vector<1x128x128xbf16> to vector<128x128xbf16>
    %cst_28 = arith.constant dense<0.000000e+00> : vector<4x128xf32>
    %25 = tpu.matmul %22, %24, %cst_28 {dimension_numbers = #tpu.dot_dimension_numbers<[1], [0], [0], [1], [0, 0, 1, 1], [], []>} : vector<4x128xbf16>, vector<128x128xbf16>, vector<4x128xf32> -> vector<4x128xf32>
    %26 = arith.addf %20, %25 : vector<4x128xf32>
    %c0_29 = arith.constant 0 : index
    %c1_30 = arith.constant 1 : index
    %c0_31 = arith.constant 0 : index
    %c0_32 = arith.constant 0 : index
    %27 = vector.load %arg2[%c0_29, %c1_30, %c0_31, %c0_32] : memref<1x10x5x128xbf16, #tpu.memory_space<vmem>>, vector<1x1x4x128xbf16>
    %28 = vector.shape_cast %27 : vector<1x1x4x128xbf16> to vector<4x128xbf16>
    %c4 = arith.constant 4 : index
    %c0_33 = arith.constant 0 : index
    %c0_34 = arith.constant 0 : index
    %29 = vector.load %arg3[%c4, %c0_33, %c0_34] : memref<9x128x128xbf16, #tpu.memory_space<vmem>>, vector<1x128x128xbf16>
    %30 = vector.shape_cast %29 : vector<1x128x128xbf16> to vector<128x128xbf16>
    %cst_35 = arith.constant dense<0.000000e+00> : vector<4x128xf32>
    %31 = tpu.matmul %28, %30, %cst_35 {dimension_numbers = #tpu.dot_dimension_numbers<[1], [0], [0], [1], [0, 0, 1, 1], [], []>} : vector<4x128xbf16>, vector<128x128xbf16>, vector<4x128xf32> -> vector<4x128xf32>
    %32 = arith.addf %26, %31 : vector<4x128xf32>
    %c0_36 = arith.constant 0 : index
    %c1_37 = arith.constant 1 : index
    %c1_38 = arith.constant 1 : index
    %c0_39 = arith.constant 0 : index
    %33 = vector.load %arg1[%c0_36, %c1_37, %c1_38, %c0_39] : memref<1x10x5x128xbf16, #tpu.memory_space<vmem>>, vector<1x1x4x128xbf16>
    %34 = vector.shape_cast %33 : vector<1x1x4x128xbf16> to vector<4x128xbf16>
    %c5 = arith.constant 5 : index
    %c0_40 = arith.constant 0 : index
    %c0_41 = arith.constant 0 : index
    %35 = vector.load %arg3[%c5, %c0_40, %c0_41] : memref<9x128x128xbf16, #tpu.memory_space<vmem>>, vector<1x128x128xbf16>
    %36 = vector.shape_cast %35 : vector<1x128x128xbf16> to vector<128x128xbf16>
    %cst_42 = arith.constant dense<0.000000e+00> : vector<4x128xf32>
    %37 = tpu.matmul %34, %36, %cst_42 {dimension_numbers = #tpu.dot_dimension_numbers<[1], [0], [0], [1], [0, 0, 1, 1], [], []>} : vector<4x128xbf16>, vector<128x128xbf16>, vector<4x128xf32> -> vector<4x128xf32>
    %38 = arith.addf %32, %37 : vector<4x128xf32>
    %c0_43 = arith.constant 0 : index
    %c2_44 = arith.constant 2 : index
    %c0_45 = arith.constant 0 : index
    %c0_46 = arith.constant 0 : index
    %39 = vector.load %arg1[%c0_43, %c2_44, %c0_45, %c0_46] : memref<1x10x5x128xbf16, #tpu.memory_space<vmem>>, vector<1x1x4x128xbf16>
    %40 = vector.shape_cast %39 : vector<1x1x4x128xbf16> to vector<4x128xbf16>
    %c6 = arith.constant 6 : index
    %c0_47 = arith.constant 0 : index
    %c0_48 = arith.constant 0 : index
    %41 = vector.load %arg3[%c6, %c0_47, %c0_48] : memref<9x128x128xbf16, #tpu.memory_space<vmem>>, vector<1x128x128xbf16>
    %42 = vector.shape_cast %41 : vector<1x128x128xbf16> to vector<128x128xbf16>
    %cst_49 = arith.constant dense<0.000000e+00> : vector<4x128xf32>
    %43 = tpu.matmul %40, %42, %cst_49 {dimension_numbers = #tpu.dot_dimension_numbers<[1], [0], [0], [1], [0, 0, 1, 1], [], []>} : vector<4x128xbf16>, vector<128x128xbf16>, vector<4x128xf32> -> vector<4x128xf32>
    %44 = arith.addf %38, %43 : vector<4x128xf32>
    %c0_50 = arith.constant 0 : index
    %c2_51 = arith.constant 2 : index
    %c0_52 = arith.constant 0 : index
    %c0_53 = arith.constant 0 : index
    %45 = vector.load %arg2[%c0_50, %c2_51, %c0_52, %c0_53] : memref<1x10x5x128xbf16, #tpu.memory_space<vmem>>, vector<1x1x4x128xbf16>
    %46 = vector.shape_cast %45 : vector<1x1x4x128xbf16> to vector<4x128xbf16>
    %c7 = arith.constant 7 : index
    %c0_54 = arith.constant 0 : index
    %c0_55 = arith.constant 0 : index
    %47 = vector.load %arg3[%c7, %c0_54, %c0_55] : memref<9x128x128xbf16, #tpu.memory_space<vmem>>, vector<1x128x128xbf16>
    %48 = vector.shape_cast %47 : vector<1x128x128xbf16> to vector<128x128xbf16>
    %cst_56 = arith.constant dense<0.000000e+00> : vector<4x128xf32>
    %49 = tpu.matmul %46, %48, %cst_56 {dimension_numbers = #tpu.dot_dimension_numbers<[1], [0], [0], [1], [0, 0, 1, 1], [], []>} : vector<4x128xbf16>, vector<128x128xbf16>, vector<4x128xf32> -> vector<4x128xf32>
    %50 = arith.addf %44, %49 : vector<4x128xf32>
    %c0_57 = arith.constant 0 : index
    %c2_58 = arith.constant 2 : index
    %c1_59 = arith.constant 1 : index
    %c0_60 = arith.constant 0 : index
    %51 = vector.load %arg1[%c0_57, %c2_58, %c1_59, %c0_60] : memref<1x10x5x128xbf16, #tpu.memory_space<vmem>>, vector<1x1x4x128xbf16>
    %52 = vector.shape_cast %51 : vector<1x1x4x128xbf16> to vector<4x128xbf16>
    %c8 = arith.constant 8 : index
    %c0_61 = arith.constant 0 : index
    %c0_62 = arith.constant 0 : index
    %53 = vector.load %arg3[%c8, %c0_61, %c0_62] : memref<9x128x128xbf16, #tpu.memory_space<vmem>>, vector<1x128x128xbf16>
    %54 = vector.shape_cast %53 : vector<1x128x128xbf16> to vector<128x128xbf16>
    %cst_63 = arith.constant dense<0.000000e+00> : vector<4x128xf32>
    %55 = tpu.matmul %52, %54, %cst_63 {dimension_numbers = #tpu.dot_dimension_numbers<[1], [0], [0], [1], [0, 0, 1, 1], [], []>} : vector<4x128xbf16>, vector<128x128xbf16>, vector<4x128xf32> -> vector<4x128xf32>
    %56 = arith.addf %50, %55 : vector<4x128xf32>
    %cst_64 = arith.constant 0.000000e+00 : f32
    %cst_65 = arith.constant 6.000000e+00 : f32
    %57 = vector.broadcast %cst_64 : f32 to vector<4x128xf32>
    %58 = arith.maximumf %57, %56 : vector<4x128xf32>
    %59 = vector.broadcast %cst_65 : f32 to vector<4x128xf32>
    %60 = arith.minimumf %59, %58 : vector<4x128xf32>
    %61 = arith.truncf %60 : vector<4x128xf32> to vector<4x128xbf16>
    %c0_66 = arith.constant 0 : index
    %c0_67 = arith.constant 0 : index
    %c0_68 = arith.constant 0 : index
    %c0_69 = arith.constant 0 : index
    %62 = vector.load %arg5[%c0_66, %c0_67, %c0_68, %c0_69] : memref<1x4x4x128xbf16, #tpu.memory_space<vmem>>, vector<1x1x4x128xbf16>
    %63 = vector.shape_cast %62 : vector<1x1x4x128xbf16> to vector<4x128xbf16>
    %64 = vector.shape_cast %61 : vector<4x128xbf16> to vector<1x1x4x128xbf16>
    tpu.vector_store %arg5[%c0_66, %c0_67, %c0_68, %c0_69], %64 {strides = array<i32>} : memref<1x4x4x128xbf16, #tpu.memory_space<vmem>>, vector<1x1x4x128xbf16>,
    %c0_70 = arith.constant 0 : index
    %c2_71 = arith.constant 2 : index
    %c0_72 = arith.constant 0 : index
    %c0_73 = arith.constant 0 : index
    %65 = vector.load %arg1[%c0_70, %c2_71, %c0_72, %c0_73] : memref<1x10x5x128xbf16, #tpu.memory_space<vmem>>, vector<1x1x4x128xbf16>
    %66 = vector.shape_cast %65 : vector<1x1x4x128xbf16> to vector<4x128xbf16>
    %c0_74 = arith.constant 0 : index
    %c0_75 = arith.constant 0 : index
    %c0_76 = arith.constant 0 : index
    %67 = vector.load %arg3[%c0_74, %c0_75, %c0_76] : memref<9x128x128xbf16, #tpu.memory_space<vmem>>, vector<1x128x128xbf16>
    %68 = vector.shape_cast %67 : vector<1x128x128xbf16> to vector<128x128xbf16>
    %cst_77 = arith.constant dense<0.000000e+00> : vector<4x128xf32>
    %69 = tpu.matmul %66, %68, %cst_77 {dimension_numbers = #tpu.dot_dimension_numbers<[1], [0], [0], [1], [0, 0, 1, 1], [], []>} : vector<4x128xbf16>, vector<128x128xbf16>, vector<4x128xf32> -> vector<4x128xf32>
    %70 = arith.addf %2, %69 : vector<4x128xf32>
    %c0_78 = arith.constant 0 : index
    %c2_79 = arith.constant 2 : index
    %c0_80 = arith.constant 0 : index
    %c0_81 = arith.constant 0 : index
    %71 = vector.load %arg2[%c0_78, %c2_79, %c0_80, %c0_81] : memref<1x10x5x128xbf16, #tpu.memory_space<vmem>>, vector<1x1x4x128xbf16>
    %72 = vector.shape_cast %71 : vector<1x1x4x128xbf16> to vector<4x128xbf16>
    %c1_82 = arith.constant 1 : index
    %c0_83 = arith.constant 0 : index
    %c0_84 = arith.constant 0 : index
    %73 = vector.load %arg3[%c1_82, %c0_83, %c0_84] : memref<9x128x128xbf16, #tpu.memory_space<vmem>>, vector<1x128x128xbf16>
    %74 = vector.shape_cast %73 : vector<1x128x128xbf16> to vector<128x128xbf16>
    %cst_85 = arith.constant dense<0.000000e+00> : vector<4x128xf32>
    %75 = tpu.matmul %72, %74, %cst_85 {dimension_numbers = #tpu.dot_dimension_numbers<[1], [0], [0], [1], [0, 0, 1, 1], [], []>} : vector<4x128xbf16>, vector<128x128xbf16>, vector<4x128xf32> -> vector<4x128xf32>
    %76 = arith.addf %70, %75 : vector<4x128xf32>
    %c0_86 = arith.constant 0 : index
    %c2_87 = arith.constant 2 : index
    %c1_88 = arith.constant 1 : index
    %c0_89 = arith.constant 0 : index
    %77 = vector.load %arg1[%c0_86, %c2_87, %c1_88, %c0_89] : memref<1x10x5x128xbf16, #tpu.memory_space<vmem>>, vector<1x1x4x128xbf16>
    %78 = vector.shape_cast %77 : vector<1x1x4x128xbf16> to vector<4x128xbf16>
    %c2_90 = arith.constant 2 : index
    %c0_91 = arith.constant 0 : index
    %c0_92 = arith.constant 0 : index
    %79 = vector.load %arg3[%c2_90, %c0_91, %c0_92] : memref<9x128x128xbf16, #tpu.memory_space<vmem>>, vector<1x128x128xbf16>
    %80 = vector.shape_cast %79 : vector<1x128x128xbf16> to vector<128x128xbf16>
    %cst_93 = arith.constant dense<0.000000e+00> : vector<4x128xf32>
    %81 = tpu.matmul %78, %80, %cst_93 {dimension_numbers = #tpu.dot_dimension_numbers<[1], [0], [0], [1], [0, 0, 1, 1], [], []>} : vector<4x128xbf16>, vector<128x128xbf16>, vector<4x128xf32> -> vector<4x128xf32>
    %82 = arith.addf %76, %81 : vector<4x128xf32>
    %c0_94 = arith.constant 0 : index
    %c3_95 = arith.constant 3 : index
    %c0_96 = arith.constant 0 : index
    %c0_97 = arith.constant 0 : index
    %83 = vector.load %arg1[%c0_94, %c3_95, %c0_96, %c0_97] : memref<1x10x5x128xbf16, #tpu.memory_space<vmem>>, vector<1x1x4x128xbf16>
    %84 = vector.shape_cast %83 : vector<1x1x4x128xbf16> to vector<4x128xbf16>
    %c3_98 = arith.constant 3 : index
    %c0_99 = arith.constant 0 : index
    %c0_100 = arith.constant 0 : index
    %85 = vector.load %arg3[%c3_98, %c0_99, %c0_100] : memref<9x128x128xbf16, #tpu.memory_space<vmem>>, vector<1x128x128xbf16>
    %86 = vector.shape_cast %85 : vector<1x128x128xbf16> to vector<128x128xbf16>
    %cst_101 = arith.constant dense<0.000000e+00> : vector<4x128xf32>
    %87 = tpu.matmul %84, %86, %cst_101 {dimension_numbers = #tpu.dot_dimension_numbers<[1], [0], [0], [1], [0, 0, 1, 1], [], []>} : vector<4x128xbf16>, vector<128x128xbf16>, vector<4x128xf32> -> vector<4x128xf32>
    %88 = arith.addf %82, %87 : vector<4x128xf32>
    %c0_102 = arith.constant 0 : index
    %c3_103 = arith.constant 3 : index
    %c0_104 = arith.constant 0 : index
    %c0_105 = arith.constant 0 : index
    %89 = vector.load %arg2[%c0_102, %c3_103, %c0_104, %c0_105] : memref<1x10x5x128xbf16, #tpu.memory_space<vmem>>, vector<1x1x4x128xbf16>
    %90 = vector.shape_cast %89 : vector<1x1x4x128xbf16> to vector<4x128xbf16>
    %c4_106 = arith.constant 4 : index
    %c0_107 = arith.constant 0 : index
    %c0_108 = arith.constant 0 : index
    %91 = vector.load %arg3[%c4_106, %c0_107, %c0_108] : memref<9x128x128xbf16, #tpu.memory_space<vmem>>, vector<1x128x128xbf16>
    %92 = vector.shape_cast %91 : vector<1x128x128xbf16> to vector<128x128xbf16>
    %cst_109 = arith.constant dense<0.000000e+00> : vector<4x128xf32>
    %93 = tpu.matmul %90, %92, %cst_109 {dimension_numbers = #tpu.dot_dimension_numbers<[1], [0], [0], [1], [0, 0, 1, 1], [], []>} : vector<4x128xbf16>, vector<128x128xbf16>, vector<4x128xf32> -> vector<4x128xf32>
    %94 = arith.addf %88, %93 : vector<4x128xf32>
    %c0_110 = arith.constant 0 : index
    %c3_111 = arith.constant 3 : index
    %c1_112 = arith.constant 1 : index
    %c0_113 = arith.constant 0 : index
    %95 = vector.load %arg1[%c0_110, %c3_111, %c1_112, %c0_113] : memref<1x10x5x128xbf16, #tpu.memory_space<vmem>>, vector<1x1x4x128xbf16>
    %96 = vector.shape_cast %95 : vector<1x1x4x128xbf16> to vector<4x128xbf16>
    %c5_114 = arith.constant 5 : index
    %c0_115 = arith.constant 0 : index
    %c0_116 = arith.constant 0 : index
    %97 = vector.load %arg3[%c5_114, %c0_115, %c0_116] : memref<9x128x128xbf16, #tpu.memory_space<vmem>>, vector<1x128x128xbf16>
    %98 = vector.shape_cast %97 : vector<1x128x128xbf16> to vector<128x128xbf16>
    %cst_117 = arith.constant dense<0.000000e+00> : vector<4x128xf32>
    %99 = tpu.matmul %96, %98, %cst_117 {dimension_numbers = #tpu.dot_dimension_numbers<[1], [0], [0], [1], [0, 0, 1, 1], [], []>} : vector<4x128xbf16>, vector<128x128xbf16>, vector<4x128xf32> -> vector<4x128xf32>
    %100 = arith.addf %94, %99 : vector<4x128xf32>
    %c0_118 = arith.constant 0 : index
    %c4_119 = arith.constant 4 : index
    %c0_120 = arith.constant 0 : index
    %c0_121 = arith.constant 0 : index
    %101 = vector.load %arg1[%c0_118, %c4_119, %c0_120, %c0_121] : memref<1x10x5x128xbf16, #tpu.memory_space<vmem>>, vector<1x1x4x128xbf16>
    %102 = vector.shape_cast %101 : vector<1x1x4x128xbf16> to vector<4x128xbf16>
    %c6_122 = arith.constant 6 : index
    %c0_123 = arith.constant 0 : index
    %c0_124 = arith.constant 0 : index
    %103 = vector.load %arg3[%c6_122, %c0_123, %c0_124] : memref<9x128x128xbf16, #tpu.memory_space<vmem>>, vector<1x128x128xbf16>
    %104 = vector.shape_cast %103 : vector<1x128x128xbf16> to vector<128x128xbf16>
    %cst_125 = arith.constant dense<0.000000e+00> : vector<4x128xf32>
    %105 = tpu.matmul %102, %104, %cst_125 {dimension_numbers = #tpu.dot_dimension_numbers<[1], [0], [0], [1], [0, 0, 1, 1], [], []>} : vector<4x128xbf16>, vector<128x128xbf16>, vector<4x128xf32> -> vector<4x128xf32>
    %106 = arith.addf %100, %105 : vector<4x128xf32>
    %c0_126 = arith.constant 0 : index
    %c4_127 = arith.constant 4 : index
    %c0_128 = arith.constant 0 : index
    %c0_129 = arith.constant 0 : index
    %107 = vector.load %arg2[%c0_126, %c4_127, %c0_128, %c0_129] : memref<1x10x5x128xbf16, #tpu.memory_space<vmem>>, vector<1x1x4x128xbf16>
    %108 = vector.shape_cast %107 : vector<1x1x4x128xbf16> to vector<4x128xbf16>
    %c7_130 = arith.constant 7 : index
    %c0_131 = arith.constant 0 : index
    %c0_132 = arith.constant 0 : index
    %109 = vector.load %arg3[%c7_130, %c0_131, %c0_132] : memref<9x128x128xbf16, #tpu.memory_space<vmem>>, vector<1x128x128xbf16>
    %110 = vector.shape_cast %109 : vector<1x128x128xbf16> to vector<128x128xbf16>
    %cst_133 = arith.constant dense<0.000000e+00> : vector<4x128xf32>
    %111 = tpu.matmul %108, %110, %cst_133 {dimension_numbers = #tpu.dot_dimension_numbers<[1], [0], [0], [1], [0, 0, 1, 1], [], []>} : vector<4x128xbf16>, vector<128x128xbf16>, vector<4x128xf32> -> vector<4x128xf32>
    %112 = arith.addf %106, %111 : vector<4x128xf32>
    %c0_134 = arith.constant 0 : index
    %c4_135 = arith.constant 4 : index
    %c1_136 = arith.constant 1 : index
    %c0_137 = arith.constant 0 : index
    %113 = vector.load %arg1[%c0_134, %c4_135, %c1_136, %c0_137] : memref<1x10x5x128xbf16, #tpu.memory_space<vmem>>, vector<1x1x4x128xbf16>
    %114 = vector.shape_cast %113 : vector<1x1x4x128xbf16> to vector<4x128xbf16>
    %c8_138 = arith.constant 8 : index
    %c0_139 = arith.constant 0 : index
    %c0_140 = arith.constant 0 : index
    %115 = vector.load %arg3[%c8_138, %c0_139, %c0_140] : memref<9x128x128xbf16, #tpu.memory_space<vmem>>, vector<1x128x128xbf16>
    %116 = vector.shape_cast %115 : vector<1x128x128xbf16> to vector<128x128xbf16>
    %cst_141 = arith.constant dense<0.000000e+00> : vector<4x128xf32>
    %117 = tpu.matmul %114, %116, %cst_141 {dimension_numbers = #tpu.dot_dimension_numbers<[1], [0], [0], [1], [0, 0, 1, 1], [], []>} : vector<4x128xbf16>, vector<128x128xbf16>, vector<4x128xf32> -> vector<4x128xf32>
    %118 = arith.addf %112, %117 : vector<4x128xf32>
    %cst_142 = arith.constant 0.000000e+00 : f32
    %cst_143 = arith.constant 6.000000e+00 : f32
    %119 = vector.broadcast %cst_142 : f32 to vector<4x128xf32>
    %120 = arith.maximumf %119, %118 : vector<4x128xf32>
    %121 = vector.broadcast %cst_143 : f32 to vector<4x128xf32>
    %122 = arith.minimumf %121, %120 : vector<4x128xf32>
    %123 = arith.truncf %122 : vector<4x128xf32> to vector<4x128xbf16>
    %c0_144 = arith.constant 0 : index
    %c1_145 = arith.constant 1 : index
    %c0_146 = arith.constant 0 : index
    %c0_147 = arith.constant 0 : index
    %124 = vector.load %arg5[%c0_144, %c1_145, %c0_146, %c0_147] : memref<1x4x4x128xbf16, #tpu.memory_space<vmem>>, vector<1x1x4x128xbf16>
    %125 = vector.shape_cast %124 : vector<1x1x4x128xbf16> to vector<4x128xbf16>
    %126 = vector.shape_cast %123 : vector<4x128xbf16> to vector<1x1x4x128xbf16>
    tpu.vector_store %arg5[%c0_144, %c1_145, %c0_146, %c0_147], %126 {strides = array<i32>} : memref<1x4x4x128xbf16, #tpu.memory_space<vmem>>, vector<1x1x4x128xbf16>,
    %c0_148 = arith.constant 0 : index
    %c4_149 = arith.constant 4 : index
    %c0_150 = arith.constant 0 : index
    %c0_151 = arith.constant 0 : index
    %127 = vector.load %arg1[%c0_148, %c4_149, %c0_150, %c0_151] : memref<1x10x5x128xbf16, #tpu.memory_space<vmem>>, vector<1x1x4x128xbf16>
    %128 = vector.shape_cast %127 : vector<1x1x4x128xbf16> to vector<4x128xbf16>
    %c0_152 = arith.constant 0 : index
    %c0_153 = arith.constant 0 : index
    %c0_154 = arith.constant 0 : index
    %129 = vector.load %arg3[%c0_152, %c0_153, %c0_154] : memref<9x128x128xbf16, #tpu.memory_space<vmem>>, vector<1x128x128xbf16>
    %130 = vector.shape_cast %129 : vector<1x128x128xbf16> to vector<128x128xbf16>
    %cst_155 = arith.constant dense<0.000000e+00> : vector<4x128xf32>
    %131 = tpu.matmul %128, %130, %cst_155 {dimension_numbers = #tpu.dot_dimension_numbers<[1], [0], [0], [1], [0, 0, 1, 1], [], []>} : vector<4x128xbf16>, vector<128x128xbf16>, vector<4x128xf32> -> vector<4x128xf32>
    %132 = arith.addf %2, %131 : vector<4x128xf32>
    %c0_156 = arith.constant 0 : index
    %c4_157 = arith.constant 4 : index
    %c0_158 = arith.constant 0 : index
    %c0_159 = arith.constant 0 : index
    %133 = vector.load %arg2[%c0_156, %c4_157, %c0_158, %c0_159] : memref<1x10x5x128xbf16, #tpu.memory_space<vmem>>, vector<1x1x4x128xbf16>
    %134 = vector.shape_cast %133 : vector<1x1x4x128xbf16> to vector<4x128xbf16>
    %c1_160 = arith.constant 1 : index
    %c0_161 = arith.constant 0 : index
    %c0_162 = arith.constant 0 : index
    %135 = vector.load %arg3[%c1_160, %c0_161, %c0_162] : memref<9x128x128xbf16, #tpu.memory_space<vmem>>, vector<1x128x128xbf16>
    %136 = vector.shape_cast %135 : vector<1x128x128xbf16> to vector<128x128xbf16>
    %cst_163 = arith.constant dense<0.000000e+00> : vector<4x128xf32>
    %137 = tpu.matmul %134, %136, %cst_163 {dimension_numbers = #tpu.dot_dimension_numbers<[1], [0], [0], [1], [0, 0, 1, 1], [], []>} : vector<4x128xbf16>, vector<128x128xbf16>, vector<4x128xf32> -> vector<4x128xf32>
    %138 = arith.addf %132, %137 : vector<4x128xf32>
    %c0_164 = arith.constant 0 : index
    %c4_165 = arith.constant 4 : index
    %c1_166 = arith.constant 1 : index
    %c0_167 = arith.constant 0 : index
    %139 = vector.load %arg1[%c0_164, %c4_165, %c1_166, %c0_167] : memref<1x10x5x128xbf16, #tpu.memory_space<vmem>>, vector<1x1x4x128xbf16>
    %140 = vector.shape_cast %139 : vector<1x1x4x128xbf16> to vector<4x128xbf16>
    %c2_168 = arith.constant 2 : index
    %c0_169 = arith.constant 0 : index
    %c0_170 = arith.constant 0 : index
    %141 = vector.load %arg3[%c2_168, %c0_169, %c0_170] : memref<9x128x128xbf16, #tpu.memory_space<vmem>>, vector<1x128x128xbf16>
    %142 = vector.shape_cast %141 : vector<1x128x128xbf16> to vector<128x128xbf16>
    %cst_171 = arith.constant dense<0.000000e+00> : vector<4x128xf32>
    %143 = tpu.matmul %140, %142, %cst_171 {dimension_numbers = #tpu.dot_dimension_numbers<[1], [0], [0], [1], [0, 0, 1, 1], [], []>} : vector<4x128xbf16>, vector<128x128xbf16>, vector<4x128xf32> -> vector<4x128xf32>
    %144 = arith.addf %138, %143 : vector<4x128xf32>
    %c0_172 = arith.constant 0 : index
    %c5_173 = arith.constant 5 : index
    %c0_174 = arith.constant 0 : index
    %c0_175 = arith.constant 0 : index
    %145 = vector.load %arg1[%c0_172, %c5_173, %c0_174, %c0_175] : memref<1x10x5x128xbf16, #tpu.memory_space<vmem>>, vector<1x1x4x128xbf16>
    %146 = vector.shape_cast %145 : vector<1x1x4x128xbf16> to vector<4x128xbf16>
    %c3_176 = arith.constant 3 : index
    %c0_177 = arith.constant 0 : index
    %c0_178 = arith.constant 0 : index
    %147 = vector.load %arg3[%c3_176, %c0_177, %c0_178] : memref<9x128x128xbf16, #tpu.memory_space<vmem>>, vector<1x128x128xbf16>
    %148 = vector.shape_cast %147 : vector<1x128x128xbf16> to vector<128x128xbf16>
    %cst_179 = arith.constant dense<0.000000e+00> : vector<4x128xf32>
    %149 = tpu.matmul %146, %148, %cst_179 {dimension_numbers = #tpu.dot_dimension_numbers<[1], [0], [0], [1], [0, 0, 1, 1], [], []>} : vector<4x128xbf16>, vector<128x128xbf16>, vector<4x128xf32> -> vector<4x128xf32>
    %150 = arith.addf %144, %149 : vector<4x128xf32>
    %c0_180 = arith.constant 0 : index
    %c5_181 = arith.constant 5 : index
    %c0_182 = arith.constant 0 : index
    %c0_183 = arith.constant 0 : index
    %151 = vector.load %arg2[%c0_180, %c5_181, %c0_182, %c0_183] : memref<1x10x5x128xbf16, #tpu.memory_space<vmem>>, vector<1x1x4x128xbf16>
    %152 = vector.shape_cast %151 : vector<1x1x4x128xbf16> to vector<4x128xbf16>
    %c4_184 = arith.constant 4 : index
    %c0_185 = arith.constant 0 : index
    %c0_186 = arith.constant 0 : index
    %153 = vector.load %arg3[%c4_184, %c0_185, %c0_186] : memref<9x128x128xbf16, #tpu.memory_space<vmem>>, vector<1x128x128xbf16>
    %154 = vector.shape_cast %153 : vector<1x128x128xbf16> to vector<128x128xbf16>
    %cst_187 = arith.constant dense<0.000000e+00> : vector<4x128xf32>
    %155 = tpu.matmul %152, %154, %cst_187 {dimension_numbers = #tpu.dot_dimension_numbers<[1], [0], [0], [1], [0, 0, 1, 1], [], []>} : vector<4x128xbf16>, vector<128x128xbf16>, vector<4x128xf32> -> vector<4x128xf32>
    %156 = arith.addf %150, %155 : vector<4x128xf32>
    %c0_188 = arith.constant 0 : index
    %c5_189 = arith.constant 5 : index
    %c1_190 = arith.constant 1 : index
    %c0_191 = arith.constant 0 : index
    %157 = vector.load %arg1[%c0_188, %c5_189, %c1_190, %c0_191] : memref<1x10x5x128xbf16, #tpu.memory_space<vmem>>, vector<1x1x4x128xbf16>
    %158 = vector.shape_cast %157 : vector<1x1x4x128xbf16> to vector<4x128xbf16>
    %c5_192 = arith.constant 5 : index
    %c0_193 = arith.constant 0 : index
    %c0_194 = arith.constant 0 : index
    %159 = vector.load %arg3[%c5_192, %c0_193, %c0_194] : memref<9x128x128xbf16, #tpu.memory_space<vmem>>, vector<1x128x128xbf16>
    %160 = vector.shape_cast %159 : vector<1x128x128xbf16> to vector<128x128xbf16>
    %cst_195 = arith.constant dense<0.000000e+00> : vector<4x128xf32>
    %161 = tpu.matmul %158, %160, %cst_195 {dimension_numbers = #tpu.dot_dimension_numbers<[1], [0], [0], [1], [0, 0, 1, 1], [], []>} : vector<4x128xbf16>, vector<128x128xbf16>, vector<4x128xf32> -> vector<4x128xf32>
    %162 = arith.addf %156, %161 : vector<4x128xf32>
    %c0_196 = arith.constant 0 : index
    %c6_197 = arith.constant 6 : index
    %c0_198 = arith.constant 0 : index
    %c0_199 = arith.constant 0 : index
    %163 = vector.load %arg1[%c0_196, %c6_197, %c0_198, %c0_199] : memref<1x10x5x128xbf16, #tpu.memory_space<vmem>>, vector<1x1x4x128xbf16>
    %164 = vector.shape_cast %163 : vector<1x1x4x128xbf16> to vector<4x128xbf16>
    %c6_200 = arith.constant 6 : index
    %c0_201 = arith.constant 0 : index
    %c0_202 = arith.constant 0 : index
    %165 = vector.load %arg3[%c6_200, %c0_201, %c0_202] : memref<9x128x128xbf16, #tpu.memory_space<vmem>>, vector<1x128x128xbf16>
    %166 = vector.shape_cast %165 : vector<1x128x128xbf16> to vector<128x128xbf16>
    %cst_203 = arith.constant dense<0.000000e+00> : vector<4x128xf32>
    %167 = tpu.matmul %164, %166, %cst_203 {dimension_numbers = #tpu.dot_dimension_numbers<[1], [0], [0], [1], [0, 0, 1, 1], [], []>} : vector<4x128xbf16>, vector<128x128xbf16>, vector<4x128xf32> -> vector<4x128xf32>
    %168 = arith.addf %162, %167 : vector<4x128xf32>
    %c0_204 = arith.constant 0 : index
    %c6_205 = arith.constant 6 : index
    %c0_206 = arith.constant 0 : index
    %c0_207 = arith.constant 0 : index
    %169 = vector.load %arg2[%c0_204, %c6_205, %c0_206, %c0_207] : memref<1x10x5x128xbf16, #tpu.memory_space<vmem>>, vector<1x1x4x128xbf16>
    %170 = vector.shape_cast %169 : vector<1x1x4x128xbf16> to vector<4x128xbf16>
    %c7_208 = arith.constant 7 : index
    %c0_209 = arith.constant 0 : index
    %c0_210 = arith.constant 0 : index
    %171 = vector.load %arg3[%c7_208, %c0_209, %c0_210] : memref<9x128x128xbf16, #tpu.memory_space<vmem>>, vector<1x128x128xbf16>
    %172 = vector.shape_cast %171 : vector<1x128x128xbf16> to vector<128x128xbf16>
    %cst_211 = arith.constant dense<0.000000e+00> : vector<4x128xf32>
    %173 = tpu.matmul %170, %172, %cst_211 {dimension_numbers = #tpu.dot_dimension_numbers<[1], [0], [0], [1], [0, 0, 1, 1], [], []>} : vector<4x128xbf16>, vector<128x128xbf16>, vector<4x128xf32> -> vector<4x128xf32>
    %174 = arith.addf %168, %173 : vector<4x128xf32>
    %c0_212 = arith.constant 0 : index
    %c6_213 = arith.constant 6 : index
    %c1_214 = arith.constant 1 : index
    %c0_215 = arith.constant 0 : index
    %175 = vector.load %arg1[%c0_212, %c6_213, %c1_214, %c0_215] : memref<1x10x5x128xbf16, #tpu.memory_space<vmem>>, vector<1x1x4x128xbf16>
    %176 = vector.shape_cast %175 : vector<1x1x4x128xbf16> to vector<4x128xbf16>
    %c8_216 = arith.constant 8 : index
    %c0_217 = arith.constant 0 : index
    %c0_218 = arith.constant 0 : index
    %177 = vector.load %arg3[%c8_216, %c0_217, %c0_218] : memref<9x128x128xbf16, #tpu.memory_space<vmem>>, vector<1x128x128xbf16>
    %178 = vector.shape_cast %177 : vector<1x128x128xbf16> to vector<128x128xbf16>
    %cst_219 = arith.constant dense<0.000000e+00> : vector<4x128xf32>
    %179 = tpu.matmul %176, %178, %cst_219 {dimension_numbers = #tpu.dot_dimension_numbers<[1], [0], [0], [1], [0, 0, 1, 1], [], []>} : vector<4x128xbf16>, vector<128x128xbf16>, vector<4x128xf32> -> vector<4x128xf32>
    %180 = arith.addf %174, %179 : vector<4x128xf32>
    %cst_220 = arith.constant 0.000000e+00 : f32
    %cst_221 = arith.constant 6.000000e+00 : f32
    %181 = vector.broadcast %cst_220 : f32 to vector<4x128xf32>
    %182 = arith.maximumf %181, %180 : vector<4x128xf32>
    %183 = vector.broadcast %cst_221 : f32 to vector<4x128xf32>
    %184 = arith.minimumf %183, %182 : vector<4x128xf32>
    %185 = arith.truncf %184 : vector<4x128xf32> to vector<4x128xbf16>
    %c0_222 = arith.constant 0 : index
    %c2_223 = arith.constant 2 : index
    %c0_224 = arith.constant 0 : index
    %c0_225 = arith.constant 0 : index
    %186 = vector.load %arg5[%c0_222, %c2_223, %c0_224, %c0_225] : memref<1x4x4x128xbf16, #tpu.memory_space<vmem>>, vector<1x1x4x128xbf16>
    %187 = vector.shape_cast %186 : vector<1x1x4x128xbf16> to vector<4x128xbf16>
    %188 = vector.shape_cast %185 : vector<4x128xbf16> to vector<1x1x4x128xbf16>
    tpu.vector_store %arg5[%c0_222, %c2_223, %c0_224, %c0_225], %188 {strides = array<i32>} : memref<1x4x4x128xbf16, #tpu.memory_space<vmem>>, vector<1x1x4x128xbf16>,
    %c0_226 = arith.constant 0 : index
    %c6_227 = arith.constant 6 : index
    %c0_228 = arith.constant 0 : index
    %c0_229 = arith.constant 0 : index
    %189 = vector.load %arg1[%c0_226, %c6_227, %c0_228, %c0_229] : memref<1x10x5x128xbf16, #tpu.memory_space<vmem>>, vector<1x1x4x128xbf16>
    %190 = vector.shape_cast %189 : vector<1x1x4x128xbf16> to vector<4x128xbf16>
    %c0_230 = arith.constant 0 : index
    %c0_231 = arith.constant 0 : index
    %c0_232 = arith.constant 0 : index
    %191 = vector.load %arg3[%c0_230, %c0_231, %c0_232] : memref<9x128x128xbf16, #tpu.memory_space<vmem>>, vector<1x128x128xbf16>
    %192 = vector.shape_cast %191 : vector<1x128x128xbf16> to vector<128x128xbf16>
    %cst_233 = arith.constant dense<0.000000e+00> : vector<4x128xf32>
    %193 = tpu.matmul %190, %192, %cst_233 {dimension_numbers = #tpu.dot_dimension_numbers<[1], [0], [0], [1], [0, 0, 1, 1], [], []>} : vector<4x128xbf16>, vector<128x128xbf16>, vector<4x128xf32> -> vector<4x128xf32>
    %194 = arith.addf %2, %193 : vector<4x128xf32>
    %c0_234 = arith.constant 0 : index
    %c6_235 = arith.constant 6 : index
    %c0_236 = arith.constant 0 : index
    %c0_237 = arith.constant 0 : index
    %195 = vector.load %arg2[%c0_234, %c6_235, %c0_236, %c0_237] : memref<1x10x5x128xbf16, #tpu.memory_space<vmem>>, vector<1x1x4x128xbf16>
    %196 = vector.shape_cast %195 : vector<1x1x4x128xbf16> to vector<4x128xbf16>
    %c1_238 = arith.constant 1 : index
    %c0_239 = arith.constant 0 : index
    %c0_240 = arith.constant 0 : index
    %197 = vector.load %arg3[%c1_238, %c0_239, %c0_240] : memref<9x128x128xbf16, #tpu.memory_space<vmem>>, vector<1x128x128xbf16>
    %198 = vector.shape_cast %197 : vector<1x128x128xbf16> to vector<128x128xbf16>
    %cst_241 = arith.constant dense<0.000000e+00> : vector<4x128xf32>
    %199 = tpu.matmul %196, %198, %cst_241 {dimension_numbers = #tpu.dot_dimension_numbers<[1], [0], [0], [1], [0, 0, 1, 1], [], []>} : vector<4x128xbf16>, vector<128x128xbf16>, vector<4x128xf32> -> vector<4x128xf32>
    %200 = arith.addf %194, %199 : vector<4x128xf32>
    %c0_242 = arith.constant 0 : index
    %c6_243 = arith.constant 6 : index
    %c1_244 = arith.constant 1 : index
    %c0_245 = arith.constant 0 : index
    %201 = vector.load %arg1[%c0_242, %c6_243, %c1_244, %c0_245] : memref<1x10x5x128xbf16, #tpu.memory_space<vmem>>, vector<1x1x4x128xbf16>
    %202 = vector.shape_cast %201 : vector<1x1x4x128xbf16> to vector<4x128xbf16>
    %c2_246 = arith.constant 2 : index
    %c0_247 = arith.constant 0 : index
    %c0_248 = arith.constant 0 : index
    %203 = vector.load %arg3[%c2_246, %c0_247, %c0_248] : memref<9x128x128xbf16, #tpu.memory_space<vmem>>, vector<1x128x128xbf16>
    %204 = vector.shape_cast %203 : vector<1x128x128xbf16> to vector<128x128xbf16>
    %cst_249 = arith.constant dense<0.000000e+00> : vector<4x128xf32>
    %205 = tpu.matmul %202, %204, %cst_249 {dimension_numbers = #tpu.dot_dimension_numbers<[1], [0], [0], [1], [0, 0, 1, 1], [], []>} : vector<4x128xbf16>, vector<128x128xbf16>, vector<4x128xf32> -> vector<4x128xf32>
    %206 = arith.addf %200, %205 : vector<4x128xf32>
    %c0_250 = arith.constant 0 : index
    %c7_251 = arith.constant 7 : index
    %c0_252 = arith.constant 0 : index
    %c0_253 = arith.constant 0 : index
    %207 = vector.load %arg1[%c0_250, %c7_251, %c0_252, %c0_253] : memref<1x10x5x128xbf16, #tpu.memory_space<vmem>>, vector<1x1x4x128xbf16>
    %208 = vector.shape_cast %207 : vector<1x1x4x128xbf16> to vector<4x128xbf16>
    %c3_254 = arith.constant 3 : index
    %c0_255 = arith.constant 0 : index
    %c0_256 = arith.constant 0 : index
    %209 = vector.load %arg3[%c3_254, %c0_255, %c0_256] : memref<9x128x128xbf16, #tpu.memory_space<vmem>>, vector<1x128x128xbf16>
    %210 = vector.shape_cast %209 : vector<1x128x128xbf16> to vector<128x128xbf16>
    %cst_257 = arith.constant dense<0.000000e+00> : vector<4x128xf32>
    %211 = tpu.matmul %208, %210, %cst_257 {dimension_numbers = #tpu.dot_dimension_numbers<[1], [0], [0], [1], [0, 0, 1, 1], [], []>} : vector<4x128xbf16>, vector<128x128xbf16>, vector<4x128xf32> -> vector<4x128xf32>
    %212 = arith.addf %206, %211 : vector<4x128xf32>
    %c0_258 = arith.constant 0 : index
    %c7_259 = arith.constant 7 : index
    %c0_260 = arith.constant 0 : index
    %c0_261 = arith.constant 0 : index
    %213 = vector.load %arg2[%c0_258, %c7_259, %c0_260, %c0_261] : memref<1x10x5x128xbf16, #tpu.memory_space<vmem>>, vector<1x1x4x128xbf16>
    %214 = vector.shape_cast %213 : vector<1x1x4x128xbf16> to vector<4x128xbf16>
    %c4_262 = arith.constant 4 : index
    %c0_263 = arith.constant 0 : index
    %c0_264 = arith.constant 0 : index
    %215 = vector.load %arg3[%c4_262, %c0_263, %c0_264] : memref<9x128x128xbf16, #tpu.memory_space<vmem>>, vector<1x128x128xbf16>
    %216 = vector.shape_cast %215 : vector<1x128x128xbf16> to vector<128x128xbf16>
    %cst_265 = arith.constant dense<0.000000e+00> : vector<4x128xf32>
    %217 = tpu.matmul %214, %216, %cst_265 {dimension_numbers = #tpu.dot_dimension_numbers<[1], [0], [0], [1], [0, 0, 1, 1], [], []>} : vector<4x128xbf16>, vector<128x128xbf16>, vector<4x128xf32> -> vector<4x128xf32>
    %218 = arith.addf %212, %217 : vector<4x128xf32>
    %c0_266 = arith.constant 0 : index
    %c7_267 = arith.constant 7 : index
    %c1_268 = arith.constant 1 : index
    %c0_269 = arith.constant 0 : index
    %219 = vector.load %arg1[%c0_266, %c7_267, %c1_268, %c0_269] : memref<1x10x5x128xbf16, #tpu.memory_space<vmem>>, vector<1x1x4x128xbf16>
    %220 = vector.shape_cast %219 : vector<1x1x4x128xbf16> to vector<4x128xbf16>
    %c5_270 = arith.constant 5 : index
    %c0_271 = arith.constant 0 : index
    %c0_272 = arith.constant 0 : index
    %221 = vector.load %arg3[%c5_270, %c0_271, %c0_272] : memref<9x128x128xbf16, #tpu.memory_space<vmem>>, vector<1x128x128xbf16>
    %222 = vector.shape_cast %221 : vector<1x128x128xbf16> to vector<128x128xbf16>
    %cst_273 = arith.constant dense<0.000000e+00> : vector<4x128xf32>
    %223 = tpu.matmul %220, %222, %cst_273 {dimension_numbers = #tpu.dot_dimension_numbers<[1], [0], [0], [1], [0, 0, 1, 1], [], []>} : vector<4x128xbf16>, vector<128x128xbf16>, vector<4x128xf32> -> vector<4x128xf32>
    %224 = arith.addf %218, %223 : vector<4x128xf32>
    %c0_274 = arith.constant 0 : index
    %c8_275 = arith.constant 8 : index
    %c0_276 = arith.constant 0 : index
    %c0_277 = arith.constant 0 : index
    %225 = vector.load %arg1[%c0_274, %c8_275, %c0_276, %c0_277] : memref<1x10x5x128xbf16, #tpu.memory_space<vmem>>, vector<1x1x4x128xbf16>
    %226 = vector.shape_cast %225 : vector<1x1x4x128xbf16> to vector<4x128xbf16>
    %c6_278 = arith.constant 6 : index
    %c0_279 = arith.constant 0 : index
    %c0_280 = arith.constant 0 : index
    %227 = vector.load %arg3[%c6_278, %c0_279, %c0_280] : memref<9x128x128xbf16, #tpu.memory_space<vmem>>, vector<1x128x128xbf16>
    %228 = vector.shape_cast %227 : vector<1x128x128xbf16> to vector<128x128xbf16>
    %cst_281 = arith.constant dense<0.000000e+00> : vector<4x128xf32>
    %229 = tpu.matmul %226, %228, %cst_281 {dimension_numbers = #tpu.dot_dimension_numbers<[1], [0], [0], [1], [0, 0, 1, 1], [], []>} : vector<4x128xbf16>, vector<128x128xbf16>, vector<4x128xf32> -> vector<4x128xf32>
    %230 = arith.addf %224, %229 : vector<4x128xf32>
    %c0_282 = arith.constant 0 : index
    %c8_283 = arith.constant 8 : index
    %c0_284 = arith.constant 0 : index
    %c0_285 = arith.constant 0 : index
    %231 = vector.load %arg2[%c0_282, %c8_283, %c0_284, %c0_285] : memref<1x10x5x128xbf16, #tpu.memory_space<vmem>>, vector<1x1x4x128xbf16>
    %232 = vector.shape_cast %231 : vector<1x1x4x128xbf16> to vector<4x128xbf16>
    %c7_286 = arith.constant 7 : index
    %c0_287 = arith.constant 0 : index
    %c0_288 = arith.constant 0 : index
    %233 = vector.load %arg3[%c7_286, %c0_287, %c0_288] : memref<9x128x128xbf16, #tpu.memory_space<vmem>>, vector<1x128x128xbf16>
    %234 = vector.shape_cast %233 : vector<1x128x128xbf16> to vector<128x128xbf16>
    %cst_289 = arith.constant dense<0.000000e+00> : vector<4x128xf32>
    %235 = tpu.matmul %232, %234, %cst_289 {dimension_numbers = #tpu.dot_dimension_numbers<[1], [0], [0], [1], [0, 0, 1, 1], [], []>} : vector<4x128xbf16>, vector<128x128xbf16>, vector<4x128xf32> -> vector<4x128xf32>
    %236 = arith.addf %230, %235 : vector<4x128xf32>
    %c0_290 = arith.constant 0 : index
    %c8_291 = arith.constant 8 : index
    %c1_292 = arith.constant 1 : index
    %c0_293 = arith.constant 0 : index
    %237 = vector.load %arg1[%c0_290, %c8_291, %c1_292, %c0_293] : memref<1x10x5x128xbf16, #tpu.memory_space<vmem>>, vector<1x1x4x128xbf16>
    %238 = vector.shape_cast %237 : vector<1x1x4x128xbf16> to vector<4x128xbf16>
    %c8_294 = arith.constant 8 : index
    %c0_295 = arith.constant 0 : index
    %c0_296 = arith.constant 0 : index
    %239 = vector.load %arg3[%c8_294, %c0_295, %c0_296] : memref<9x128x128xbf16, #tpu.memory_space<vmem>>, vector<1x128x128xbf16>
    %240 = vector.shape_cast %239 : vector<1x128x128xbf16> to vector<128x128xbf16>
    %cst_297 = arith.constant dense<0.000000e+00> : vector<4x128xf32>
    %241 = tpu.matmul %238, %240, %cst_297 {dimension_numbers = #tpu.dot_dimension_numbers<[1], [0], [0], [1], [0, 0, 1, 1], [], []>} : vector<4x128xbf16>, vector<128x128xbf16>, vector<4x128xf32> -> vector<4x128xf32>
    %242 = arith.addf %236, %241 : vector<4x128xf32>
    %cst_298 = arith.constant 0.000000e+00 : f32
    %cst_299 = arith.constant 6.000000e+00 : f32
    %243 = vector.broadcast %cst_298 : f32 to vector<4x128xf32>
    %244 = arith.maximumf %243, %242 : vector<4x128xf32>
    %245 = vector.broadcast %cst_299 : f32 to vector<4x128xf32>
    %246 = arith.minimumf %245, %244 : vector<4x128xf32>
    %247 = arith.truncf %246 : vector<4x128xf32> to vector<4x128xbf16>
    %c0_300 = arith.constant 0 : index
    %c3_301 = arith.constant 3 : index
    %c0_302 = arith.constant 0 : index
    %c0_303 = arith.constant 0 : index
    %248 = vector.load %arg5[%c0_300, %c3_301, %c0_302, %c0_303] : memref<1x4x4x128xbf16, #tpu.memory_space<vmem>>, vector<1x1x4x128xbf16>
    %249 = vector.shape_cast %248 : vector<1x1x4x128xbf16> to vector<4x128xbf16>
    %250 = vector.shape_cast %247 : vector<4x128xbf16> to vector<1x1x4x128xbf16>
    tpu.vector_store %arg5[%c0_300, %c3_301, %c0_302, %c0_303], %250 {strides = array<i32>} : memref<1x4x4x128xbf16, #tpu.memory_space<vmem>>, vector<1x1x4x128xbf16>,
    return
  }
  func.func @transform_0(%arg0: i32) -> (i32, i32, i32, i32) {
    %c0_i32 = arith.constant 0 : i32
    %c0_i32_0 = arith.constant 0 : i32
    %c0_i32_1 = arith.constant 0 : i32
    %c0_i32_2 = arith.constant 0 : i32
    return %arg0, %c0_i32, %c0_i32_0, %c0_i32_1 : i32, i32, i32, i32
  }
  func.func @transform_1(%arg0: i32) -> (i32, i32, i32, i32) {
    %c0_i32 = arith.constant 0 : i32
    %c0_i32_0 = arith.constant 0 : i32
    %c0_i32_1 = arith.constant 0 : i32
    %c0_i32_2 = arith.constant 0 : i32
    return %arg0, %c0_i32, %c0_i32_0, %c0_i32_1 : i32, i32, i32, i32
  }
  func.func @transform_2(%arg0: i32) -> (i32, i32, i32) {
    %c0_i32 = arith.constant 0 : i32
    %c0_i32_0 = arith.constant 0 : i32
    %c0_i32_1 = arith.constant 0 : i32
    %c0_i32_2 = arith.constant 0 : i32
    return %c0_i32, %c0_i32_0, %c0_i32_1 : i32, i32, i32
  }
  func.func @transform_3(%arg0: i32) -> (i32, i32) {
    %c0_i32 = arith.constant 0 : i32
    %c0_i32_0 = arith.constant 0 : i32
    %c0_i32_1 = arith.constant 0 : i32
    return %c0_i32, %c0_i32_0 : i32, i32
  }
  func.func @transform_4(%arg0: i32) -> (i32, i32, i32, i32) {
    %c0_i32 = arith.constant 0 : i32
    %c0_i32_0 = arith.constant 0 : i32
    %c0_i32_1 = arith.constant 0 : i32
    %c0_i32_2 = arith.constant 0 : i32
    return %arg0, %c0_i32, %c0_i32_0, %c0_i32_1 : i32, i32, i32, i32
  }
}

</mosaic_0001>

<llo_original>
// kernel: _lambda_.3
$region0: #{_lambda_.3}
  #allocation0 [shape = 'u32[]', space=smem, size = 0x4, offset = 0x4, fixed_abs, tag = 'smem constant byte address 0x4 - core index']
  #allocation1 [shape = 'u32[144,128]{1,0:T(1,128)}', space=vmem, size = 0x12000, scoped, tag = 'internal scratch']
  %s0 = inlined_call_operand.hbm [shape: f32[128,16], index: 0, kind: input, shape index: {}]
  %s1 = inlined_call_operand.vmem [shape: bf16[16,128], index: 1, kind: input, shape index: {}]
  %s2 = inlined_call_operand.vmem [shape: f32[1,128], index: 2, kind: input, shape index: {}]
  %s3 = inlined_call_operand.vmem [shape: bf16[128,128], index: 3, kind: output, shape index: {}]
  %s4 = sld [smem:[#allocation0]]
  $region49: #{_lambda_.3} parent=0
    _
  %s6 = ssub.s32 1, %s4
  %s7 = scalar_select 0, %s6, %s4
  $region1: #{_lambda_.3} parent=0
    #allocation2 [shape = 'u8[65536]{0}', space=vmem, size = 0x10000, scoped, tag = 'input window, operand 0']
    #allocation3 [shape = 's32[2]{0}', space=sflag, size = 0x8, scoped, tag = 'scoped memory for _lambda_.3']
    %8 = vsyncpa [#allocation3], 0
    %s9 = scalar_lea.sflag [#allocation3], 1
    %10 = vsyncpa %s9, 0
    loop: start=0, step=1, limit=4
    $region2: #{_lambda_.3} parent=1 // loop_pre_header
      _
    $region3: #{_lambda_.3} parent=1 // loop_header
      %s12 = sphi 0, %s16
      %p13 = scmp.ge.s32.totalorder %s12, 4
      %s22 = sphi 0, %s24
      %s25 = sphi 0, %s22
      %s26 = sphi 0, %s25
      %s42 = sphi 0, %s26
      %s46 = sphi 0, %s46
      %s48 = sphi 0, %s46
      %s49 = sphi 0, %s48
      %s63 = sphi 0, %s49
      %s67 = sphi 0, %s67
      %s69 = sphi 0, %s67
      %s70 = sphi 0, %s69
      %s84 = sphi 0, %s70
      %s90 = sphi 0, %s92
      %s93 = sphi 0, %s90
      %s94 = sphi 0, %s93
      %s110 = sphi 0, %s94
    $region4: #{_lambda_.3} parent=1 // loop_header_branch
      %15 = sbr.rel (%p13) target = $region8
    $region5: #{_lambda_.3} parent=1 // loop_body
      %s17 = ssub.s32 %s12, 1
      %s18 = ssub.s32 %s12, 2
      %s19 = sadd.s32 %s12, 1
      %s20 = ssub.s32 %s12, %s19
      %p21 = scmp.eq.s32.totalorder %s20, 0
      %s23 = sadd.s32 %s22, 1
      %s24 = scalar_select %p21, %s22, %s23
      %p27 = pneg %p21
      %p28 = scmp.eq.s32.totalorder %s12, 1
      %p29 = por %p27, %p28
      %p30 = scmp.ne.s32.totalorder %s22, %s25
      %p31 = scmp.eq.s32.totalorder %s12, 0
      %p32 = por %p30, %p31
      %p33 = scmp.ne.s32.totalorder %s22, %s25
      %p34 = scmp.eq.s32.totalorder %s17, 1
      %p35 = por %p33, %p34
      %p36 = scmp.ne.s32.totalorder %s25, %s26
      %p37 = scmp.eq.s32.totalorder %s17, 0
      %p38 = por %p36, %p37
      %p39 = scmp.ne.s32.totalorder %s25, %s26
      %p40 = scmp.eq.s32.totalorder %s18, 1
      %p41 = por %p39, %p40
      %p43 = scmp.ne.s32.totalorder %s26, %s42
      %p44 = scmp.eq.s32.totalorder %s18, 0
      %p45 = por %p43, %p44
      %s47 = sadd.s32 %s46, 1
      %p50 = scmp.eq.s32.totalorder %s12, 1
      %p51 = scmp.ne.s32.totalorder %s46, %s48
      %p52 = scmp.eq.s32.totalorder %s12, 0
      %p53 = por %p51, %p52
      %p54 = scmp.ne.s32.totalorder %s46, %s48
      %p55 = scmp.eq.s32.totalorder %s17, 1
      %p56 = por %p54, %p55
      %p57 = scmp.ne.s32.totalorder %s48, %s49
      %p58 = scmp.eq.s32.totalorder %s17, 0
      %p59 = por %p57, %p58
      %p60 = scmp.ne.s32.totalorder %s48, %s49
      %p61 = scmp.eq.s32.totalorder %s18, 1
      %p62 = por %p60, %p61
      %p64 = scmp.ne.s32.totalorder %s49, %s63
      %p65 = scmp.eq.s32.totalorder %s18, 0
      %p66 = por %p64, %p65
      %s68 = sadd.s32 %s67, 1
      %p71 = scmp.eq.s32.totalorder %s12, 1
      %p72 = scmp.ne.s32.totalorder %s67, %s69
      %p73 = scmp.eq.s32.totalorder %s12, 0
      %p74 = por %p72, %p73
      %p75 = scmp.ne.s32.totalorder %s67, %s69
      %p76 = scmp.eq.s32.totalorder %s17, 1
      %p77 = por %p75, %p76
      %p78 = scmp.ne.s32.totalorder %s69, %s70
      %p79 = scmp.eq.s32.totalorder %s17, 0
      %p80 = por %p78, %p79
      %p81 = scmp.ne.s32.totalorder %s69, %s70
      %p82 = scmp.eq.s32.totalorder %s18, 1
      %p83 = por %p81, %p82
      %p85 = scmp.ne.s32.totalorder %s70, %s84
      %p86 = scmp.eq.s32.totalorder %s18, 0
      %p87 = por %p85, %p86
      %s88 = ssub.s32 %s12, %s19
      %p89 = scmp.eq.s32.totalorder %s88, 0
      %s91 = sadd.s32 %s90, 1
      %s92 = scalar_select %p89, %s90, %s91
      %p95 = pneg %p89
      %p96 = scmp.eq.s32.totalorder %s12, 1
      %p97 = por %p95, %p96
      %p98 = scmp.ne.s32.totalorder %s90, %s93
      %p99 = scmp.eq.s32.totalorder %s12, 0
      %p100 = por %p98, %p99
      %p101 = scmp.ne.s32.totalorder %s90, %s93
      %p102 = scmp.eq.s32.totalorder %s17, 1
      %p103 = por %p101, %p102
      %p104 = scmp.ne.s32.totalorder %s93, %s94
      %p105 = scmp.eq.s32.totalorder %s17, 0
      %p106 = por %p104, %p105
      %p107 = scmp.ne.s32.totalorder %s93, %s94
      %p108 = scmp.eq.s32.totalorder %s18, 1
      %p109 = por %p107, %p108
      %p111 = scmp.ne.s32.totalorder %s94, %s110
      %p112 = scmp.eq.s32.totalorder %s18, 0
      %p113 = por %p111, %p112
      %p114 = scmp.le.s32.totalorder 1, %s12
      %p115 = scmp.lt.s32.totalorder %s12, 3
      %p116 = pnand %p114, %p115
      %p117 = pneg %p116
      // Predicated region
      $region9: #{_lambda_.3} parent=5 // pred_check
        _
      $region10: #{_lambda_.3} parent=5 // pred_check_branch
        %119 = sbr.rel (%p116) target = $region12
      $region11: #{_lambda_.3} parent=5 // pred_region
        %s120 = ssub.s32 %s12, 1
        // Predicated region
        $region13: #{_lambda_.3} parent=11 // pred_check
          %p121 = pneg %p59
        $region14: #{_lambda_.3} parent=11 // pred_check_branch
          %123 = sbr.rel (%p121) target = $region16
        $region15: #{_lambda_.3} parent=11 // pred_region
          _
        $region16: #{_lambda_.3} parent=11 // pred_fallthru
          _
        // Predicated region
        $region17: #{_lambda_.3} parent=11 // pred_check
          %p124 = pneg %p80
        $region18: #{_lambda_.3} parent=11 // pred_check_branch
          %126 = sbr.rel (%p124) target = $region20
        $region19: #{_lambda_.3} parent=11 // pred_region
          _
        $region20: #{_lambda_.3} parent=11 // pred_fallthru
          _
      $region12: #{_lambda_.3} parent=5 // pred_fallthru
        _
      %p127 = scmp.lt.s32.totalorder %s12, 2
      // Predicated region
      $region21: #{_lambda_.3} parent=5 // pred_check
        %p128 = pneg %p127
      $region22: #{_lambda_.3} parent=5 // pred_check_branch
        %130 = sbr.rel (%p128) target = $region24
      $region23: #{_lambda_.3} parent=5 // pred_region
        // Predicated region
        $region25: #{_lambda_.3} parent=23 // pred_check
          %p131 = pneg %p32
        $region26: #{_lambda_.3} parent=23 // pred_check_branch
          %133 = sbr.rel (%p131) target = $region28
        $region27: #{_lambda_.3} parent=23 // pred_region
          %s134 = sand.u32 %s22, 1
          %s135 = scalar_lea.sflag [#allocation3], %s134
          %s136 = sand.u32 %s22, 1
          %s137 = smul.addr %s136, 64
          %s138 = scalar_lea.vmem [#allocation2], %s137
          %s139 = smul.u32 8, %s12
          %s141 = ssub.s32 1024, 1024
          %142 = vsyncadd %s135, %s141
          %s143 = smul.addr %s139, 128
          %s144 = scalar_lea.hbm %s0, %s143
          %s145 = sshll.u32 %s138, 4
          %s146 = int_to_ptr.vmem [resolvable:$true] %s145
          %151 = dma.hbm_to_vmem [thread:$0]  %s144, 1024, %s146, %s135, 128, 128, 8
        $region28: #{_lambda_.3} parent=23 // pred_fallthru
          _
      $region24: #{_lambda_.3} parent=5 // pred_fallthru
        _
      %p152 = scmp.le.s32.totalorder 1, %s12
      %p153 = scmp.lt.s32.totalorder %s12, 3
      %p154 = pnand %p152, %p153
      %p155 = pneg %p154
      // Predicated region
      $region29: #{_lambda_.3} parent=5 // pred_check
        _
      $region30: #{_lambda_.3} parent=5 // pred_check_branch
        %157 = sbr.rel (%p154) target = $region32
      $region31: #{_lambda_.3} parent=5 // pred_region
        %s158 = ssub.s32 %s12, 1
        %s159 = sand.u32 %s25, 1
        %s160 = scalar_lea.sflag [#allocation3], %s159
        %s161 = sand.u32 %s25, 1
        %s162 = smul.addr %s161, 64
        %s163 = scalar_lea.vmem [#allocation2], %s162
        // Predicated region
        $region33: #{_lambda_.3} parent=31 // pred_check
          %p164 = pneg %p38
        $region34: #{_lambda_.3} parent=31 // pred_check_branch
          %166 = sbr.rel (%p164) target = $region36
        $region35: #{_lambda_.3} parent=31 // pred_region
          %167 = dma.done %s160, 1024
        $region36: #{_lambda_.3} parent=31 // pred_fallthru
          _
        %s168 = sand.u32 %s25, 1
        %s169 = scalar_lea.sflag [#allocation3], %s168
        %s170 = sand.u32 %s25, 1
        %s171 = smul.addr %s170, 64
        %s172 = scalar_lea.vmem [#allocation2], %s171
        %p173 = pneg %p38
        %p174 = pneg %p35
        %p175 = pneg %p59
        %p176 = pneg %p56
        %p177 = pneg %p80
        %p178 = pneg %p77
        %p179 = pneg %p106
        %p180 = pneg %p103
        %s181 = smul.u32 8, %s17
        %p182 = scmp.lt.s32.totalorder %s181, 15
        %s183 = scalar_select %p182, %s181, 15
        %s184 = smul.addr %s183, 4
        %s185 = scalar_lea.vmem %s3, %s184
        %s186 = smul.u32 8, %s17
        %s187 = smul.u32 8, %s17
        %p188 = scmp.lt.s32.totalorder %s187, 15
        %s189 = scalar_select %p188, %s187, 15
        %s190 = smul.addr %s189, 4
        %s191 = scalar_lea.vmem %s3, %s190
        %s192 = smul.u32 8, %s17
        %v194 = vld [vmem:[%s163] sm:$0xff]
        %v195 = vld [vmem:[%s163 + $0x8] sm:$0xff]
        %v196 = vld [vmem:[%s163 + $0x10] sm:$0xff]
        %v197 = vld [vmem:[%s163 + $0x18] sm:$0xff]
        %v198 = vld [vmem:[%s163 + $0x20] sm:$0xff]
        %v199 = vld [vmem:[%s163 + $0x28] sm:$0xff]
        %v200 = vld [vmem:[%s163 + $0x30] sm:$0xff]
        %v201 = vld [vmem:[%s163 + $0x38] sm:$0xff]
        %v202 = vpack.c.bf16 %v195, %v194
        %v203 = vpack.c.bf16 %v197, %v196
        %v204 = vpack.c.bf16 %v199, %v198
        %v205 = vpack.c.bf16 %v201, %v200
        %v206 = vld [vmem:[%s1] sm:$0xf]
        %v207 = vld [vmem:[%s1 + $0x4] sm:$0xf]
        %v208 = vld [vmem:[%s2] sm:$0x1]
        %v210 = vlaneseq
        %v211 = vshrl.u32 %v210, 7
        %v212 = vsub.s32 0, %v211
        %v213 = vrot.slane %v208, %v212
        %v217 = vunpack.c.l.b16 %v206
        %v218 = vunpack.c.l.b16 %v207
        %v219 = vpack.c.b16 %v218, %v217
        %vm221 = vcmask 130048
        %v223 = vsel %vm221, %v202, 0
        %v226 = vsel %vm221, %v203, 0
        %v229 = vsel %vm221, %v204, 0
        %v232 = vsel %vm221, %v205, 0
        %234 = vmatprep.subr.bf16.mxu0 0
        %235 = vmatpush1.bf16.msra.mxu0 %v219
        %236 = vmatprep.subr.bf16.mxu0 0
        %237 = vmatpush1.bf16.msra.mxu0 0
        %238 = vmatprep.subr.bf16.mxu0 0
        %239 = vmatpush1.bf16.msra.mxu0 0
        %240 = vmatprep.subr.bf16.mxu0 0
        %241 = vmatpush1.bf16.msra.mxu0 0
        %242 = vmatprep.subr.bf16.mxu0 0
        %243 = vmatpush1.bf16.msra.mxu0 0
        %244 = vmatprep.subr.bf16.mxu0 0
        %245 = vmatpush1.bf16.msra.mxu0 0
        %246 = vmatprep.subr.bf16.mxu0 0
        %247 = vmatpush1.bf16.msra.mxu0 0
        %248 = vmatprep.subr.bf16.mxu0 0
        %249 = vmatpush1.bf16.msra.mxu0 0
        %250 = vmatprep.subr.bf16.mxu0 0
        %251 = vmatpush1.bf16.msra.mxu0 0
        %252 = vmatprep.subr.bf16.mxu0 0
        %253 = vmatpush1.bf16.msra.mxu0 0
        %254 = vmatprep.subr.bf16.mxu0 0
        %255 = vmatpush1.bf16.msra.mxu0 0
        %256 = vmatprep.subr.bf16.mxu0 0
        %257 = vmatpush1.bf16.msra.mxu0 0
        %258 = vmatprep.subr.bf16.mxu0 0
        %259 = vmatpush1.bf16.msra.mxu0 0
        %260 = vmatprep.subr.bf16.mxu0 0
        %261 = vmatpush1.bf16.msra.mxu0 0
        %262 = vmatprep.subr.bf16.mxu0 0
        %263 = vmatpush1.bf16.msra.mxu0 0
        %264 = vmatprep.subr.bf16.mxu0 0
        %265 = vmatpush1.bf16.msra.mxu0 0
        %266 = vmatprep.mubr.bf16.mxu0 0
        %267 = vmatmul.mubr.bf16.gmra.mrb[0].mxu0 %v223
        %v268 = vpop.f32.mrb[0].mxu0
        %v269 = vadd.f32 %v213, %v268
        %v270 = vpop.f32.mrb[0].mxu0
        %v271 = vpop.f32.mrb[0].mxu0
        %v272 = vadd.f32 %v213, %v271
        %v273 = vpop.f32.mrb[0].mxu0
        %274 = vmatprep.mubr.bf16.mxu0 0
        %275 = vmatmul.mubr.bf16.gmra.mrb[0].mxu0 %v226
        %v276 = vpop.f32.mrb[0].mxu0
        %v277 = vadd.f32 %v213, %v276
        %v278 = vpop.f32.mrb[0].mxu0
        %v279 = vpop.f32.mrb[0].mxu0
        %v280 = vadd.f32 %v213, %v279
        %v281 = vpop.f32.mrb[0].mxu0
        %282 = vmatprep.mubr.bf16.mxu0 0
        %283 = vmatmul.mubr.bf16.gmra.mrb[0].mxu0 %v229
        %v284 = vpop.f32.mrb[0].mxu0
        %v285 = vadd.f32 %v213, %v284
        %v286 = vpop.f32.mrb[0].mxu0
        %v287 = vpop.f32.mrb[0].mxu0
        %v288 = vadd.f32 %v213, %v287
        %v289 = vpop.f32.mrb[0].mxu0
        %290 = vmatprep.mubr.bf16.mxu0 0
        %291 = vmatmul.mubr.bf16.gmra.mrb[0].mxu0 %v232
        %v292 = vpop.f32.mrb[0].mxu0
        %v293 = vadd.f32 %v213, %v292
        %v294 = vpop.f32.mrb[0].mxu0
        %v295 = vpop.f32.mrb[0].mxu0
        %v296 = vadd.f32 %v213, %v295
        %v297 = vpop.f32.mrb[0].mxu0
        %298 = vdwg.mxu0
        %v299 = vmax.f32 %v269, 0.0
        %v300 = vmax.f32 %v272, 0.0
        %v301 = vmax.f32 %v277, 0.0
        %v302 = vmax.f32 %v280, 0.0
        %v303 = vmax.f32 %v285, 0.0
        %v304 = vmax.f32 %v288, 0.0
        %v305 = vmax.f32 %v293, 0.0
        %v306 = vmax.f32 %v296, 0.0
        %v307 = vmin.f32 %v299, 6.0
        %v308 = vmin.f32 %v300, 6.0
        %v309 = vmin.f32 %v301, 6.0
        %v310 = vmin.f32 %v302, 6.0
        %v311 = vmin.f32 %v303, 6.0
        %v312 = vmin.f32 %v304, 6.0
        %v313 = vmin.f32 %v305, 6.0
        %v314 = vmin.f32 %v306, 6.0
        %v315 = vpack.c.bf16 %v308, %v307
        %v316 = vpack.c.bf16 %v310, %v309
        %v317 = vpack.c.bf16 %v312, %v311
        %v318 = vpack.c.bf16 %v314, %v313
        %v323 = vunpack.c.l.b16 %v315
        %v324 = vunpack.c.h.b16 %v315
        %v325 = vunpack.c.l.b16 %v316
        %v326 = vunpack.c.h.b16 %v316
        %v327 = vunpack.c.l.b16 %v317
        %v328 = vunpack.c.h.b16 %v317
        %v329 = vunpack.c.l.b16 %v318
        %v330 = vunpack.c.h.b16 %v318
        %v331 = vpack.c.b16 %v323, %v323
        %v332 = vpack.c.b16 %v324, %v324
        %v333 = vpack.c.b16 %v325, %v325
        %v334 = vpack.c.b16 %v326, %v326
        %v335 = vpack.c.b16 %v327, %v327
        %v336 = vpack.c.b16 %v328, %v328
        %v337 = vpack.c.b16 %v329, %v329
        %v338 = vpack.c.b16 %v330, %v330
        %347 = vst [vmem:[%s191] sm:$0xf] %v331
        %348 = vst [vmem:[%s191 + $0x4] sm:$0xf] %v332
        %349 = vst [vmem:[%s191 + $0x8] sm:$0xf] %v333
        %350 = vst [vmem:[%s191 + $0xc] sm:$0xf] %v334
        %351 = vst [vmem:[%s191 + $0x10] sm:$0xf] %v335
        %352 = vst [vmem:[%s191 + $0x14] sm:$0xf] %v336
        %353 = vst [vmem:[%s191 + $0x18] sm:$0xf] %v337
        %354 = vst [vmem:[%s191 + $0x1c] sm:$0xf] %v338
        %s355 = smul.u32 8, %s17
        %p356 = scmp.lt.s32.totalorder %s355, 15
        %s357 = scalar_select %p356, %s355, 15
        %s358 = smul.addr %s357, 4
        %s359 = scalar_lea.vmem %s3, %s358
        // Predicated region
        $region37: #{_lambda_.3} parent=31 // pred_check
          %p360 = pneg %p103
        $region38: #{_lambda_.3} parent=31 // pred_check_branch
          %362 = sbr.rel (%p360) target = $region40
        $region39: #{_lambda_.3} parent=31 // pred_region
          %s363 = smul.u32 8, %s17
        $region40: #{_lambda_.3} parent=31 // pred_fallthru
          _
      $region32: #{_lambda_.3} parent=5 // pred_fallthru
        _
      %p364 = scmp.le.s32.totalorder 2, %s12
      // Predicated region
      $region41: #{_lambda_.3} parent=5 // pred_check
        %p365 = pneg %p364
      $region42: #{_lambda_.3} parent=5 // pred_check_branch
        %367 = sbr.rel (%p365) target = $region44
      $region43: #{_lambda_.3} parent=5 // pred_region
        %s368 = ssub.s32 %s12, 2
        // Predicated region
        $region45: #{_lambda_.3} parent=43 // pred_check
          %p369 = pneg %p109
        $region46: #{_lambda_.3} parent=43 // pred_check_branch
          %371 = sbr.rel (%p369) target = $region48
        $region47: #{_lambda_.3} parent=43 // pred_region
          %s372 = smul.u32 8, %s18
          %p373 = scmp.lt.s32.totalorder %s372, 15
          %s374 = scalar_select %p373, %s372, 15
          %s375 = smul.addr %s374, 4
          %s376 = scalar_lea.vmem %s3, %s375
        $region48: #{_lambda_.3} parent=43 // pred_fallthru
          _
      $region44: #{_lambda_.3} parent=5 // pred_fallthru
        _
    $region6: #{_lambda_.3} parent=1 // loop_footer
      %s16 = sadd.s32 1, %s12
    $region7: #{_lambda_.3} parent=1 // loop_footer_branch
      %11 = sbr.rel target = $region3
    $region8: #{_lambda_.3} parent=1 // loop_exit
      _
    %377 = vsyncpa [#allocation3], 1
    %s378 = scalar_lea.sflag [#allocation3], 1
    %379 = vsyncpa %s378, 1

// kernel: _lambda_.5
$region0: #{_lambda_.5}
  #allocation0 [shape = 'u32[]', space=smem, size = 0x4, offset = 0x4, fixed_abs, tag = 'smem constant byte address 0x4 - core index']
  #allocation1 [shape = 'u32[144,128]{1,0:T(1,128)}', space=vmem, size = 0x12000, scoped, tag = 'internal scratch']
  %s0 = inlined_call_operand.vmem [shape: bf16[32,128], index: 0, kind: input, shape index: {}]
  %s1 = inlined_call_operand.vmem [shape: bf16[128,128], index: 1, kind: input, shape index: {}]
  %s2 = inlined_call_operand.vmem [shape: f32[1,128], index: 2, kind: input, shape index: {}]
  %s3 = inlined_call_operand.vmem [shape: f32[32,16], index: 3, kind: input, shape index: {}]
  %s4 = inlined_call_operand.vmem [shape: bf16[16,128], index: 4, kind: input, shape index: {}]
  %s5 = inlined_call_operand.vmem [shape: f32[1,128], index: 5, kind: input, shape index: {}]
  %s6 = inlined_call_operand.vmem [shape: f32[32,128], index: 6, kind: output, shape index: {}]
  %s7 = sld [smem:[#allocation0]]
  $region57: #{_lambda_.5} parent=0
    _
  %s9 = ssub.s32 1, %s7
  %s10 = scalar_select 0, %s9, %s7
  loop: start=0, step=1, limit=4
  $region2: #{_lambda_.5} parent=0 // loop_pre_header
    _
  $region3: #{_lambda_.5} parent=0 // loop_header
    %s12 = sphi 0, %s16
    %p13 = scmp.ge.s32.totalorder %s12, 4
    %s22 = sphi 0, %s24
    %s25 = sphi 0, %s22
    %s26 = sphi 0, %s25
    %s42 = sphi 0, %s26
    %s46 = sphi 0, %s46
    %s48 = sphi 0, %s46
    %s49 = sphi 0, %s48
    %s63 = sphi 0, %s49
    %s67 = sphi 0, %s67
    %s69 = sphi 0, %s67
    %s70 = sphi 0, %s69
    %s84 = sphi 0, %s70
    %s90 = sphi 0, %s92
    %s93 = sphi 0, %s90
    %s94 = sphi 0, %s93
    %s110 = sphi 0, %s94
    %s114 = sphi 0, %s114
    %s116 = sphi 0, %s114
    %s117 = sphi 0, %s116
    %s131 = sphi 0, %s117
    %s135 = sphi 0, %s135
    %s137 = sphi 0, %s135
    %s138 = sphi 0, %s137
    %s152 = sphi 0, %s138
    %s158 = sphi 0, %s160
    %s161 = sphi 0, %s158
    %s162 = sphi 0, %s161
    %s178 = sphi 0, %s162
  $region4: #{_lambda_.5} parent=0 // loop_header_branch
    %15 = sbr.rel (%p13) target = $region8
  $region5: #{_lambda_.5} parent=0 // loop_body
    %s17 = ssub.s32 %s12, 1
    %s18 = ssub.s32 %s12, 2
    %s19 = sadd.s32 %s12, 1
    %s20 = ssub.s32 %s12, %s19
    %p21 = scmp.eq.s32.totalorder %s20, 0
    %s23 = sadd.s32 %s22, 1
    %s24 = scalar_select %p21, %s22, %s23
    %p27 = pneg %p21
    %p28 = scmp.eq.s32.totalorder %s12, 1
    %p29 = por %p27, %p28
    %p30 = scmp.ne.s32.totalorder %s22, %s25
    %p31 = scmp.eq.s32.totalorder %s12, 0
    %p32 = por %p30, %p31
    %p33 = scmp.ne.s32.totalorder %s22, %s25
    %p34 = scmp.eq.s32.totalorder %s17, 1
    %p35 = por %p33, %p34
    %p36 = scmp.ne.s32.totalorder %s25, %s26
    %p37 = scmp.eq.s32.totalorder %s17, 0
    %p38 = por %p36, %p37
    %p39 = scmp.ne.s32.totalorder %s25, %s26
    %p40 = scmp.eq.s32.totalorder %s18, 1
    %p41 = por %p39, %p40
    %p43 = scmp.ne.s32.totalorder %s26, %s42
    %p44 = scmp.eq.s32.totalorder %s18, 0
    %p45 = por %p43, %p44
    %s47 = sadd.s32 %s46, 1
    %p50 = scmp.eq.s32.totalorder %s12, 1
    %p51 = scmp.ne.s32.totalorder %s46, %s48
    %p52 = scmp.eq.s32.totalorder %s12, 0
    %p53 = por %p51, %p52
    %p54 = scmp.ne.s32.totalorder %s46, %s48
    %p55 = scmp.eq.s32.totalorder %s17, 1
    %p56 = por %p54, %p55
    %p57 = scmp.ne.s32.totalorder %s48, %s49
    %p58 = scmp.eq.s32.totalorder %s17, 0
    %p59 = por %p57, %p58
    %p60 = scmp.ne.s32.totalorder %s48, %s49
    %p61 = scmp.eq.s32.totalorder %s18, 1
    %p62 = por %p60, %p61
    %p64 = scmp.ne.s32.totalorder %s49, %s63
    %p65 = scmp.eq.s32.totalorder %s18, 0
    %p66 = por %p64, %p65
    %s68 = sadd.s32 %s67, 1
    %p71 = scmp.eq.s32.totalorder %s12, 1
    %p72 = scmp.ne.s32.totalorder %s67, %s69
    %p73 = scmp.eq.s32.totalorder %s12, 0
    %p74 = por %p72, %p73
    %p75 = scmp.ne.s32.totalorder %s67, %s69
    %p76 = scmp.eq.s32.totalorder %s17, 1
    %p77 = por %p75, %p76
    %p78 = scmp.ne.s32.totalorder %s69, %s70
    %p79 = scmp.eq.s32.totalorder %s17, 0
    %p80 = por %p78, %p79
    %p81 = scmp.ne.s32.totalorder %s69, %s70
    %p82 = scmp.eq.s32.totalorder %s18, 1
    %p83 = por %p81, %p82
    %p85 = scmp.ne.s32.totalorder %s70, %s84
    %p86 = scmp.eq.s32.totalorder %s18, 0
    %p87 = por %p85, %p86
    %s88 = ssub.s32 %s12, %s19
    %p89 = scmp.eq.s32.totalorder %s88, 0
    %s91 = sadd.s32 %s90, 1
    %s92 = scalar_select %p89, %s90, %s91
    %p95 = pneg %p89
    %p96 = scmp.eq.s32.totalorder %s12, 1
    %p97 = por %p95, %p96
    %p98 = scmp.ne.s32.totalorder %s90, %s93
    %p99 = scmp.eq.s32.totalorder %s12, 0
    %p100 = por %p98, %p99
    %p101 = scmp.ne.s32.totalorder %s90, %s93
    %p102 = scmp.eq.s32.totalorder %s17, 1
    %p103 = por %p101, %p102
    %p104 = scmp.ne.s32.totalorder %s93, %s94
    %p105 = scmp.eq.s32.totalorder %s17, 0
    %p106 = por %p104, %p105
    %p107 = scmp.ne.s32.totalorder %s93, %s94
    %p108 = scmp.eq.s32.totalorder %s18, 1
    %p109 = por %p107, %p108
    %p111 = scmp.ne.s32.totalorder %s94, %s110
    %p112 = scmp.eq.s32.totalorder %s18, 0
    %p113 = por %p111, %p112
    %s115 = sadd.s32 %s114, 1
    %p118 = scmp.eq.s32.totalorder %s12, 1
    %p119 = scmp.ne.s32.totalorder %s114, %s116
    %p120 = scmp.eq.s32.totalorder %s12, 0
    %p121 = por %p119, %p120
    %p122 = scmp.ne.s32.totalorder %s114, %s116
    %p123 = scmp.eq.s32.totalorder %s17, 1
    %p124 = por %p122, %p123
    %p125 = scmp.ne.s32.totalorder %s116, %s117
    %p126 = scmp.eq.s32.totalorder %s17, 0
    %p127 = por %p125, %p126
    %p128 = scmp.ne.s32.totalorder %s116, %s117
    %p129 = scmp.eq.s32.totalorder %s18, 1
    %p130 = por %p128, %p129
    %p132 = scmp.ne.s32.totalorder %s117, %s131
    %p133 = scmp.eq.s32.totalorder %s18, 0
    %p134 = por %p132, %p133
    %s136 = sadd.s32 %s135, 1
    %p139 = scmp.eq.s32.totalorder %s12, 1
    %p140 = scmp.ne.s32.totalorder %s135, %s137
    %p141 = scmp.eq.s32.totalorder %s12, 0
    %p142 = por %p140, %p141
    %p143 = scmp.ne.s32.totalorder %s135, %s137
    %p144 = scmp.eq.s32.totalorder %s17, 1
    %p145 = por %p143, %p144
    %p146 = scmp.ne.s32.totalorder %s137, %s138
    %p147 = scmp.eq.s32.totalorder %s17, 0
    %p148 = por %p146, %p147
    %p149 = scmp.ne.s32.totalorder %s137, %s138
    %p150 = scmp.eq.s32.totalorder %s18, 1
    %p151 = por %p149, %p150
    %p153 = scmp.ne.s32.totalorder %s138, %s152
    %p154 = scmp.eq.s32.totalorder %s18, 0
    %p155 = por %p153, %p154
    %s156 = ssub.s32 %s12, %s19
    %p157 = scmp.eq.s32.totalorder %s156, 0
    %s159 = sadd.s32 %s158, 1
    %s160 = scalar_select %p157, %s158, %s159
    %p163 = pneg %p157
    %p164 = scmp.eq.s32.totalorder %s12, 1
    %p165 = por %p163, %p164
    %p166 = scmp.ne.s32.totalorder %s158, %s161
    %p167 = scmp.eq.s32.totalorder %s12, 0
    %p168 = por %p166, %p167
    %p169 = scmp.ne.s32.totalorder %s158, %s161
    %p170 = scmp.eq.s32.totalorder %s17, 1
    %p171 = por %p169, %p170
    %p172 = scmp.ne.s32.totalorder %s161, %s162
    %p173 = scmp.eq.s32.totalorder %s17, 0
    %p174 = por %p172, %p173
    %p175 = scmp.ne.s32.totalorder %s161, %s162
    %p176 = scmp.eq.s32.totalorder %s18, 1
    %p177 = por %p175, %p176
    %p179 = scmp.ne.s32.totalorder %s162, %s178
    %p180 = scmp.eq.s32.totalorder %s18, 0
    %p181 = por %p179, %p180
    %p182 = scmp.le.s32.totalorder 1, %s12
    %p183 = scmp.lt.s32.totalorder %s12, 3
    %p184 = pnand %p182, %p183
    %p185 = pneg %p184
    // Predicated region
    $region9: #{_lambda_.5} parent=5 // pred_check
      _
    $region10: #{_lambda_.5} parent=5 // pred_check_branch
      %187 = sbr.rel (%p184) target = $region12
    $region11: #{_lambda_.5} parent=5 // pred_region
      %s188 = ssub.s32 %s12, 1
      // Predicated region
      $region13: #{_lambda_.5} parent=11 // pred_check
        %p189 = pneg %p59
      $region14: #{_lambda_.5} parent=11 // pred_check_branch
        %191 = sbr.rel (%p189) target = $region16
      $region15: #{_lambda_.5} parent=11 // pred_region
        _
      $region16: #{_lambda_.5} parent=11 // pred_fallthru
        _
      // Predicated region
      $region17: #{_lambda_.5} parent=11 // pred_check
        %p192 = pneg %p80
      $region18: #{_lambda_.5} parent=11 // pred_check_branch
        %194 = sbr.rel (%p192) target = $region20
      $region19: #{_lambda_.5} parent=11 // pred_region
        _
      $region20: #{_lambda_.5} parent=11 // pred_fallthru
        _
      // Predicated region
      $region21: #{_lambda_.5} parent=11 // pred_check
        %p195 = pneg %p127
      $region22: #{_lambda_.5} parent=11 // pred_check_branch
        %197 = sbr.rel (%p195) target = $region24
      $region23: #{_lambda_.5} parent=11 // pred_region
        _
      $region24: #{_lambda_.5} parent=11 // pred_fallthru
        _
      // Predicated region
      $region25: #{_lambda_.5} parent=11 // pred_check
        %p198 = pneg %p148
      $region26: #{_lambda_.5} parent=11 // pred_check_branch
        %200 = sbr.rel (%p198) target = $region28
      $region27: #{_lambda_.5} parent=11 // pred_region
        _
      $region28: #{_lambda_.5} parent=11 // pred_fallthru
        _
    $region12: #{_lambda_.5} parent=5 // pred_fallthru
      _
    %p201 = scmp.lt.s32.totalorder %s12, 2
    // Predicated region
    $region29: #{_lambda_.5} parent=5 // pred_check
      %p202 = pneg %p201
    $region30: #{_lambda_.5} parent=5 // pred_check_branch
      %204 = sbr.rel (%p202) target = $region32
    $region31: #{_lambda_.5} parent=5 // pred_region
      // Predicated region
      $region33: #{_lambda_.5} parent=31 // pred_check
        %p205 = pneg %p32
      $region34: #{_lambda_.5} parent=31 // pred_check_branch
        %207 = sbr.rel (%p205) target = $region36
      $region35: #{_lambda_.5} parent=31 // pred_region
        %s208 = smul.u32 2, %s12
        %p209 = scmp.lt.s32.totalorder %s208, 3
        %s210 = scalar_select %p209, %s208, 3
        %s211 = smul.addr %s210, 4
        %s212 = scalar_lea.vmem %s0, %s211
        %s213 = smul.u32 2, %s12
      $region36: #{_lambda_.5} parent=31 // pred_fallthru
        _
      // Predicated region
      $region37: #{_lambda_.5} parent=31 // pred_check
        %p214 = pneg %p100
      $region38: #{_lambda_.5} parent=31 // pred_check_branch
        %216 = sbr.rel (%p214) target = $region40
      $region39: #{_lambda_.5} parent=31 // pred_region
        %s217 = smul.u32 2, %s12
        %p218 = scmp.lt.s32.totalorder %s217, 3
        %s219 = scalar_select %p218, %s217, 3
        %s220 = smul.addr %s219, 8
        %s221 = scalar_lea.vmem %s3, %s220
        %s222 = smul.u32 2, %s12
      $region40: #{_lambda_.5} parent=31 // pred_fallthru
        _
    $region32: #{_lambda_.5} parent=5 // pred_fallthru
      _
    %p223 = scmp.le.s32.totalorder 1, %s12
    %p224 = scmp.lt.s32.totalorder %s12, 3
    %p225 = pnand %p223, %p224
    %p226 = pneg %p225
    // Predicated region
    $region41: #{_lambda_.5} parent=5 // pred_check
      _
    $region42: #{_lambda_.5} parent=5 // pred_check_branch
      %228 = sbr.rel (%p225) target = $region44
    $region43: #{_lambda_.5} parent=5 // pred_region
      %s229 = ssub.s32 %s12, 1
      %s230 = smul.u32 2, %s17
      %p231 = scmp.lt.s32.totalorder %s230, 3
      %s232 = scalar_select %p231, %s230, 3
      %s233 = smul.addr %s232, 4
      %s234 = scalar_lea.vmem %s0, %s233
      %p235 = pneg %p38
      %p236 = pneg %p35
      %p237 = pneg %p59
      %p238 = pneg %p56
      %p239 = pneg %p80
      %p240 = pneg %p77
      %s241 = smul.u32 2, %s17
      %p242 = scmp.lt.s32.totalorder %s241, 3
      %s243 = scalar_select %p242, %s241, 3
      %s244 = smul.addr %s243, 8
      %s245 = scalar_lea.vmem %s3, %s244
      %p246 = pneg %p106
      %p247 = pneg %p103
      %p248 = pneg %p127
      %p249 = pneg %p124
      %p250 = pneg %p148
      %p251 = pneg %p145
      %p252 = pneg %p174
      %p253 = pneg %p171
      %s254 = smul.u32 2, %s17
      %p255 = scmp.lt.s32.totalorder %s254, 3
      %s256 = scalar_select %p255, %s254, 3
      %s257 = smul.addr %s256, 8
      %s258 = scalar_lea.vmem %s6, %s257
      %s259 = smul.u32 2, %s17
      %p260 = scmp.lt.s32.totalorder %s259, 3
      %s261 = scalar_select %p260, %s259, 3
      %s262 = smul.addr %s261, 4
      %s263 = scalar_lea.vmem %s0, %s262
      %s264 = smul.u32 2, %s17
      %s265 = smul.u32 2, %s17
      %p266 = scmp.lt.s32.totalorder %s265, 3
      %s267 = scalar_select %p266, %s265, 3
      %s268 = smul.addr %s267, 8
      %s269 = scalar_lea.vmem %s3, %s268
      %s270 = smul.u32 2, %s17
      %s271 = smul.u32 2, %s17
      %p272 = scmp.lt.s32.totalorder %s271, 3
      %s273 = scalar_select %p272, %s271, 3
      %s274 = smul.addr %s273, 8
      %s275 = scalar_lea.vmem %s6, %s274
      %s276 = smul.u32 2, %s17
      %v278 = vld [vmem:[%s263] sm:$0xf]
      %v279 = vld [vmem:[%s263 + $0x4] sm:$0xf]
      %v280 = vld [vmem:[%s1] sm:$0xf]
      %v281 = vld [vmem:[%s1 + $0x4] sm:$0xf]
      %v282 = vld [vmem:[%s1 + $0x8] sm:$0xf]
      %v283 = vld [vmem:[%s1 + $0xc] sm:$0xf]
      %v284 = vld [vmem:[%s1 + $0x10] sm:$0xf]
      %v285 = vld [vmem:[%s1 + $0x14] sm:$0xf]
      %v286 = vld [vmem:[%s1 + $0x18] sm:$0xf]
      %v287 = vld [vmem:[%s1 + $0x1c] sm:$0xf]
      %v288 = vld [vmem:[%s1 + $0x20] sm:$0xf]
      %v289 = vld [vmem:[%s1 + $0x24] sm:$0xf]
      %v290 = vld [vmem:[%s1 + $0x28] sm:$0xf]
      %v291 = vld [vmem:[%s1 + $0x2c] sm:$0xf]
      %v292 = vld [vmem:[%s1 + $0x30] sm:$0xf]
      %v293 = vld [vmem:[%s1 + $0x34] sm:$0xf]
      %v294 = vld [vmem:[%s1 + $0x38] sm:$0xf]
      %v295 = vld [vmem:[%s1 + $0x3c] sm:$0xf]
      %v296 = vld [vmem:[%s2] sm:$0x1]
      %v298 = vlaneseq
      %v299 = vshrl.u32 %v298, 7
      %v300 = vsub.s32 0, %v299
      %v301 = vrot.slane %v296, %v300
      %v305 = vunpack.c.l.b16 %v278
      %v306 = vunpack.c.l.b16 %v279
      %v307 = vpack.c.b16 %v306, %v305
      %v325 = vunpack.c.l.b16 %v280
      %v326 = vunpack.c.l.b16 %v281
      %v327 = vunpack.c.l.b16 %v282
      %v328 = vunpack.c.l.b16 %v283
      %v329 = vunpack.c.l.b16 %v284
      %v330 = vunpack.c.l.b16 %v285
      %v331 = vunpack.c.l.b16 %v286
      %v332 = vunpack.c.l.b16 %v287
      %v333 = vunpack.c.l.b16 %v288
      %v334 = vunpack.c.l.b16 %v289
      %v335 = vunpack.c.l.b16 %v290
      %v336 = vunpack.c.l.b16 %v291
      %v337 = vunpack.c.l.b16 %v292
      %v338 = vunpack.c.l.b16 %v293
      %v339 = vunpack.c.l.b16 %v294
      %v340 = vunpack.c.l.b16 %v295
      %v341 = vpack.c.b16 %v326, %v325
      %v342 = vpack.c.b16 %v328, %v327
      %v343 = vpack.c.b16 %v330, %v329
      %v344 = vpack.c.b16 %v332, %v331
      %v345 = vpack.c.b16 %v334, %v333
      %v346 = vpack.c.b16 %v336, %v335
      %v347 = vpack.c.b16 %v338, %v337
      %v348 = vpack.c.b16 %v340, %v339
      %357 = vmatprep.subr.bf16.mxu0 0
      %358 = vmatpush1.bf16.msra.mxu0 %v341
      %359 = vmatprep.subr.bf16.mxu0 0
      %360 = vmatpush1.bf16.msra.mxu0 %v342
      %361 = vmatprep.subr.bf16.mxu0 0
      %362 = vmatpush1.bf16.msra.mxu0 %v343
      %363 = vmatprep.subr.bf16.mxu0 0
      %364 = vmatpush1.bf16.msra.mxu0 %v344
      %365 = vmatprep.subr.bf16.mxu0 0
      %366 = vmatpush1.bf16.msra.mxu0 %v345
      %367 = vmatprep.subr.bf16.mxu0 0
      %368 = vmatpush1.bf16.msra.mxu0 %v346
      %369 = vmatprep.subr.bf16.mxu0 0
      %370 = vmatpush1.bf16.msra.mxu0 %v347
      %371 = vmatprep.subr.bf16.mxu0 0
      %372 = vmatpush1.bf16.msra.mxu0 %v348
      %373 = vmatprep.subr.bf16.mxu0 0
      %374 = vmatpush1.bf16.msra.mxu0 0
      %375 = vmatprep.subr.bf16.mxu0 0
      %376 = vmatpush1.bf16.msra.mxu0 0
      %377 = vmatprep.subr.bf16.mxu0 0
      %378 = vmatpush1.bf16.msra.mxu0 0
      %379 = vmatprep.subr.bf16.mxu0 0
      %380 = vmatpush1.bf16.msra.mxu0 0
      %381 = vmatprep.subr.bf16.mxu0 0
      %382 = vmatpush1.bf16.msra.mxu0 0
      %383 = vmatprep.subr.bf16.mxu0 0
      %384 = vmatpush1.bf16.msra.mxu0 0
      %385 = vmatprep.subr.bf16.mxu0 0
      %386 = vmatpush1.bf16.msra.mxu0 0
      %387 = vmatprep.subr.bf16.mxu0 0
      %388 = vmatpush1.bf16.msra.mxu0 0
      %389 = vmatprep.mubr.bf16.mxu0 0
      %390 = vmatmul.mubr.bf16.gmra.mrb[0].mxu0 %v307
      %v391 = vpop.f32.mrb[0].mxu0
      %v392 = vadd.f32 %v301, %v391
      %v393 = vpop.f32.mrb[0].mxu0
      %v394 = vpop.f32.mrb[0].mxu0
      %v395 = vadd.f32 %v301, %v394
      %v396 = vpop.f32.mrb[0].mxu0
      %397 = vdwg.mxu0
      %v398 = vld [vmem:[%s269] sm:$0xff]
      %v399 = vld [vmem:[%s269 + $0x8] sm:$0xff]
      %v400 = vpack.c.bf16 %v399, %v398
      %v401 = vld [vmem:[%s4] sm:$0xf]
      %v402 = vld [vmem:[%s4 + $0x4] sm:$0xf]
      %v405 = vunpack.c.l.b16 %v401
      %v406 = vunpack.c.l.b16 %v402
      %v407 = vpack.c.b16 %v406, %v405
      %vm409 = vcmask 130048
      %v411 = vsel %vm409, %v400, 0
      %413 = vmatprep.subr.bf16.mxu0 0
      %414 = vmatpush1.bf16.msra.mxu0 %v407
      %415 = vmatprep.subr.bf16.mxu0 0
      %416 = vmatpush1.bf16.msra.mxu0 0
      %417 = vmatprep.subr.bf16.mxu0 0
      %418 = vmatpush1.bf16.msra.mxu0 0
      %419 = vmatprep.subr.bf16.mxu0 0
      %420 = vmatpush1.bf16.msra.mxu0 0
      %421 = vmatprep.subr.bf16.mxu0 0
      %422 = vmatpush1.bf16.msra.mxu0 0
      %423 = vmatprep.subr.bf16.mxu0 0
      %424 = vmatpush1.bf16.msra.mxu0 0
      %425 = vmatprep.subr.bf16.mxu0 0
      %426 = vmatpush1.bf16.msra.mxu0 0
      %427 = vmatprep.subr.bf16.mxu0 0
      %428 = vmatpush1.bf16.msra.mxu0 0
      %429 = vmatprep.subr.bf16.mxu0 0
      %430 = vmatpush1.bf16.msra.mxu0 0
      %431 = vmatprep.subr.bf16.mxu0 0
      %432 = vmatpush1.bf16.msra.mxu0 0
      %433 = vmatprep.subr.bf16.mxu0 0
      %434 = vmatpush1.bf16.msra.mxu0 0
      %435 = vmatprep.subr.bf16.mxu0 0
      %436 = vmatpush1.bf16.msra.mxu0 0
      %437 = vmatprep.subr.bf16.mxu0 0
      %438 = vmatpush1.bf16.msra.mxu0 0
      %439 = vmatprep.subr.bf16.mxu0 0
      %440 = vmatpush1.bf16.msra.mxu0 0
      %441 = vmatprep.subr.bf16.mxu0 0
      %442 = vmatpush1.bf16.msra.mxu0 0
      %443 = vmatprep.subr.bf16.mxu0 0
      %444 = vmatpush1.bf16.msra.mxu0 0
      %445 = vmatprep.mubr.bf16.mxu0 0
      %446 = vmatmul.mubr.bf16.gmra.mrb[0].mxu0 %v411
      %v447 = vpop.f32.mrb[0].mxu0
      %v448 = vadd.f32 0.0, %v447
      %v449 = vpop.f32.mrb[0].mxu0
      %v450 = vpop.f32.mrb[0].mxu0
      %v451 = vadd.f32 0.0, %v450
      %v452 = vpop.f32.mrb[0].mxu0
      %453 = vdwg.mxu0
      %v454 = vadd.f32 %v392, %v448
      %v455 = vadd.f32 %v395, %v451
      %v456 = vld [vmem:[%s5] sm:$0x1]
      %v458 = vlaneseq
      %v459 = vshrl.u32 %v458, 7
      %v460 = vsub.s32 0, %v459
      %v461 = vrot.slane %v456, %v460
      %v463 = vadd.f32 %v454, %v461
      %v464 = vadd.f32 %v455, %v461
      %v465 = vmax.f32 %v463, 0.0
      %v466 = vmax.f32 %v464, 0.0
      %v467 = vmin.f32 %v465, 6.0
      %v468 = vmin.f32 %v466, 6.0
      %469 = vst [vmem:[%s275] sm:$0xff] %v467
      %470 = vst [vmem:[%s275 + $0x8] sm:$0xff] %v468
      %s471 = smul.u32 2, %s17
      %p472 = scmp.lt.s32.totalorder %s471, 3
      %s473 = scalar_select %p472, %s471, 3
      %s474 = smul.addr %s473, 8
      %s475 = scalar_lea.vmem %s6, %s474
      // Predicated region
      $region45: #{_lambda_.5} parent=43 // pred_check
        %p476 = pneg %p171
      $region46: #{_lambda_.5} parent=43 // pred_check_branch
        %478 = sbr.rel (%p476) target = $region48
      $region47: #{_lambda_.5} parent=43 // pred_region
        %s479 = smul.u32 2, %s17
      $region48: #{_lambda_.5} parent=43 // pred_fallthru
        _
    $region44: #{_lambda_.5} parent=5 // pred_fallthru
      _
    %p480 = scmp.le.s32.totalorder 2, %s12
    // Predicated region
    $region49: #{_lambda_.5} parent=5 // pred_check
      %p481 = pneg %p480
    $region50: #{_lambda_.5} parent=5 // pred_check_branch
      %483 = sbr.rel (%p481) target = $region52
    $region51: #{_lambda_.5} parent=5 // pred_region
      %s484 = ssub.s32 %s12, 2
      // Predicated region
      $region53: #{_lambda_.5} parent=51 // pred_check
        %p485 = pneg %p177
      $region54: #{_lambda_.5} parent=51 // pred_check_branch
        %487 = sbr.rel (%p485) target = $region56
      $region55: #{_lambda_.5} parent=51 // pred_region
        %s488 = smul.u32 2, %s18
        %p489 = scmp.lt.s32.totalorder %s488, 3
        %s490 = scalar_select %p489, %s488, 3
        %s491 = smul.addr %s490, 8
        %s492 = scalar_lea.vmem %s6, %s491
      $region56: #{_lambda_.5} parent=51 // pred_fallthru
        _
    $region52: #{_lambda_.5} parent=5 // pred_fallthru
      _
  $region6: #{_lambda_.5} parent=0 // loop_footer
    %s16 = sadd.s32 1, %s12
  $region7: #{_lambda_.5} parent=0 // loop_footer_branch
    %11 = sbr.rel target = $region3
  $region8: #{_lambda_.5} parent=0 // loop_exit
    _

// kernel: _lambda_.4
$region0: #{_lambda_.4}
  #allocation0 [shape = 'u32[]', space=smem, size = 0x4, offset = 0x4, fixed_abs, tag = 'smem constant byte address 0x4 - core index']
  #allocation1 [shape = 'u32[144,128]{1,0:T(1,128)}', space=vmem, size = 0x12000, scoped, tag = 'internal scratch']
  %s0 = inlined_call_operand.vmem [shape: bf16[2,10,5,128], index: 0, kind: input, shape index: {}]
  %s1 = inlined_call_operand.vmem [shape: bf16[2,10,5,128], index: 1, kind: input, shape index: {}]
  %s2 = inlined_call_operand.vmem [shape: bf16[9,128,128], index: 2, kind: input, shape index: {}]
  %s3 = inlined_call_operand.vmem [shape: f32[1,128], index: 3, kind: input, shape index: {}]
  %s4 = inlined_call_operand.vmem [shape: bf16[2,4,4,128], index: 4, kind: output, shape index: {}]
  %s5 = sld [smem:[#allocation0]]
  $region49: #{_lambda_.4} parent=0
    _
  %s7 = ssub.s32 1, %s5
  %s8 = scalar_select 0, %s7, %s5
  loop: start=0, step=1, limit=4
  $region2: #{_lambda_.4} parent=0 // loop_pre_header
    _
  $region3: #{_lambda_.4} parent=0 // loop_header
    %s10 = sphi 0, %s14
    %p11 = scmp.ge.s32.totalorder %s10, 4
    %s20 = sphi 0, %s22
    %s23 = sphi 0, %s20
    %s24 = sphi 0, %s23
    %s40 = sphi 0, %s24
    %s46 = sphi 0, %s48
    %s49 = sphi 0, %s46
    %s50 = sphi 0, %s49
    %s66 = sphi 0, %s50
    %s70 = sphi 0, %s70
    %s72 = sphi 0, %s70
    %s73 = sphi 0, %s72
    %s87 = sphi 0, %s73
    %s91 = sphi 0, %s91
    %s93 = sphi 0, %s91
    %s94 = sphi 0, %s93
    %s108 = sphi 0, %s94
    %s114 = sphi 0, %s116
    %s117 = sphi 0, %s114
    %s118 = sphi 0, %s117
    %s134 = sphi 0, %s118
  $region4: #{_lambda_.4} parent=0 // loop_header_branch
    %13 = sbr.rel (%p11) target = $region8
  $region5: #{_lambda_.4} parent=0 // loop_body
    %s15 = ssub.s32 %s10, 1
    %s16 = ssub.s32 %s10, 2
    %s17 = sadd.s32 %s10, 1
    %s18 = ssub.s32 %s10, %s17
    %p19 = scmp.eq.s32.totalorder %s18, 0
    %s21 = sadd.s32 %s20, 1
    %s22 = scalar_select %p19, %s20, %s21
    %p25 = pneg %p19
    %p26 = scmp.eq.s32.totalorder %s10, 1
    %p27 = por %p25, %p26
    %p28 = scmp.ne.s32.totalorder %s20, %s23
    %p29 = scmp.eq.s32.totalorder %s10, 0
    %p30 = por %p28, %p29
    %p31 = scmp.ne.s32.totalorder %s20, %s23
    %p32 = scmp.eq.s32.totalorder %s15, 1
    %p33 = por %p31, %p32
    %p34 = scmp.ne.s32.totalorder %s23, %s24
    %p35 = scmp.eq.s32.totalorder %s15, 0
    %p36 = por %p34, %p35
    %p37 = scmp.ne.s32.totalorder %s23, %s24
    %p38 = scmp.eq.s32.totalorder %s16, 1
    %p39 = por %p37, %p38
    %p41 = scmp.ne.s32.totalorder %s24, %s40
    %p42 = scmp.eq.s32.totalorder %s16, 0
    %p43 = por %p41, %p42
    %s44 = ssub.s32 %s10, %s17
    %p45 = scmp.eq.s32.totalorder %s44, 0
    %s47 = sadd.s32 %s46, 1
    %s48 = scalar_select %p45, %s46, %s47
    %p51 = pneg %p45
    %p52 = scmp.eq.s32.totalorder %s10, 1
    %p53 = por %p51, %p52
    %p54 = scmp.ne.s32.totalorder %s46, %s49
    %p55 = scmp.eq.s32.totalorder %s10, 0
    %p56 = por %p54, %p55
    %p57 = scmp.ne.s32.totalorder %s46, %s49
    %p58 = scmp.eq.s32.totalorder %s15, 1
    %p59 = por %p57, %p58
    %p60 = scmp.ne.s32.totalorder %s49, %s50
    %p61 = scmp.eq.s32.totalorder %s15, 0
    %p62 = por %p60, %p61
    %p63 = scmp.ne.s32.totalorder %s49, %s50
    %p64 = scmp.eq.s32.totalorder %s16, 1
    %p65 = por %p63, %p64
    %p67 = scmp.ne.s32.totalorder %s50, %s66
    %p68 = scmp.eq.s32.totalorder %s16, 0
    %p69 = por %p67, %p68
    %s71 = sadd.s32 %s70, 1
    %p74 = scmp.eq.s32.totalorder %s10, 1
    %p75 = scmp.ne.s32.totalorder %s70, %s72
    %p76 = scmp.eq.s32.totalorder %s10, 0
    %p77 = por %p75, %p76
    %p78 = scmp.ne.s32.totalorder %s70, %s72
    %p79 = scmp.eq.s32.totalorder %s15, 1
    %p80 = por %p78, %p79
    %p81 = scmp.ne.s32.totalorder %s72, %s73
    %p82 = scmp.eq.s32.totalorder %s15, 0
    %p83 = por %p81, %p82
    %p84 = scmp.ne.s32.totalorder %s72, %s73
    %p85 = scmp.eq.s32.totalorder %s16, 1
    %p86 = por %p84, %p85
    %p88 = scmp.ne.s32.totalorder %s73, %s87
    %p89 = scmp.eq.s32.totalorder %s16, 0
    %p90 = por %p88, %p89
    %s92 = sadd.s32 %s91, 1
    %p95 = scmp.eq.s32.totalorder %s10, 1
    %p96 = scmp.ne.s32.totalorder %s91, %s93
    %p97 = scmp.eq.s32.totalorder %s10, 0
    %p98 = por %p96, %p97
    %p99 = scmp.ne.s32.totalorder %s91, %s93
    %p100 = scmp.eq.s32.totalorder %s15, 1
    %p101 = por %p99, %p100
    %p102 = scmp.ne.s32.totalorder %s93, %s94
    %p103 = scmp.eq.s32.totalorder %s15, 0
    %p104 = por %p102, %p103
    %p105 = scmp.ne.s32.totalorder %s93, %s94
    %p106 = scmp.eq.s32.totalorder %s16, 1
    %p107 = por %p105, %p106
    %p109 = scmp.ne.s32.totalorder %s94, %s108
    %p110 = scmp.eq.s32.totalorder %s16, 0
    %p111 = por %p109, %p110
    %s112 = ssub.s32 %s10, %s17
    %p113 = scmp.eq.s32.totalorder %s112, 0
    %s115 = sadd.s32 %s114, 1
    %s116 = scalar_select %p113, %s114, %s115
    %p119 = pneg %p113
    %p120 = scmp.eq.s32.totalorder %s10, 1
    %p121 = por %p119, %p120
    %p122 = scmp.ne.s32.totalorder %s114, %s117
    %p123 = scmp.eq.s32.totalorder %s10, 0
    %p124 = por %p122, %p123
    %p125 = scmp.ne.s32.totalorder %s114, %s117
    %p126 = scmp.eq.s32.totalorder %s15, 1
    %p127 = por %p125, %p126
    %p128 = scmp.ne.s32.totalorder %s117, %s118
    %p129 = scmp.eq.s32.totalorder %s15, 0
    %p130 = por %p128, %p129
    %p131 = scmp.ne.s32.totalorder %s117, %s118
    %p132 = scmp.eq.s32.totalorder %s16, 1
    %p133 = por %p131, %p132
    %p135 = scmp.ne.s32.totalorder %s118, %s134
    %p136 = scmp.eq.s32.totalorder %s16, 0
    %p137 = por %p135, %p136
    %p138 = scmp.le.s32.totalorder 1, %s10
    %p139 = scmp.lt.s32.totalorder %s10, 3
    %p140 = pnand %p138, %p139
    %p141 = pneg %p140
    // Predicated region
    $region9: #{_lambda_.4} parent=5 // pred_check
      _
    $region10: #{_lambda_.4} parent=5 // pred_check_branch
      %143 = sbr.rel (%p140) target = $region12
    $region11: #{_lambda_.4} parent=5 // pred_region
      %s144 = ssub.s32 %s10, 1
      // Predicated region
      $region13: #{_lambda_.4} parent=11 // pred_check
        %p145 = pneg %p83
      $region14: #{_lambda_.4} parent=11 // pred_check_branch
        %147 = sbr.rel (%p145) target = $region16
      $region15: #{_lambda_.4} parent=11 // pred_region
        _
      $region16: #{_lambda_.4} parent=11 // pred_fallthru
        _
      // Predicated region
      $region17: #{_lambda_.4} parent=11 // pred_check
        %p148 = pneg %p104
      $region18: #{_lambda_.4} parent=11 // pred_check_branch
        %150 = sbr.rel (%p148) target = $region20
      $region19: #{_lambda_.4} parent=11 // pred_region
        _
      $region20: #{_lambda_.4} parent=11 // pred_fallthru
        _
    $region12: #{_lambda_.4} parent=5 // pred_fallthru
      _
    %p151 = scmp.lt.s32.totalorder %s10, 2
    // Predicated region
    $region21: #{_lambda_.4} parent=5 // pred_check
      %p152 = pneg %p151
    $region22: #{_lambda_.4} parent=5 // pred_check_branch
      %154 = sbr.rel (%p152) target = $region24
    $region23: #{_lambda_.4} parent=5 // pred_region
      // Predicated region
      $region25: #{_lambda_.4} parent=23 // pred_check
        %p155 = pneg %p30
      $region26: #{_lambda_.4} parent=23 // pred_check_branch
        %157 = sbr.rel (%p155) target = $region28
      $region27: #{_lambda_.4} parent=23 // pred_region
        %p158 = scmp.lt.s32.totalorder %s10, 1
        %s159 = scalar_select %p158, %s10, 1
        %s160 = smul.addr %s159, 10
        %s161 = smul.addr %s160, 4
        %s162 = scalar_lea.vmem %s0, %s161
      $region28: #{_lambda_.4} parent=23 // pred_fallthru
        _
      // Predicated region
      $region29: #{_lambda_.4} parent=23 // pred_check
        %p163 = pneg %p56
      $region30: #{_lambda_.4} parent=23 // pred_check_branch
        %165 = sbr.rel (%p163) target = $region32
      $region31: #{_lambda_.4} parent=23 // pred_region
        %p166 = scmp.lt.s32.totalorder %s10, 1
        %s167 = scalar_select %p166, %s10, 1
        %s168 = smul.addr %s167, 10
        %s169 = smul.addr %s168, 4
        %s170 = scalar_lea.vmem %s1, %s169
      $region32: #{_lambda_.4} parent=23 // pred_fallthru
        _
    $region24: #{_lambda_.4} parent=5 // pred_fallthru
      _
    %p171 = scmp.le.s32.totalorder 1, %s10
    %p172 = scmp.lt.s32.totalorder %s10, 3
    %p173 = pnand %p171, %p172
    %p174 = pneg %p173
    // Predicated region
    $region33: #{_lambda_.4} parent=5 // pred_check
      _
    $region34: #{_lambda_.4} parent=5 // pred_check_branch
      %176 = sbr.rel (%p173) target = $region36
    $region35: #{_lambda_.4} parent=5 // pred_region
      %s177 = ssub.s32 %s10, 1
      %p178 = scmp.lt.s32.totalorder %s15, 1
      %s179 = scalar_select %p178, %s15, 1
      %s180 = smul.addr %s179, 10
      %s181 = smul.addr %s180, 4
      %s182 = scalar_lea.vmem %s0, %s181
      %p183 = pneg %p36
      %p184 = pneg %p33
      %p185 = scmp.lt.s32.totalorder %s15, 1
      %s186 = scalar_select %p185, %s15, 1
      %s187 = smul.addr %s186, 10
      %s188 = smul.addr %s187, 4
      %s189 = scalar_lea.vmem %s1, %s188
      %p190 = pneg %p62
      %p191 = pneg %p59
      %p192 = pneg %p83
      %p193 = pneg %p80
      %p194 = pneg %p104
      %p195 = pneg %p101
      %p196 = pneg %p130
      %p197 = pneg %p127
      %p198 = scmp.lt.s32.totalorder %s15, 1
      %s199 = scalar_select %p198, %s15, 1
      %s200 = smul.addr %s199, 4
      %s201 = smul.addr %s200, 2
      %s202 = scalar_lea.vmem %s4, %s201
      %p203 = scmp.lt.s32.totalorder %s15, 1
      %s204 = scalar_select %p203, %s15, 1
      %s205 = smul.addr %s204, 10
      %s206 = smul.addr %s205, 4
      %s207 = scalar_lea.vmem %s0, %s206
      %p208 = scmp.lt.s32.totalorder %s15, 1
      %s209 = scalar_select %p208, %s15, 1
      %s210 = smul.addr %s209, 10
      %s211 = smul.addr %s210, 4
      %s212 = scalar_lea.vmem %s1, %s211
      %p213 = scmp.lt.s32.totalorder %s15, 1
      %s214 = scalar_select %p213, %s15, 1
      %s215 = smul.addr %s214, 4
      %s216 = smul.addr %s215, 2
      %s217 = scalar_lea.vmem %s4, %s216
      %v219 = vld [vmem:[%s3] sm:$0x1]
      %v221 = vlaneseq
      %v222 = vshrl.u32 %v221, 7
      %v223 = vsub.s32 0, %v222
      %v224 = vrot.slane %v219, %v223
      %v226 = vld [vmem:[%s207] sm:$0x3]
      %v227 = vld [vmem:[%s2] sm:$0xf]
      %v228 = vld [vmem:[%s2 + $0x4] sm:$0xf]
      %v229 = vld [vmem:[%s2 + $0x8] sm:$0xf]
      %v230 = vld [vmem:[%s2 + $0xc] sm:$0xf]
      %v231 = vld [vmem:[%s2 + $0x10] sm:$0xf]
      %v232 = vld [vmem:[%s2 + $0x14] sm:$0xf]
      %v233 = vld [vmem:[%s2 + $0x18] sm:$0xf]
      %v234 = vld [vmem:[%s2 + $0x1c] sm:$0xf]
      %v235 = vld [vmem:[%s2 + $0x20] sm:$0xf]
      %v236 = vld [vmem:[%s2 + $0x24] sm:$0xf]
      %v237 = vld [vmem:[%s2 + $0x28] sm:$0xf]
      %v238 = vld [vmem:[%s2 + $0x2c] sm:$0xf]
      %v239 = vld [vmem:[%s2 + $0x30] sm:$0xf]
      %v240 = vld [vmem:[%s2 + $0x34] sm:$0xf]
      %v241 = vld [vmem:[%s2 + $0x38] sm:$0xf]
      %v242 = vld [vmem:[%s2 + $0x3c] sm:$0xf]
      %v259 = vunpack.c.l.b16 %v227
      %v260 = vunpack.c.l.b16 %v228
      %v261 = vunpack.c.l.b16 %v229
      %v262 = vunpack.c.l.b16 %v230
      %v263 = vunpack.c.l.b16 %v231
      %v264 = vunpack.c.l.b16 %v232
      %v265 = vunpack.c.l.b16 %v233
      %v266 = vunpack.c.l.b16 %v234
      %v267 = vunpack.c.l.b16 %v235
      %v268 = vunpack.c.l.b16 %v236
      %v269 = vunpack.c.l.b16 %v237
      %v270 = vunpack.c.l.b16 %v238
      %v271 = vunpack.c.l.b16 %v239
      %v272 = vunpack.c.l.b16 %v240
      %v273 = vunpack.c.l.b16 %v241
      %v274 = vunpack.c.l.b16 %v242
      %v275 = vpack.c.b16 %v260, %v259
      %v276 = vpack.c.b16 %v262, %v261
      %v277 = vpack.c.b16 %v264, %v263
      %v278 = vpack.c.b16 %v266, %v265
      %v279 = vpack.c.b16 %v268, %v267
      %v280 = vpack.c.b16 %v270, %v269
      %v281 = vpack.c.b16 %v272, %v271
      %v282 = vpack.c.b16 %v274, %v273
      %291 = vmatprep.subr.bf16.mxu0 0
      %292 = vmatpush1.bf16.msra.mxu0 %v275
      %293 = vmatprep.subr.bf16.mxu0 0
      %294 = vmatpush1.bf16.msra.mxu0 %v276
      %295 = vmatprep.subr.bf16.mxu0 0
      %296 = vmatpush1.bf16.msra.mxu0 %v277
      %297 = vmatprep.subr.bf16.mxu0 0
      %298 = vmatpush1.bf16.msra.mxu0 %v278
      %299 = vmatprep.subr.bf16.mxu0 0
      %300 = vmatpush1.bf16.msra.mxu0 %v279
      %301 = vmatprep.subr.bf16.mxu0 0
      %302 = vmatpush1.bf16.msra.mxu0 %v280
      %303 = vmatprep.subr.bf16.mxu0 0
      %304 = vmatpush1.bf16.msra.mxu0 %v281
      %305 = vmatprep.subr.bf16.mxu0 0
      %306 = vmatpush1.bf16.msra.mxu0 %v282
      %307 = vmatprep.subr.bf16.mxu0 0
      %308 = vmatpush1.bf16.msra.mxu0 0
      %309 = vmatprep.subr.bf16.mxu0 0
      %310 = vmatpush1.bf16.msra.mxu0 0
      %311 = vmatprep.subr.bf16.mxu0 0
      %312 = vmatpush1.bf16.msra.mxu0 0
      %313 = vmatprep.subr.bf16.mxu0 0
      %314 = vmatpush1.bf16.msra.mxu0 0
      %315 = vmatprep.subr.bf16.mxu0 0
      %316 = vmatpush1.bf16.msra.mxu0 0
      %317 = vmatprep.subr.bf16.mxu0 0
      %318 = vmatpush1.bf16.msra.mxu0 0
      %319 = vmatprep.subr.bf16.mxu0 0
      %320 = vmatpush1.bf16.msra.mxu0 0
      %321 = vmatprep.subr.bf16.mxu0 0
      %322 = vmatpush1.bf16.msra.mxu0 0
      %323 = vmatprep.mubr.bf16.mxu0 0
      %324 = vmatmul.mubr.bf16.gmra.mrb[0].mxu0 %v226
      %v325 = vpop.f32.mrb[0].mxu0
      %v326 = vadd.f32 0.0, %v325
      %v327 = vpop.f32.mrb[0].mxu0
      %v328 = vpop.f32.mrb[0].mxu0
      %v329 = vpop.f32.mrb[0].mxu0
      %330 = vdwg.mxu0
      %v331 = vadd.f32 %v224, %v326
      %v332 = vld [vmem:[%s212] sm:$0x3]
      %s333 = scalar_lea.vmem %s2, 64
      %v334 = vld [vmem:[%s333] sm:$0xf]
      %v335 = vld [vmem:[%s333 + $0x4] sm:$0xf]
      %v336 = vld [vmem:[%s333 + $0x8] sm:$0xf]
      %v337 = vld [vmem:[%s333 + $0xc] sm:$0xf]
      %v338 = vld [vmem:[%s333 + $0x10] sm:$0xf]
      %v339 = vld [vmem:[%s333 + $0x14] sm:$0xf]
      %v340 = vld [vmem:[%s333 + $0x18] sm:$0xf]
      %v341 = vld [vmem:[%s333 + $0x1c] sm:$0xf]
      %v342 = vld [vmem:[%s333 + $0x20] sm:$0xf]
      %v343 = vld [vmem:[%s333 + $0x24] sm:$0xf]
      %v344 = vld [vmem:[%s333 + $0x28] sm:$0xf]
      %v345 = vld [vmem:[%s333 + $0x2c] sm:$0xf]
      %v346 = vld [vmem:[%s333 + $0x30] sm:$0xf]
      %v347 = vld [vmem:[%s333 + $0x34] sm:$0xf]
      %v348 = vld [vmem:[%s333 + $0x38] sm:$0xf]
      %v349 = vld [vmem:[%s333 + $0x3c] sm:$0xf]
      %v366 = vunpack.c.l.b16 %v334
      %v367 = vunpack.c.l.b16 %v335
      %v368 = vunpack.c.l.b16 %v336
      %v369 = vunpack.c.l.b16 %v337
      %v370 = vunpack.c.l.b16 %v338
      %v371 = vunpack.c.l.b16 %v339
      %v372 = vunpack.c.l.b16 %v340
      %v373 = vunpack.c.l.b16 %v341
      %v374 = vunpack.c.l.b16 %v342
      %v375 = vunpack.c.l.b16 %v343
      %v376 = vunpack.c.l.b16 %v344
      %v377 = vunpack.c.l.b16 %v345
      %v378 = vunpack.c.l.b16 %v346
      %v379 = vunpack.c.l.b16 %v347
      %v380 = vunpack.c.l.b16 %v348
      %v381 = vunpack.c.l.b16 %v349
      %v382 = vpack.c.b16 %v367, %v366
      %v383 = vpack.c.b16 %v369, %v368
      %v384 = vpack.c.b16 %v371, %v370
      %v385 = vpack.c.b16 %v373, %v372
      %v386 = vpack.c.b16 %v375, %v374
      %v387 = vpack.c.b16 %v377, %v376
      %v388 = vpack.c.b16 %v379, %v378
      %v389 = vpack.c.b16 %v381, %v380
      %398 = vmatprep.subr.bf16.mxu0 0
      %399 = vmatpush1.bf16.msra.mxu0 %v382
      %400 = vmatprep.subr.bf16.mxu0 0
      %401 = vmatpush1.bf16.msra.mxu0 %v383
      %402 = vmatprep.subr.bf16.mxu0 0
      %403 = vmatpush1.bf16.msra.mxu0 %v384
      %404 = vmatprep.subr.bf16.mxu0 0
      %405 = vmatpush1.bf16.msra.mxu0 %v385
      %406 = vmatprep.subr.bf16.mxu0 0
      %407 = vmatpush1.bf16.msra.mxu0 %v386
      %408 = vmatprep.subr.bf16.mxu0 0
      %409 = vmatpush1.bf16.msra.mxu0 %v387
      %410 = vmatprep.subr.bf16.mxu0 0
      %411 = vmatpush1.bf16.msra.mxu0 %v388
      %412 = vmatprep.subr.bf16.mxu0 0
      %413 = vmatpush1.bf16.msra.mxu0 %v389
      %414 = vmatprep.subr.bf16.mxu0 0
      %415 = vmatpush1.bf16.msra.mxu0 0
      %416 = vmatprep.subr.bf16.mxu0 0
      %417 = vmatpush1.bf16.msra.mxu0 0
      %418 = vmatprep.subr.bf16.mxu0 0
      %419 = vmatpush1.bf16.msra.mxu0 0
      %420 = vmatprep.subr.bf16.mxu0 0
      %421 = vmatpush1.bf16.msra.mxu0 0
      %422 = vmatprep.subr.bf16.mxu0 0
      %423 = vmatpush1.bf16.msra.mxu0 0
      %424 = vmatprep.subr.bf16.mxu0 0
      %425 = vmatpush1.bf16.msra.mxu0 0
      %426 = vmatprep.subr.bf16.mxu0 0
      %427 = vmatpush1.bf16.msra.mxu0 0
      %428 = vmatprep.subr.bf16.mxu0 0
      %429 = vmatpush1.bf16.msra.mxu0 0
      %430 = vmatprep.mubr.bf16.mxu0 0
      %431 = vmatmul.mubr.bf16.gmra.mrb[0].mxu0 %v332
      %v432 = vpop.f32.mrb[0].mxu0
      %v433 = vadd.f32 0.0, %v432
      %v434 = vpop.f32.mrb[0].mxu0
      %v435 = vpop.f32.mrb[0].mxu0
      %v436 = vpop.f32.mrb[0].mxu0
      %437 = vdwg.mxu0
      %v438 = vadd.f32 %v331, %v433
      %v439 = vld [vmem:[%s207] sm:$0x7]
      %s440 = scalar_lea.vmem %s2, 128
      %v441 = vld [vmem:[%s440] sm:$0xf]
      %v442 = vld [vmem:[%s440 + $0x4] sm:$0xf]
      %v443 = vld [vmem:[%s440 + $0x8] sm:$0xf]
      %v444 = vld [vmem:[%s440 + $0xc] sm:$0xf]
      %v445 = vld [vmem:[%s440 + $0x10] sm:$0xf]
      %v446 = vld [vmem:[%s440 + $0x14] sm:$0xf]
      %v447 = vld [vmem:[%s440 + $0x18] sm:$0xf]
      %v448 = vld [vmem:[%s440 + $0x1c] sm:$0xf]
      %v449 = vld [vmem:[%s440 + $0x20] sm:$0xf]
      %v450 = vld [vmem:[%s440 + $0x24] sm:$0xf]
      %v451 = vld [vmem:[%s440 + $0x28] sm:$0xf]
      %v452 = vld [vmem:[%s440 + $0x2c] sm:$0xf]
      %v453 = vld [vmem:[%s440 + $0x30] sm:$0xf]
      %v454 = vld [vmem:[%s440 + $0x34] sm:$0xf]
      %v455 = vld [vmem:[%s440 + $0x38] sm:$0xf]
      %v456 = vld [vmem:[%s440 + $0x3c] sm:$0xf]
      %v458 = vunpack.c.l.b16 %v439
      %v459 = vpack.c.b16 %v458, %v458
      %v461 = vshrl.u32 %v459, 16
      %v463 = vshll.u32 %v459, 16
      %v465 = vrot.slane %v463, 1
      %v466 = vor.u32 %v461, %v465
      %v484 = vunpack.c.l.b16 %v441
      %v485 = vunpack.c.l.b16 %v442
      %v486 = vunpack.c.l.b16 %v443
      %v487 = vunpack.c.l.b16 %v444
      %v488 = vunpack.c.l.b16 %v445
      %v489 = vunpack.c.l.b16 %v446
      %v490 = vunpack.c.l.b16 %v447
      %v491 = vunpack.c.l.b16 %v448
      %v492 = vunpack.c.l.b16 %v449
      %v493 = vunpack.c.l.b16 %v450
      %v494 = vunpack.c.l.b16 %v451
      %v495 = vunpack.c.l.b16 %v452
      %v496 = vunpack.c.l.b16 %v453
      %v497 = vunpack.c.l.b16 %v454
      %v498 = vunpack.c.l.b16 %v455
      %v499 = vunpack.c.l.b16 %v456
      %v500 = vpack.c.b16 %v485, %v484
      %v501 = vpack.c.b16 %v487, %v486
      %v502 = vpack.c.b16 %v489, %v488
      %v503 = vpack.c.b16 %v491, %v490
      %v504 = vpack.c.b16 %v493, %v492
      %v505 = vpack.c.b16 %v495, %v494
      %v506 = vpack.c.b16 %v497, %v496
      %v507 = vpack.c.b16 %v499, %v498
      %516 = vmatprep.subr.bf16.mxu0 0
      %517 = vmatpush1.bf16.msra.mxu0 %v500
      %518 = vmatprep.subr.bf16.mxu0 0
      %519 = vmatpush1.bf16.msra.mxu0 %v501
      %520 = vmatprep.subr.bf16.mxu0 0
      %521 = vmatpush1.bf16.msra.mxu0 %v502
      %522 = vmatprep.subr.bf16.mxu0 0
      %523 = vmatpush1.bf16.msra.mxu0 %v503
      %524 = vmatprep.subr.bf16.mxu0 0
      %525 = vmatpush1.bf16.msra.mxu0 %v504
      %526 = vmatprep.subr.bf16.mxu0 0
      %527 = vmatpush1.bf16.msra.mxu0 %v505
      %528 = vmatprep.subr.bf16.mxu0 0
      %529 = vmatpush1.bf16.msra.mxu0 %v506
      %530 = vmatprep.subr.bf16.mxu0 0
      %531 = vmatpush1.bf16.msra.mxu0 %v507
      %532 = vmatprep.subr.bf16.mxu0 0
      %533 = vmatpush1.bf16.msra.mxu0 0
      %534 = vmatprep.subr.bf16.mxu0 0
      %535 = vmatpush1.bf16.msra.mxu0 0
      %536 = vmatprep.subr.bf16.mxu0 0
      %537 = vmatpush1.bf16.msra.mxu0 0
      %538 = vmatprep.subr.bf16.mxu0 0
      %539 = vmatpush1.bf16.msra.mxu0 0
      %540 = vmatprep.subr.bf16.mxu0 0
      %541 = vmatpush1.bf16.msra.mxu0 0
      %542 = vmatprep.subr.bf16.mxu0 0
      %543 = vmatpush1.bf16.msra.mxu0 0
      %544 = vmatprep.subr.bf16.mxu0 0
      %545 = vmatpush1.bf16.msra.mxu0 0
      %546 = vmatprep.subr.bf16.mxu0 0
      %547 = vmatpush1.bf16.msra.mxu0 0
      %548 = vmatprep.mubr.bf16.mxu0 0
      %549 = vmatmul.mubr.bf16.gmra.mrb[0].mxu0 %v466
      %v550 = vpop.f32.mrb[0].mxu0
      %v551 = vadd.f32 0.0, %v550
      %v552 = vpop.f32.mrb[0].mxu0
      %v553 = vpop.f32.mrb[0].mxu0
      %v554 = vpop.f32.mrb[0].mxu0
      %555 = vdwg.mxu0
      %v556 = vadd.f32 %v438, %v551
      %s557 = scalar_lea.vmem %s207, 4
      %v558 = vld [vmem:[%s557] sm:$0x3]
      %s559 = scalar_lea.vmem %s2, 192
      %v560 = vld [vmem:[%s559] sm:$0xf]
      %v561 = vld [vmem:[%s559 + $0x4] sm:$0xf]
      %v562 = vld [vmem:[%s559 + $0x8] sm:$0xf]
      %v563 = vld [vmem:[%s559 + $0xc] sm:$0xf]
      %v564 = vld [vmem:[%s559 + $0x10] sm:$0xf]
      %v565 = vld [vmem:[%s559 + $0x14] sm:$0xf]
      %v566 = vld [vmem:[%s559 + $0x18] sm:$0xf]
      %v567 = vld [vmem:[%s559 + $0x1c] sm:$0xf]
      %v568 = vld [vmem:[%s559 + $0x20] sm:$0xf]
      %v569 = vld [vmem:[%s559 + $0x24] sm:$0xf]
      %v570 = vld [vmem:[%s559 + $0x28] sm:$0xf]
      %v571 = vld [vmem:[%s559 + $0x2c] sm:$0xf]
      %v572 = vld [vmem:[%s559 + $0x30] sm:$0xf]
      %v573 = vld [vmem:[%s559 + $0x34] sm:$0xf]
      %v574 = vld [vmem:[%s559 + $0x38] sm:$0xf]
      %v575 = vld [vmem:[%s559 + $0x3c] sm:$0xf]
      %v592 = vunpack.c.l.b16 %v560
      %v593 = vunpack.c.l.b16 %v561
      %v594 = vunpack.c.l.b16 %v562
      %v595 = vunpack.c.l.b16 %v563
      %v596 = vunpack.c.l.b16 %v564
      %v597 = vunpack.c.l.b16 %v565
      %v598 = vunpack.c.l.b16 %v566
      %v599 = vunpack.c.l.b16 %v567
      %v600 = vunpack.c.l.b16 %v568
      %v601 = vunpack.c.l.b16 %v569
      %v602 = vunpack.c.l.b16 %v570
      %v603 = vunpack.c.l.b16 %v571
      %v604 = vunpack.c.l.b16 %v572
      %v605 = vunpack.c.l.b16 %v573
      %v606 = vunpack.c.l.b16 %v574
      %v607 = vunpack.c.l.b16 %v575
      %v608 = vpack.c.b16 %v593, %v592
      %v609 = vpack.c.b16 %v595, %v594
      %v610 = vpack.c.b16 %v597, %v596
      %v611 = vpack.c.b16 %v599, %v598
      %v612 = vpack.c.b16 %v601, %v600
      %v613 = vpack.c.b16 %v603, %v602
      %v614 = vpack.c.b16 %v605, %v604
      %v615 = vpack.c.b16 %v607, %v606
      %624 = vmatprep.subr.bf16.mxu0 0
      %625 = vmatpush1.bf16.msra.mxu0 %v608
      %626 = vmatprep.subr.bf16.mxu0 0
      %627 = vmatpush1.bf16.msra.mxu0 %v609
      %628 = vmatprep.subr.bf16.mxu0 0
      %629 = vmatpush1.bf16.msra.mxu0 %v610
      %630 = vmatprep.subr.bf16.mxu0 0
      %631 = vmatpush1.bf16.msra.mxu0 %v611
      %632 = vmatprep.subr.bf16.mxu0 0
      %633 = vmatpush1.bf16.msra.mxu0 %v612
      %634 = vmatprep.subr.bf16.mxu0 0
      %635 = vmatpush1.bf16.msra.mxu0 %v613
      %636 = vmatprep.subr.bf16.mxu0 0
      %637 = vmatpush1.bf16.msra.mxu0 %v614
      %638 = vmatprep.subr.bf16.mxu0 0
      %639 = vmatpush1.bf16.msra.mxu0 %v615
      %640 = vmatprep.subr.bf16.mxu0 0
      %641 = vmatpush1.bf16.msra.mxu0 0
      %642 = vmatprep.subr.bf16.mxu0 0
      %643 = vmatpush1.bf16.msra.mxu0 0
      %644 = vmatprep.subr.bf16.mxu0 0
      %645 = vmatpush1.bf16.msra.mxu0 0
      %646 = vmatprep.subr.bf16.mxu0 0
      %647 = vmatpush1.bf16.msra.mxu0 0
      %648 = vmatprep.subr.bf16.mxu0 0
      %649 = vmatpush1.bf16.msra.mxu0 0
      %650 = vmatprep.subr.bf16.mxu0 0
      %651 = vmatpush1.bf16.msra.mxu0 0
      %652 = vmatprep.subr.bf16.mxu0 0
      %653 = vmatpush1.bf16.msra.mxu0 0
      %654 = vmatprep.subr.bf16.mxu0 0
      %655 = vmatpush1.bf16.msra.mxu0 0
      %656 = vmatprep.mubr.bf16.mxu0 0
      %657 = vmatmul.mubr.bf16.gmra.mrb[0].mxu0 %v558
      %v658 = vpop.f32.mrb[0].mxu0
      %v659 = vadd.f32 0.0, %v658
      %v660 = vpop.f32.mrb[0].mxu0
      %v661 = vpop.f32.mrb[0].mxu0
      %v662 = vpop.f32.mrb[0].mxu0
      %663 = vdwg.mxu0
      %v664 = vadd.f32 %v556, %v659
      %s665 = scalar_lea.vmem %s212, 4
      %v666 = vld [vmem:[%s665] sm:$0x3]
      %s667 = scalar_lea.vmem %s2, 256
      %v668 = vld [vmem:[%s667] sm:$0xf]
      %v669 = vld [vmem:[%s667 + $0x4] sm:$0xf]
      %v670 = vld [vmem:[%s667 + $0x8] sm:$0xf]
      %v671 = vld [vmem:[%s667 + $0xc] sm:$0xf]
      %v672 = vld [vmem:[%s667 + $0x10] sm:$0xf]
      %v673 = vld [vmem:[%s667 + $0x14] sm:$0xf]
      %v674 = vld [vmem:[%s667 + $0x18] sm:$0xf]
      %v675 = vld [vmem:[%s667 + $0x1c] sm:$0xf]
      %v676 = vld [vmem:[%s667 + $0x20] sm:$0xf]
      %v677 = vld [vmem:[%s667 + $0x24] sm:$0xf]
      %v678 = vld [vmem:[%s667 + $0x28] sm:$0xf]
      %v679 = vld [vmem:[%s667 + $0x2c] sm:$0xf]
      %v680 = vld [vmem:[%s667 + $0x30] sm:$0xf]
      %v681 = vld [vmem:[%s667 + $0x34] sm:$0xf]
      %v682 = vld [vmem:[%s667 + $0x38] sm:$0xf]
      %v683 = vld [vmem:[%s667 + $0x3c] sm:$0xf]
      %v700 = vunpack.c.l.b16 %v668
      %v701 = vunpack.c.l.b16 %v669
      %v702 = vunpack.c.l.b16 %v670
      %v703 = vunpack.c.l.b16 %v671
      %v704 = vunpack.c.l.b16 %v672
      %v705 = vunpack.c.l.b16 %v673
      %v706 = vunpack.c.l.b16 %v674
      %v707 = vunpack.c.l.b16 %v675
      %v708 = vunpack.c.l.b16 %v676
      %v709 = vunpack.c.l.b16 %v677
      %v710 = vunpack.c.l.b16 %v678
      %v711 = vunpack.c.l.b16 %v679
      %v712 = vunpack.c.l.b16 %v680
      %v713 = vunpack.c.l.b16 %v681
      %v714 = vunpack.c.l.b16 %v682
      %v715 = vunpack.c.l.b16 %v683
      %v716 = vpack.c.b16 %v701, %v700
      %v717 = vpack.c.b16 %v703, %v702
      %v718 = vpack.c.b16 %v705, %v704
      %v719 = vpack.c.b16 %v707, %v706
      %v720 = vpack.c.b16 %v709, %v708
      %v721 = vpack.c.b16 %v711, %v710
      %v722 = vpack.c.b16 %v713, %v712
      %v723 = vpack.c.b16 %v715, %v714
      %732 = vmatprep.subr.bf16.mxu0 0
      %733 = vmatpush1.bf16.msra.mxu0 %v716
      %734 = vmatprep.subr.bf16.mxu0 0
      %735 = vmatpush1.bf16.msra.mxu0 %v717
      %736 = vmatprep.subr.bf16.mxu0 0
      %737 = vmatpush1.bf16.msra.mxu0 %v718
      %738 = vmatprep.subr.bf16.mxu0 0
      %739 = vmatpush1.bf16.msra.mxu0 %v719
      %740 = vmatprep.subr.bf16.mxu0 0
      %741 = vmatpush1.bf16.msra.mxu0 %v720
      %742 = vmatprep.subr.bf16.mxu0 0
      %743 = vmatpush1.bf16.msra.mxu0 %v721
      %744 = vmatprep.subr.bf16.mxu0 0
      %745 = vmatpush1.bf16.msra.mxu0 %v722
      %746 = vmatprep.subr.bf16.mxu0 0
      %747 = vmatpush1.bf16.msra.mxu0 %v723
      %748 = vmatprep.subr.bf16.mxu0 0
      %749 = vmatpush1.bf16.msra.mxu0 0
      %750 = vmatprep.subr.bf16.mxu0 0
      %751 = vmatpush1.bf16.msra.mxu0 0
      %752 = vmatprep.subr.bf16.mxu0 0
      %753 = vmatpush1.bf16.msra.mxu0 0
      %754 = vmatprep.subr.bf16.mxu0 0
      %755 = vmatpush1.bf16.msra.mxu0 0
      %756 = vmatprep.subr.bf16.mxu0 0
      %757 = vmatpush1.bf16.msra.mxu0 0
      %758 = vmatprep.subr.bf16.mxu0 0
      %759 = vmatpush1.bf16.msra.mxu0 0
      %760 = vmatprep.subr.bf16.mxu0 0
      %761 = vmatpush1.bf16.msra.mxu0 0
      %762 = vmatprep.subr.bf16.mxu0 0
      %763 = vmatpush1.bf16.msra.mxu0 0
      %764 = vmatprep.mubr.bf16.mxu0 0
      %765 = vmatmul.mubr.bf16.gmra.mrb[0].mxu0 %v666
      %v766 = vpop.f32.mrb[0].mxu0
      %v767 = vadd.f32 0.0, %v766
      %v768 = vpop.f32.mrb[0].mxu0
      %v769 = vpop.f32.mrb[0].mxu0
      %v770 = vpop.f32.mrb[0].mxu0
      %771 = vdwg.mxu0
      %v772 = vadd.f32 %v664, %v767
      %v773 = vld [vmem:[%s557] sm:$0x7]
      %s774 = scalar_lea.vmem %s2, 320
      %v775 = vld [vmem:[%s774] sm:$0xf]
      %v776 = vld [vmem:[%s774 + $0x4] sm:$0xf]
      %v777 = vld [vmem:[%s774 + $0x8] sm:$0xf]
      %v778 = vld [vmem:[%s774 + $0xc] sm:$0xf]
      %v779 = vld [vmem:[%s774 + $0x10] sm:$0xf]
      %v780 = vld [vmem:[%s774 + $0x14] sm:$0xf]
      %v781 = vld [vmem:[%s774 + $0x18] sm:$0xf]
      %v782 = vld [vmem:[%s774 + $0x1c] sm:$0xf]
      %v783 = vld [vmem:[%s774 + $0x20] sm:$0xf]
      %v784 = vld [vmem:[%s774 + $0x24] sm:$0xf]
      %v785 = vld [vmem:[%s774 + $0x28] sm:$0xf]
      %v786 = vld [vmem:[%s774 + $0x2c] sm:$0xf]
      %v787 = vld [vmem:[%s774 + $0x30] sm:$0xf]
      %v788 = vld [vmem:[%s774 + $0x34] sm:$0xf]
      %v789 = vld [vmem:[%s774 + $0x38] sm:$0xf]
      %v790 = vld [vmem:[%s774 + $0x3c] sm:$0xf]
      %v792 = vunpack.c.l.b16 %v773
      %v793 = vpack.c.b16 %v792, %v792
      %v795 = vshrl.u32 %v793, 16
      %v797 = vshll.u32 %v793, 16
      %v799 = vrot.slane %v797, 1
      %v800 = vor.u32 %v795, %v799
      %v818 = vunpack.c.l.b16 %v775
      %v819 = vunpack.c.l.b16 %v776
      %v820 = vunpack.c.l.b16 %v777
      %v821 = vunpack.c.l.b16 %v778
      %v822 = vunpack.c.l.b16 %v779
      %v823 = vunpack.c.l.b16 %v780
      %v824 = vunpack.c.l.b16 %v781
      %v825 = vunpack.c.l.b16 %v782
      %v826 = vunpack.c.l.b16 %v783
      %v827 = vunpack.c.l.b16 %v784
      %v828 = vunpack.c.l.b16 %v785
      %v829 = vunpack.c.l.b16 %v786
      %v830 = vunpack.c.l.b16 %v787
      %v831 = vunpack.c.l.b16 %v788
      %v832 = vunpack.c.l.b16 %v789
      %v833 = vunpack.c.l.b16 %v790
      %v834 = vpack.c.b16 %v819, %v818
      %v835 = vpack.c.b16 %v821, %v820
      %v836 = vpack.c.b16 %v823, %v822
      %v837 = vpack.c.b16 %v825, %v824
      %v838 = vpack.c.b16 %v827, %v826
      %v839 = vpack.c.b16 %v829, %v828
      %v840 = vpack.c.b16 %v831, %v830
      %v841 = vpack.c.b16 %v833, %v832
      %850 = vmatprep.subr.bf16.mxu0 0
      %851 = vmatpush1.bf16.msra.mxu0 %v834
      %852 = vmatprep.subr.bf16.mxu0 0
      %853 = vmatpush1.bf16.msra.mxu0 %v835
      %854 = vmatprep.subr.bf16.mxu0 0
      %855 = vmatpush1.bf16.msra.mxu0 %v836
      %856 = vmatprep.subr.bf16.mxu0 0
      %857 = vmatpush1.bf16.msra.mxu0 %v837
      %858 = vmatprep.subr.bf16.mxu0 0
      %859 = vmatpush1.bf16.msra.mxu0 %v838
      %860 = vmatprep.subr.bf16.mxu0 0
      %861 = vmatpush1.bf16.msra.mxu0 %v839
      %862 = vmatprep.subr.bf16.mxu0 0
      %863 = vmatpush1.bf16.msra.mxu0 %v840
      %864 = vmatprep.subr.bf16.mxu0 0
      %865 = vmatpush1.bf16.msra.mxu0 %v841
      %866 = vmatprep.subr.bf16.mxu0 0
      %867 = vmatpush1.bf16.msra.mxu0 0
      %868 = vmatprep.subr.bf16.mxu0 0
      %869 = vmatpush1.bf16.msra.mxu0 0
      %870 = vmatprep.subr.bf16.mxu0 0
      %871 = vmatpush1.bf16.msra.mxu0 0
      %872 = vmatprep.subr.bf16.mxu0 0
      %873 = vmatpush1.bf16.msra.mxu0 0
      %874 = vmatprep.subr.bf16.mxu0 0
      %875 = vmatpush1.bf16.msra.mxu0 0
      %876 = vmatprep.subr.bf16.mxu0 0
      %877 = vmatpush1.bf16.msra.mxu0 0
      %878 = vmatprep.subr.bf16.mxu0 0
      %879 = vmatpush1.bf16.msra.mxu0 0
      %880 = vmatprep.subr.bf16.mxu0 0
      %881 = vmatpush1.bf16.msra.mxu0 0
      %882 = vmatprep.mubr.bf16.mxu0 0
      %883 = vmatmul.mubr.bf16.gmra.mrb[0].mxu0 %v800
      %v884 = vpop.f32.mrb[0].mxu0
      %v885 = vadd.f32 0.0, %v884
      %v886 = vpop.f32.mrb[0].mxu0
      %v887 = vpop.f32.mrb[0].mxu0
      %v888 = vpop.f32.mrb[0].mxu0
      %889 = vdwg.mxu0
      %v890 = vadd.f32 %v772, %v885
      %s891 = scalar_lea.vmem %s207, 8
      %v892 = vld [vmem:[%s891] sm:$0x3]
      %s893 = scalar_lea.vmem %s2, 384
      %v894 = vld [vmem:[%s893] sm:$0xf]
      %v895 = vld [vmem:[%s893 + $0x4] sm:$0xf]
      %v896 = vld [vmem:[%s893 + $0x8] sm:$0xf]
      %v897 = vld [vmem:[%s893 + $0xc] sm:$0xf]
      %v898 = vld [vmem:[%s893 + $0x10] sm:$0xf]
      %v899 = vld [vmem:[%s893 + $0x14] sm:$0xf]
      %v900 = vld [vmem:[%s893 + $0x18] sm:$0xf]
      %v901 = vld [vmem:[%s893 + $0x1c] sm:$0xf]
      %v902 = vld [vmem:[%s893 + $0x20] sm:$0xf]
      %v903 = vld [vmem:[%s893 + $0x24] sm:$0xf]
      %v904 = vld [vmem:[%s893 + $0x28] sm:$0xf]
      %v905 = vld [vmem:[%s893 + $0x2c] sm:$0xf]
      %v906 = vld [vmem:[%s893 + $0x30] sm:$0xf]
      %v907 = vld [vmem:[%s893 + $0x34] sm:$0xf]
      %v908 = vld [vmem:[%s893 + $0x38] sm:$0xf]
      %v909 = vld [vmem:[%s893 + $0x3c] sm:$0xf]
      %v926 = vunpack.c.l.b16 %v894
      %v927 = vunpack.c.l.b16 %v895
      %v928 = vunpack.c.l.b16 %v896
      %v929 = vunpack.c.l.b16 %v897
      %v930 = vunpack.c.l.b16 %v898
      %v931 = vunpack.c.l.b16 %v899
      %v932 = vunpack.c.l.b16 %v900
      %v933 = vunpack.c.l.b16 %v901
      %v934 = vunpack.c.l.b16 %v902
      %v935 = vunpack.c.l.b16 %v903
      %v936 = vunpack.c.l.b16 %v904
      %v937 = vunpack.c.l.b16 %v905
      %v938 = vunpack.c.l.b16 %v906
      %v939 = vunpack.c.l.b16 %v907
      %v940 = vunpack.c.l.b16 %v908
      %v941 = vunpack.c.l.b16 %v909
      %v942 = vpack.c.b16 %v927, %v926
      %v943 = vpack.c.b16 %v929, %v928
      %v944 = vpack.c.b16 %v931, %v930
      %v945 = vpack.c.b16 %v933, %v932
      %v946 = vpack.c.b16 %v935, %v934
      %v947 = vpack.c.b16 %v937, %v936
      %v948 = vpack.c.b16 %v939, %v938
      %v949 = vpack.c.b16 %v941, %v940
      %958 = vmatprep.subr.bf16.mxu0 0
      %959 = vmatpush1.bf16.msra.mxu0 %v942
      %960 = vmatprep.subr.bf16.mxu0 0
      %961 = vmatpush1.bf16.msra.mxu0 %v943
      %962 = vmatprep.subr.bf16.mxu0 0
      %963 = vmatpush1.bf16.msra.mxu0 %v944
      %964 = vmatprep.subr.bf16.mxu0 0
      %965 = vmatpush1.bf16.msra.mxu0 %v945
      %966 = vmatprep.subr.bf16.mxu0 0
      %967 = vmatpush1.bf16.msra.mxu0 %v946
      %968 = vmatprep.subr.bf16.mxu0 0
      %969 = vmatpush1.bf16.msra.mxu0 %v947
      %970 = vmatprep.subr.bf16.mxu0 0
      %971 = vmatpush1.bf16.msra.mxu0 %v948
      %972 = vmatprep.subr.bf16.mxu0 0
      %973 = vmatpush1.bf16.msra.mxu0 %v949
      %974 = vmatprep.subr.bf16.mxu0 0
      %975 = vmatpush1.bf16.msra.mxu0 0
      %976 = vmatprep.subr.bf16.mxu0 0
      %977 = vmatpush1.bf16.msra.mxu0 0
      %978 = vmatprep.subr.bf16.mxu0 0
      %979 = vmatpush1.bf16.msra.mxu0 0
      %980 = vmatprep.subr.bf16.mxu0 0
      %981 = vmatpush1.bf16.msra.mxu0 0
      %982 = vmatprep.subr.bf16.mxu0 0
      %983 = vmatpush1.bf16.msra.mxu0 0
      %984 = vmatprep.subr.bf16.mxu0 0
      %985 = vmatpush1.bf16.msra.mxu0 0
      %986 = vmatprep.subr.bf16.mxu0 0
      %987 = vmatpush1.bf16.msra.mxu0 0
      %988 = vmatprep.subr.bf16.mxu0 0
      %989 = vmatpush1.bf16.msra.mxu0 0
      %990 = vmatprep.mubr.bf16.mxu0 0
      %991 = vmatmul.mubr.bf16.gmra.mrb[0].mxu0 %v892
      %v992 = vpop.f32.mrb[0].mxu0
      %v993 = vadd.f32 0.0, %v992
      %v994 = vpop.f32.mrb[0].mxu0
      %v995 = vpop.f32.mrb[0].mxu0
      %v996 = vpop.f32.mrb[0].mxu0
      %997 = vdwg.mxu0
      %v998 = vadd.f32 %v890, %v993
      %s999 = scalar_lea.vmem %s212, 8
      %v1000 = vld [vmem:[%s999] sm:$0x3]
      %s1001 = scalar_lea.vmem %s2, 448
      %v1002 = vld [vmem:[%s1001] sm:$0xf]
      %v1003 = vld [vmem:[%s1001 + $0x4] sm:$0xf]
      %v1004 = vld [vmem:[%s1001 + $0x8] sm:$0xf]
      %v1005 = vld [vmem:[%s1001 + $0xc] sm:$0xf]
      %v1006 = vld [vmem:[%s1001 + $0x10] sm:$0xf]
      %v1007 = vld [vmem:[%s1001 + $0x14] sm:$0xf]
      %v1008 = vld [vmem:[%s1001 + $0x18] sm:$0xf]
      %v1009 = vld [vmem:[%s1001 + $0x1c] sm:$0xf]
      %v1010 = vld [vmem:[%s1001 + $0x20] sm:$0xf]
      %v1011 = vld [vmem:[%s1001 + $0x24] sm:$0xf]
      %v1012 = vld [vmem:[%s1001 + $0x28] sm:$0xf]
      %v1013 = vld [vmem:[%s1001 + $0x2c] sm:$0xf]
      %v1014 = vld [vmem:[%s1001 + $0x30] sm:$0xf]
      %v1015 = vld [vmem:[%s1001 + $0x34] sm:$0xf]
      %v1016 = vld [vmem:[%s1001 + $0x38] sm:$0xf]
      %v1017 = vld [vmem:[%s1001 + $0x3c] sm:$0xf]
      %v1034 = vunpack.c.l.b16 %v1002
      %v1035 = vunpack.c.l.b16 %v1003
      %v1036 = vunpack.c.l.b16 %v1004
      %v1037 = vunpack.c.l.b16 %v1005
      %v1038 = vunpack.c.l.b16 %v1006
      %v1039 = vunpack.c.l.b16 %v1007
      %v1040 = vunpack.c.l.b16 %v1008
      %v1041 = vunpack.c.l.b16 %v1009
      %v1042 = vunpack.c.l.b16 %v1010
      %v1043 = vunpack.c.l.b16 %v1011
      %v1044 = vunpack.c.l.b16 %v1012
      %v1045 = vunpack.c.l.b16 %v1013
      %v1046 = vunpack.c.l.b16 %v1014
      %v1047 = vunpack.c.l.b16 %v1015
      %v1048 = vunpack.c.l.b16 %v1016
      %v1049 = vunpack.c.l.b16 %v1017
      %v1050 = vpack.c.b16 %v1035, %v1034
      %v1051 = vpack.c.b16 %v1037, %v1036
      %v1052 = vpack.c.b16 %v1039, %v1038
      %v1053 = vpack.c.b16 %v1041, %v1040
      %v1054 = vpack.c.b16 %v1043, %v1042
      %v1055 = vpack.c.b16 %v1045, %v1044
      %v1056 = vpack.c.b16 %v1047, %v1046
      %v1057 = vpack.c.b16 %v1049, %v1048
      %1066 = vmatprep.subr.bf16.mxu0 0
      %1067 = vmatpush1.bf16.msra.mxu0 %v1050
      %1068 = vmatprep.subr.bf16.mxu0 0
      %1069 = vmatpush1.bf16.msra.mxu0 %v1051
      %1070 = vmatprep.subr.bf16.mxu0 0
      %1071 = vmatpush1.bf16.msra.mxu0 %v1052
      %1072 = vmatprep.subr.bf16.mxu0 0
      %1073 = vmatpush1.bf16.msra.mxu0 %v1053
      %1074 = vmatprep.subr.bf16.mxu0 0
      %1075 = vmatpush1.bf16.msra.mxu0 %v1054
      %1076 = vmatprep.subr.bf16.mxu0 0
      %1077 = vmatpush1.bf16.msra.mxu0 %v1055
      %1078 = vmatprep.subr.bf16.mxu0 0
      %1079 = vmatpush1.bf16.msra.mxu0 %v1056
      %1080 = vmatprep.subr.bf16.mxu0 0
      %1081 = vmatpush1.bf16.msra.mxu0 %v1057
      %1082 = vmatprep.subr.bf16.mxu0 0
      %1083 = vmatpush1.bf16.msra.mxu0 0
      %1084 = vmatprep.subr.bf16.mxu0 0
      %1085 = vmatpush1.bf16.msra.mxu0 0
      %1086 = vmatprep.subr.bf16.mxu0 0
      %1087 = vmatpush1.bf16.msra.mxu0 0
      %1088 = vmatprep.subr.bf16.mxu0 0
      %1089 = vmatpush1.bf16.msra.mxu0 0
      %1090 = vmatprep.subr.bf16.mxu0 0
      %1091 = vmatpush1.bf16.msra.mxu0 0
      %1092 = vmatprep.subr.bf16.mxu0 0
      %1093 = vmatpush1.bf16.msra.mxu0 0
      %1094 = vmatprep.subr.bf16.mxu0 0
      %1095 = vmatpush1.bf16.msra.mxu0 0
      %1096 = vmatprep.subr.bf16.mxu0 0
      %1097 = vmatpush1.bf16.msra.mxu0 0
      %1098 = vmatprep.mubr.bf16.mxu0 0
      %1099 = vmatmul.mubr.bf16.gmra.mrb[0].mxu0 %v1000
      %v1100 = vpop.f32.mrb[0].mxu0
      %v1101 = vadd.f32 0.0, %v1100
      %v1102 = vpop.f32.mrb[0].mxu0
      %v1103 = vpop.f32.mrb[0].mxu0
      %v1104 = vpop.f32.mrb[0].mxu0
      %1105 = vdwg.mxu0
      %v1106 = vadd.f32 %v998, %v1101
      %v1107 = vld [vmem:[%s891] sm:$0x7]
      %s1108 = scalar_lea.vmem %s2, 512
      %v1109 = vld [vmem:[%s1108] sm:$0xf]
      %v1110 = vld [vmem:[%s1108 + $0x4] sm:$0xf]
      %v1111 = vld [vmem:[%s1108 + $0x8] sm:$0xf]
      %v1112 = vld [vmem:[%s1108 + $0xc] sm:$0xf]
      %v1113 = vld [vmem:[%s1108 + $0x10] sm:$0xf]
      %v1114 = vld [vmem:[%s1108 + $0x14] sm:$0xf]
      %v1115 = vld [vmem:[%s1108 + $0x18] sm:$0xf]
      %v1116 = vld [vmem:[%s1108 + $0x1c] sm:$0xf]
      %v1117 = vld [vmem:[%s1108 + $0x20] sm:$0xf]
      %v1118 = vld [vmem:[%s1108 + $0x24] sm:$0xf]
      %v1119 = vld [vmem:[%s1108 + $0x28] sm:$0xf]
      %v1120 = vld [vmem:[%s1108 + $0x2c] sm:$0xf]
      %v1121 = vld [vmem:[%s1108 + $0x30] sm:$0xf]
      %v1122 = vld [vmem:[%s1108 + $0x34] sm:$0xf]
      %v1123 = vld [vmem:[%s1108 + $0x38] sm:$0xf]
      %v1124 = vld [vmem:[%s1108 + $0x3c] sm:$0xf]
      %v1126 = vunpack.c.l.b16 %v1107
      %v1127 = vpack.c.b16 %v1126, %v1126
      %v1129 = vshrl.u32 %v1127, 16
      %v1131 = vshll.u32 %v1127, 16
      %v1133 = vrot.slane %v1131, 1
      %v1134 = vor.u32 %v1129, %v1133
      %v1152 = vunpack.c.l.b16 %v1109
      %v1153 = vunpack.c.l.b16 %v1110
      %v1154 = vunpack.c.l.b16 %v1111
      %v1155 = vunpack.c.l.b16 %v1112
      %v1156 = vunpack.c.l.b16 %v1113
      %v1157 = vunpack.c.l.b16 %v1114
      %v1158 = vunpack.c.l.b16 %v1115
      %v1159 = vunpack.c.l.b16 %v1116
      %v1160 = vunpack.c.l.b16 %v1117
      %v1161 = vunpack.c.l.b16 %v1118
      %v1162 = vunpack.c.l.b16 %v1119
      %v1163 = vunpack.c.l.b16 %v1120
      %v1164 = vunpack.c.l.b16 %v1121
      %v1165 = vunpack.c.l.b16 %v1122
      %v1166 = vunpack.c.l.b16 %v1123
      %v1167 = vunpack.c.l.b16 %v1124
      %v1168 = vpack.c.b16 %v1153, %v1152
      %v1169 = vpack.c.b16 %v1155, %v1154
      %v1170 = vpack.c.b16 %v1157, %v1156
      %v1171 = vpack.c.b16 %v1159, %v1158
      %v1172 = vpack.c.b16 %v1161, %v1160
      %v1173 = vpack.c.b16 %v1163, %v1162
      %v1174 = vpack.c.b16 %v1165, %v1164
      %v1175 = vpack.c.b16 %v1167, %v1166
      %1184 = vmatprep.subr.bf16.mxu0 0
      %1185 = vmatpush1.bf16.msra.mxu0 %v1168
      %1186 = vmatprep.subr.bf16.mxu0 0
      %1187 = vmatpush1.bf16.msra.mxu0 %v1169
      %1188 = vmatprep.subr.bf16.mxu0 0
      %1189 = vmatpush1.bf16.msra.mxu0 %v1170
      %1190 = vmatprep.subr.bf16.mxu0 0
      %1191 = vmatpush1.bf16.msra.mxu0 %v1171
      %1192 = vmatprep.subr.bf16.mxu0 0
      %1193 = vmatpush1.bf16.msra.mxu0 %v1172
      %1194 = vmatprep.subr.bf16.mxu0 0
      %1195 = vmatpush1.bf16.msra.mxu0 %v1173
      %1196 = vmatprep.subr.bf16.mxu0 0
      %1197 = vmatpush1.bf16.msra.mxu0 %v1174
      %1198 = vmatprep.subr.bf16.mxu0 0
      %1199 = vmatpush1.bf16.msra.mxu0 %v1175
      %1200 = vmatprep.subr.bf16.mxu0 0
      %1201 = vmatpush1.bf16.msra.mxu0 0
      %1202 = vmatprep.subr.bf16.mxu0 0
      %1203 = vmatpush1.bf16.msra.mxu0 0
      %1204 = vmatprep.subr.bf16.mxu0 0
      %1205 = vmatpush1.bf16.msra.mxu0 0
      %1206 = vmatprep.subr.bf16.mxu0 0
      %1207 = vmatpush1.bf16.msra.mxu0 0
      %1208 = vmatprep.subr.bf16.mxu0 0
      %1209 = vmatpush1.bf16.msra.mxu0 0
      %1210 = vmatprep.subr.bf16.mxu0 0
      %1211 = vmatpush1.bf16.msra.mxu0 0
      %1212 = vmatprep.subr.bf16.mxu0 0
      %1213 = vmatpush1.bf16.msra.mxu0 0
      %1214 = vmatprep.subr.bf16.mxu0 0
      %1215 = vmatpush1.bf16.msra.mxu0 0
      %1216 = vmatprep.mubr.bf16.mxu0 0
      %1217 = vmatmul.mubr.bf16.gmra.mrb[0].mxu0 %v1134
      %v1218 = vpop.f32.mrb[0].mxu0
      %v1219 = vadd.f32 0.0, %v1218
      %v1220 = vpop.f32.mrb[0].mxu0
      %v1221 = vpop.f32.mrb[0].mxu0
      %v1222 = vpop.f32.mrb[0].mxu0
      %1223 = vdwg.mxu0
      %v1224 = vadd.f32 %v1106, %v1219
      %v1225 = vmax.f32 %v1224, 0.0
      %v1226 = vmin.f32 %v1225, 6.0
      %v1227 = vpack.c.bf16 %v1226, %v1226
      %1228 = vst [vmem:[%s217] sm:$0x3] %v1227
      %v1229 = vld [vmem:[%s891] sm:$0x3]
      %v1230 = vld [vmem:[%s2] sm:$0xf]
      %v1231 = vld [vmem:[%s2 + $0x4] sm:$0xf]
      %v1232 = vld [vmem:[%s2 + $0x8] sm:$0xf]
      %v1233 = vld [vmem:[%s2 + $0xc] sm:$0xf]
      %v1234 = vld [vmem:[%s2 + $0x10] sm:$0xf]
      %v1235 = vld [vmem:[%s2 + $0x14] sm:$0xf]
      %v1236 = vld [vmem:[%s2 + $0x18] sm:$0xf]
      %v1237 = vld [vmem:[%s2 + $0x1c] sm:$0xf]
      %v1238 = vld [vmem:[%s2 + $0x20] sm:$0xf]
      %v1239 = vld [vmem:[%s2 + $0x24] sm:$0xf]
      %v1240 = vld [vmem:[%s2 + $0x28] sm:$0xf]
      %v1241 = vld [vmem:[%s2 + $0x2c] sm:$0xf]
      %v1242 = vld [vmem:[%s2 + $0x30] sm:$0xf]
      %v1243 = vld [vmem:[%s2 + $0x34] sm:$0xf]
      %v1244 = vld [vmem:[%s2 + $0x38] sm:$0xf]
      %v1245 = vld [vmem:[%s2 + $0x3c] sm:$0xf]
      %v1262 = vunpack.c.l.b16 %v1230
      %v1263 = vunpack.c.l.b16 %v1231
      %v1264 = vunpack.c.l.b16 %v1232
      %v1265 = vunpack.c.l.b16 %v1233
      %v1266 = vunpack.c.l.b16 %v1234
      %v1267 = vunpack.c.l.b16 %v1235
      %v1268 = vunpack.c.l.b16 %v1236
      %v1269 = vunpack.c.l.b16 %v1237
      %v1270 = vunpack.c.l.b16 %v1238
      %v1271 = vunpack.c.l.b16 %v1239
      %v1272 = vunpack.c.l.b16 %v1240
      %v1273 = vunpack.c.l.b16 %v1241
      %v1274 = vunpack.c.l.b16 %v1242
      %v1275 = vunpack.c.l.b16 %v1243
      %v1276 = vunpack.c.l.b16 %v1244
      %v1277 = vunpack.c.l.b16 %v1245
      %v1278 = vpack.c.b16 %v1263, %v1262
      %v1279 = vpack.c.b16 %v1265, %v1264
      %v1280 = vpack.c.b16 %v1267, %v1266
      %v1281 = vpack.c.b16 %v1269, %v1268
      %v1282 = vpack.c.b16 %v1271, %v1270
      %v1283 = vpack.c.b16 %v1273, %v1272
      %v1284 = vpack.c.b16 %v1275, %v1274
      %v1285 = vpack.c.b16 %v1277, %v1276
      %1294 = vmatprep.subr.bf16.mxu0 0
      %1295 = vmatpush1.bf16.msra.mxu0 %v1278
      %1296 = vmatprep.subr.bf16.mxu0 0
      %1297 = vmatpush1.bf16.msra.mxu0 %v1279
      %1298 = vmatprep.subr.bf16.mxu0 0
      %1299 = vmatpush1.bf16.msra.mxu0 %v1280
      %1300 = vmatprep.subr.bf16.mxu0 0
      %1301 = vmatpush1.bf16.msra.mxu0 %v1281
      %1302 = vmatprep.subr.bf16.mxu0 0
      %1303 = vmatpush1.bf16.msra.mxu0 %v1282
      %1304 = vmatprep.subr.bf16.mxu0 0
      %1305 = vmatpush1.bf16.msra.mxu0 %v1283
      %1306 = vmatprep.subr.bf16.mxu0 0
      %1307 = vmatpush1.bf16.msra.mxu0 %v1284
      %1308 = vmatprep.subr.bf16.mxu0 0
      %1309 = vmatpush1.bf16.msra.mxu0 %v1285
      %1310 = vmatprep.subr.bf16.mxu0 0
      %1311 = vmatpush1.bf16.msra.mxu0 0
      %1312 = vmatprep.subr.bf16.mxu0 0
      %1313 = vmatpush1.bf16.msra.mxu0 0
      %1314 = vmatprep.subr.bf16.mxu0 0
      %1315 = vmatpush1.bf16.msra.mxu0 0
      %1316 = vmatprep.subr.bf16.mxu0 0
      %1317 = vmatpush1.bf16.msra.mxu0 0
      %1318 = vmatprep.subr.bf16.mxu0 0
      %1319 = vmatpush1.bf16.msra.mxu0 0
      %1320 = vmatprep.subr.bf16.mxu0 0
      %1321 = vmatpush1.bf16.msra.mxu0 0
      %1322 = vmatprep.subr.bf16.mxu0 0
      %1323 = vmatpush1.bf16.msra.mxu0 0
      %1324 = vmatprep.subr.bf16.mxu0 0
      %1325 = vmatpush1.bf16.msra.mxu0 0
      %1326 = vmatprep.mubr.bf16.mxu0 0
      %1327 = vmatmul.mubr.bf16.gmra.mrb[0].mxu0 %v1229
      %v1328 = vpop.f32.mrb[0].mxu0
      %v1329 = vadd.f32 0.0, %v1328
      %v1330 = vpop.f32.mrb[0].mxu0
      %v1331 = vpop.f32.mrb[0].mxu0
      %v1332 = vpop.f32.mrb[0].mxu0
      %1333 = vdwg.mxu0
      %v1334 = vadd.f32 %v224, %v1329
      %v1335 = vld [vmem:[%s999] sm:$0x3]
      %v1336 = vld [vmem:[%s333] sm:$0xf]
      %v1337 = vld [vmem:[%s333 + $0x4] sm:$0xf]
      %v1338 = vld [vmem:[%s333 + $0x8] sm:$0xf]
      %v1339 = vld [vmem:[%s333 + $0xc] sm:$0xf]
      %v1340 = vld [vmem:[%s333 + $0x10] sm:$0xf]
      %v1341 = vld [vmem:[%s333 + $0x14] sm:$0xf]
      %v1342 = vld [vmem:[%s333 + $0x18] sm:$0xf]
      %v1343 = vld [vmem:[%s333 + $0x1c] sm:$0xf]
      %v1344 = vld [vmem:[%s333 + $0x20] sm:$0xf]
      %v1345 = vld [vmem:[%s333 + $0x24] sm:$0xf]
      %v1346 = vld [vmem:[%s333 + $0x28] sm:$0xf]
      %v1347 = vld [vmem:[%s333 + $0x2c] sm:$0xf]
      %v1348 = vld [vmem:[%s333 + $0x30] sm:$0xf]
      %v1349 = vld [vmem:[%s333 + $0x34] sm:$0xf]
      %v1350 = vld [vmem:[%s333 + $0x38] sm:$0xf]
      %v1351 = vld [vmem:[%s333 + $0x3c] sm:$0xf]
      %v1368 = vunpack.c.l.b16 %v1336
      %v1369 = vunpack.c.l.b16 %v1337
      %v1370 = vunpack.c.l.b16 %v1338
      %v1371 = vunpack.c.l.b16 %v1339
      %v1372 = vunpack.c.l.b16 %v1340
      %v1373 = vunpack.c.l.b16 %v1341
      %v1374 = vunpack.c.l.b16 %v1342
      %v1375 = vunpack.c.l.b16 %v1343
      %v1376 = vunpack.c.l.b16 %v1344
      %v1377 = vunpack.c.l.b16 %v1345
      %v1378 = vunpack.c.l.b16 %v1346
      %v1379 = vunpack.c.l.b16 %v1347
      %v1380 = vunpack.c.l.b16 %v1348
      %v1381 = vunpack.c.l.b16 %v1349
      %v1382 = vunpack.c.l.b16 %v1350
      %v1383 = vunpack.c.l.b16 %v1351
      %v1384 = vpack.c.b16 %v1369, %v1368
      %v1385 = vpack.c.b16 %v1371, %v1370
      %v1386 = vpack.c.b16 %v1373, %v1372
      %v1387 = vpack.c.b16 %v1375, %v1374
      %v1388 = vpack.c.b16 %v1377, %v1376
      %v1389 = vpack.c.b16 %v1379, %v1378
      %v1390 = vpack.c.b16 %v1381, %v1380
      %v1391 = vpack.c.b16 %v1383, %v1382
      %1400 = vmatprep.subr.bf16.mxu0 0
      %1401 = vmatpush1.bf16.msra.mxu0 %v1384
      %1402 = vmatprep.subr.bf16.mxu0 0
      %1403 = vmatpush1.bf16.msra.mxu0 %v1385
      %1404 = vmatprep.subr.bf16.mxu0 0
      %1405 = vmatpush1.bf16.msra.mxu0 %v1386
      %1406 = vmatprep.subr.bf16.mxu0 0
      %1407 = vmatpush1.bf16.msra.mxu0 %v1387
      %1408 = vmatprep.subr.bf16.mxu0 0
      %1409 = vmatpush1.bf16.msra.mxu0 %v1388
      %1410 = vmatprep.subr.bf16.mxu0 0
      %1411 = vmatpush1.bf16.msra.mxu0 %v1389
      %1412 = vmatprep.subr.bf16.mxu0 0
      %1413 = vmatpush1.bf16.msra.mxu0 %v1390
      %1414 = vmatprep.subr.bf16.mxu0 0
      %1415 = vmatpush1.bf16.msra.mxu0 %v1391
      %1416 = vmatprep.subr.bf16.mxu0 0
      %1417 = vmatpush1.bf16.msra.mxu0 0
      %1418 = vmatprep.subr.bf16.mxu0 0
      %1419 = vmatpush1.bf16.msra.mxu0 0
      %1420 = vmatprep.subr.bf16.mxu0 0
      %1421 = vmatpush1.bf16.msra.mxu0 0
      %1422 = vmatprep.subr.bf16.mxu0 0
      %1423 = vmatpush1.bf16.msra.mxu0 0
      %1424 = vmatprep.subr.bf16.mxu0 0
      %1425 = vmatpush1.bf16.msra.mxu0 0
      %1426 = vmatprep.subr.bf16.mxu0 0
      %1427 = vmatpush1.bf16.msra.mxu0 0
      %1428 = vmatprep.subr.bf16.mxu0 0
      %1429 = vmatpush1.bf16.msra.mxu0 0
      %1430 = vmatprep.subr.bf16.mxu0 0
      %1431 = vmatpush1.bf16.msra.mxu0 0
      %1432 = vmatprep.mubr.bf16.mxu0 0
      %1433 = vmatmul.mubr.bf16.gmra.mrb[0].mxu0 %v1335
      %v1434 = vpop.f32.mrb[0].mxu0
      %v1435 = vadd.f32 0.0, %v1434
      %v1436 = vpop.f32.mrb[0].mxu0
      %v1437 = vpop.f32.mrb[0].mxu0
      %v1438 = vpop.f32.mrb[0].mxu0
      %1439 = vdwg.mxu0
      %v1440 = vadd.f32 %v1334, %v1435
      %v1441 = vld [vmem:[%s891] sm:$0x7]
      %v1442 = vld [vmem:[%s440] sm:$0xf]
      %v1443 = vld [vmem:[%s440 + $0x4] sm:$0xf]
      %v1444 = vld [vmem:[%s440 + $0x8] sm:$0xf]
      %v1445 = vld [vmem:[%s440 + $0xc] sm:$0xf]
      %v1446 = vld [vmem:[%s440 + $0x10] sm:$0xf]
      %v1447 = vld [vmem:[%s440 + $0x14] sm:$0xf]
      %v1448 = vld [vmem:[%s440 + $0x18] sm:$0xf]
      %v1449 = vld [vmem:[%s440 + $0x1c] sm:$0xf]
      %v1450 = vld [vmem:[%s440 + $0x20] sm:$0xf]
      %v1451 = vld [vmem:[%s440 + $0x24] sm:$0xf]
      %v1452 = vld [vmem:[%s440 + $0x28] sm:$0xf]
      %v1453 = vld [vmem:[%s440 + $0x2c] sm:$0xf]
      %v1454 = vld [vmem:[%s440 + $0x30] sm:$0xf]
      %v1455 = vld [vmem:[%s440 + $0x34] sm:$0xf]
      %v1456 = vld [vmem:[%s440 + $0x38] sm:$0xf]
      %v1457 = vld [vmem:[%s440 + $0x3c] sm:$0xf]
      %v1459 = vunpack.c.l.b16 %v1441
      %v1460 = vpack.c.b16 %v1459, %v1459
      %v1462 = vshrl.u32 %v1460, 16
      %v1464 = vshll.u32 %v1460, 16
      %v1466 = vrot.slane %v1464, 1
      %v1467 = vor.u32 %v1462, %v1466
      %v1485 = vunpack.c.l.b16 %v1442
      %v1486 = vunpack.c.l.b16 %v1443
      %v1487 = vunpack.c.l.b16 %v1444
      %v1488 = vunpack.c.l.b16 %v1445
      %v1489 = vunpack.c.l.b16 %v1446
      %v1490 = vunpack.c.l.b16 %v1447
      %v1491 = vunpack.c.l.b16 %v1448
      %v1492 = vunpack.c.l.b16 %v1449
      %v1493 = vunpack.c.l.b16 %v1450
      %v1494 = vunpack.c.l.b16 %v1451
      %v1495 = vunpack.c.l.b16 %v1452
      %v1496 = vunpack.c.l.b16 %v1453
      %v1497 = vunpack.c.l.b16 %v1454
      %v1498 = vunpack.c.l.b16 %v1455
      %v1499 = vunpack.c.l.b16 %v1456
      %v1500 = vunpack.c.l.b16 %v1457
      %v1501 = vpack.c.b16 %v1486, %v1485
      %v1502 = vpack.c.b16 %v1488, %v1487
      %v1503 = vpack.c.b16 %v1490, %v1489
      %v1504 = vpack.c.b16 %v1492, %v1491
      %v1505 = vpack.c.b16 %v1494, %v1493
      %v1506 = vpack.c.b16 %v1496, %v1495
      %v1507 = vpack.c.b16 %v1498, %v1497
      %v1508 = vpack.c.b16 %v1500, %v1499
      %1517 = vmatprep.subr.bf16.mxu0 0
      %1518 = vmatpush1.bf16.msra.mxu0 %v1501
      %1519 = vmatprep.subr.bf16.mxu0 0
      %1520 = vmatpush1.bf16.msra.mxu0 %v1502
      %1521 = vmatprep.subr.bf16.mxu0 0
      %1522 = vmatpush1.bf16.msra.mxu0 %v1503
      %1523 = vmatprep.subr.bf16.mxu0 0
      %1524 = vmatpush1.bf16.msra.mxu0 %v1504
      %1525 = vmatprep.subr.bf16.mxu0 0
      %1526 = vmatpush1.bf16.msra.mxu0 %v1505
      %1527 = vmatprep.subr.bf16.mxu0 0
      %1528 = vmatpush1.bf16.msra.mxu0 %v1506
      %1529 = vmatprep.subr.bf16.mxu0 0
      %1530 = vmatpush1.bf16.msra.mxu0 %v1507
      %1531 = vmatprep.subr.bf16.mxu0 0
      %1532 = vmatpush1.bf16.msra.mxu0 %v1508
      %1533 = vmatprep.subr.bf16.mxu0 0
      %1534 = vmatpush1.bf16.msra.mxu0 0
      %1535 = vmatprep.subr.bf16.mxu0 0
      %1536 = vmatpush1.bf16.msra.mxu0 0
      %1537 = vmatprep.subr.bf16.mxu0 0
      %1538 = vmatpush1.bf16.msra.mxu0 0
      %1539 = vmatprep.subr.bf16.mxu0 0
      %1540 = vmatpush1.bf16.msra.mxu0 0
      %1541 = vmatprep.subr.bf16.mxu0 0
      %1542 = vmatpush1.bf16.msra.mxu0 0
      %1543 = vmatprep.subr.bf16.mxu0 0
      %1544 = vmatpush1.bf16.msra.mxu0 0
      %1545 = vmatprep.subr.bf16.mxu0 0
      %1546 = vmatpush1.bf16.msra.mxu0 0
      %1547 = vmatprep.subr.bf16.mxu0 0
      %1548 = vmatpush1.bf16.msra.mxu0 0
      %1549 = vmatprep.mubr.bf16.mxu0 0
      %1550 = vmatmul.mubr.bf16.gmra.mrb[0].mxu0 %v1467
      %v1551 = vpop.f32.mrb[0].mxu0
      %v1552 = vadd.f32 0.0, %v1551
      %v1553 = vpop.f32.mrb[0].mxu0
      %v1554 = vpop.f32.mrb[0].mxu0
      %v1555 = vpop.f32.mrb[0].mxu0
      %1556 = vdwg.mxu0
      %v1557 = vadd.f32 %v1440, %v1552
      %s1558 = scalar_lea.vmem %s207, 12
      %v1559 = vld [vmem:[%s1558] sm:$0x3]
      %v1560 = vld [vmem:[%s559] sm:$0xf]
      %v1561 = vld [vmem:[%s559 + $0x4] sm:$0xf]
      %v1562 = vld [vmem:[%s559 + $0x8] sm:$0xf]
      %v1563 = vld [vmem:[%s559 + $0xc] sm:$0xf]
      %v1564 = vld [vmem:[%s559 + $0x10] sm:$0xf]
      %v1565 = vld [vmem:[%s559 + $0x14] sm:$0xf]
      %v1566 = vld [vmem:[%s559 + $0x18] sm:$0xf]
      %v1567 = vld [vmem:[%s559 + $0x1c] sm:$0xf]
      %v1568 = vld [vmem:[%s559 + $0x20] sm:$0xf]
      %v1569 = vld [vmem:[%s559 + $0x24] sm:$0xf]
      %v1570 = vld [vmem:[%s559 + $0x28] sm:$0xf]
      %v1571 = vld [vmem:[%s559 + $0x2c] sm:$0xf]
      %v1572 = vld [vmem:[%s559 + $0x30] sm:$0xf]
      %v1573 = vld [vmem:[%s559 + $0x34] sm:$0xf]
      %v1574 = vld [vmem:[%s559 + $0x38] sm:$0xf]
      %v1575 = vld [vmem:[%s559 + $0x3c] sm:$0xf]
      %v1592 = vunpack.c.l.b16 %v1560
      %v1593 = vunpack.c.l.b16 %v1561
      %v1594 = vunpack.c.l.b16 %v1562
      %v1595 = vunpack.c.l.b16 %v1563
      %v1596 = vunpack.c.l.b16 %v1564
      %v1597 = vunpack.c.l.b16 %v1565
      %v1598 = vunpack.c.l.b16 %v1566
      %v1599 = vunpack.c.l.b16 %v1567
      %v1600 = vunpack.c.l.b16 %v1568
      %v1601 = vunpack.c.l.b16 %v1569
      %v1602 = vunpack.c.l.b16 %v1570
      %v1603 = vunpack.c.l.b16 %v1571
      %v1604 = vunpack.c.l.b16 %v1572
      %v1605 = vunpack.c.l.b16 %v1573
      %v1606 = vunpack.c.l.b16 %v1574
      %v1607 = vunpack.c.l.b16 %v1575
      %v1608 = vpack.c.b16 %v1593, %v1592
      %v1609 = vpack.c.b16 %v1595, %v1594
      %v1610 = vpack.c.b16 %v1597, %v1596
      %v1611 = vpack.c.b16 %v1599, %v1598
      %v1612 = vpack.c.b16 %v1601, %v1600
      %v1613 = vpack.c.b16 %v1603, %v1602
      %v1614 = vpack.c.b16 %v1605, %v1604
      %v1615 = vpack.c.b16 %v1607, %v1606
      %1624 = vmatprep.subr.bf16.mxu0 0
      %1625 = vmatpush1.bf16.msra.mxu0 %v1608
      %1626 = vmatprep.subr.bf16.mxu0 0
      %1627 = vmatpush1.bf16.msra.mxu0 %v1609
      %1628 = vmatprep.subr.bf16.mxu0 0
      %1629 = vmatpush1.bf16.msra.mxu0 %v1610
      %1630 = vmatprep.subr.bf16.mxu0 0
      %1631 = vmatpush1.bf16.msra.mxu0 %v1611
      %1632 = vmatprep.subr.bf16.mxu0 0
      %1633 = vmatpush1.bf16.msra.mxu0 %v1612
      %1634 = vmatprep.subr.bf16.mxu0 0
      %1635 = vmatpush1.bf16.msra.mxu0 %v1613
      %1636 = vmatprep.subr.bf16.mxu0 0
      %1637 = vmatpush1.bf16.msra.mxu0 %v1614
      %1638 = vmatprep.subr.bf16.mxu0 0
      %1639 = vmatpush1.bf16.msra.mxu0 %v1615
      %1640 = vmatprep.subr.bf16.mxu0 0
      %1641 = vmatpush1.bf16.msra.mxu0 0
      %1642 = vmatprep.subr.bf16.mxu0 0
      %1643 = vmatpush1.bf16.msra.mxu0 0
      %1644 = vmatprep.subr.bf16.mxu0 0
      %1645 = vmatpush1.bf16.msra.mxu0 0
      %1646 = vmatprep.subr.bf16.mxu0 0
      %1647 = vmatpush1.bf16.msra.mxu0 0
      %1648 = vmatprep.subr.bf16.mxu0 0
      %1649 = vmatpush1.bf16.msra.mxu0 0
      %1650 = vmatprep.subr.bf16.mxu0 0
      %1651 = vmatpush1.bf16.msra.mxu0 0
      %1652 = vmatprep.subr.bf16.mxu0 0
      %1653 = vmatpush1.bf16.msra.mxu0 0
      %1654 = vmatprep.subr.bf16.mxu0 0
      %1655 = vmatpush1.bf16.msra.mxu0 0
      %1656 = vmatprep.mubr.bf16.mxu0 0
      %1657 = vmatmul.mubr.bf16.gmra.mrb[0].mxu0 %v1559
      %v1658 = vpop.f32.mrb[0].mxu0
      %v1659 = vadd.f32 0.0, %v1658
      %v1660 = vpop.f32.mrb[0].mxu0
      %v1661 = vpop.f32.mrb[0].mxu0
      %v1662 = vpop.f32.mrb[0].mxu0
      %1663 = vdwg.mxu0
      %v1664 = vadd.f32 %v1557, %v1659
      %s1665 = scalar_lea.vmem %s212, 12
      %v1666 = vld [vmem:[%s1665] sm:$0x3]
      %v1667 = vld [vmem:[%s667] sm:$0xf]
      %v1668 = vld [vmem:[%s667 + $0x4] sm:$0xf]
      %v1669 = vld [vmem:[%s667 + $0x8] sm:$0xf]
      %v1670 = vld [vmem:[%s667 + $0xc] sm:$0xf]
      %v1671 = vld [vmem:[%s667 + $0x10] sm:$0xf]
      %v1672 = vld [vmem:[%s667 + $0x14] sm:$0xf]
      %v1673 = vld [vmem:[%s667 + $0x18] sm:$0xf]
      %v1674 = vld [vmem:[%s667 + $0x1c] sm:$0xf]
      %v1675 = vld [vmem:[%s667 + $0x20] sm:$0xf]
      %v1676 = vld [vmem:[%s667 + $0x24] sm:$0xf]
      %v1677 = vld [vmem:[%s667 + $0x28] sm:$0xf]
      %v1678 = vld [vmem:[%s667 + $0x2c] sm:$0xf]
      %v1679 = vld [vmem:[%s667 + $0x30] sm:$0xf]
      %v1680 = vld [vmem:[%s667 + $0x34] sm:$0xf]
      %v1681 = vld [vmem:[%s667 + $0x38] sm:$0xf]
      %v1682 = vld [vmem:[%s667 + $0x3c] sm:$0xf]
      %v1699 = vunpack.c.l.b16 %v1667
      %v1700 = vunpack.c.l.b16 %v1668
      %v1701 = vunpack.c.l.b16 %v1669
      %v1702 = vunpack.c.l.b16 %v1670
      %v1703 = vunpack.c.l.b16 %v1671
      %v1704 = vunpack.c.l.b16 %v1672
      %v1705 = vunpack.c.l.b16 %v1673
      %v1706 = vunpack.c.l.b16 %v1674
      %v1707 = vunpack.c.l.b16 %v1675
      %v1708 = vunpack.c.l.b16 %v1676
      %v1709 = vunpack.c.l.b16 %v1677
      %v1710 = vunpack.c.l.b16 %v1678
      %v1711 = vunpack.c.l.b16 %v1679
      %v1712 = vunpack.c.l.b16 %v1680
      %v1713 = vunpack.c.l.b16 %v1681
      %v1714 = vunpack.c.l.b16 %v1682
      %v1715 = vpack.c.b16 %v1700, %v1699
      %v1716 = vpack.c.b16 %v1702, %v1701
      %v1717 = vpack.c.b16 %v1704, %v1703
      %v1718 = vpack.c.b16 %v1706, %v1705
      %v1719 = vpack.c.b16 %v1708, %v1707
      %v1720 = vpack.c.b16 %v1710, %v1709
      %v1721 = vpack.c.b16 %v1712, %v1711
      %v1722 = vpack.c.b16 %v1714, %v1713
      %1731 = vmatprep.subr.bf16.mxu0 0
      %1732 = vmatpush1.bf16.msra.mxu0 %v1715
      %1733 = vmatprep.subr.bf16.mxu0 0
      %1734 = vmatpush1.bf16.msra.mxu0 %v1716
      %1735 = vmatprep.subr.bf16.mxu0 0
      %1736 = vmatpush1.bf16.msra.mxu0 %v1717
      %1737 = vmatprep.subr.bf16.mxu0 0
      %1738 = vmatpush1.bf16.msra.mxu0 %v1718
      %1739 = vmatprep.subr.bf16.mxu0 0
      %1740 = vmatpush1.bf16.msra.mxu0 %v1719
      %1741 = vmatprep.subr.bf16.mxu0 0
      %1742 = vmatpush1.bf16.msra.mxu0 %v1720
      %1743 = vmatprep.subr.bf16.mxu0 0
      %1744 = vmatpush1.bf16.msra.mxu0 %v1721
      %1745 = vmatprep.subr.bf16.mxu0 0
      %1746 = vmatpush1.bf16.msra.mxu0 %v1722
      %1747 = vmatprep.subr.bf16.mxu0 0
      %1748 = vmatpush1.bf16.msra.mxu0 0
      %1749 = vmatprep.subr.bf16.mxu0 0
      %1750 = vmatpush1.bf16.msra.mxu0 0
      %1751 = vmatprep.subr.bf16.mxu0 0
      %1752 = vmatpush1.bf16.msra.mxu0 0
      %1753 = vmatprep.subr.bf16.mxu0 0
      %1754 = vmatpush1.bf16.msra.mxu0 0
      %1755 = vmatprep.subr.bf16.mxu0 0
      %1756 = vmatpush1.bf16.msra.mxu0 0
      %1757 = vmatprep.subr.bf16.mxu0 0
      %1758 = vmatpush1.bf16.msra.mxu0 0
      %1759 = vmatprep.subr.bf16.mxu0 0
      %1760 = vmatpush1.bf16.msra.mxu0 0
      %1761 = vmatprep.subr.bf16.mxu0 0
      %1762 = vmatpush1.bf16.msra.mxu0 0
      %1763 = vmatprep.mubr.bf16.mxu0 0
      %1764 = vmatmul.mubr.bf16.gmra.mrb[0].mxu0 %v1666
      %v1765 = vpop.f32.mrb[0].mxu0
      %v1766 = vadd.f32 0.0, %v1765
      %v1767 = vpop.f32.mrb[0].mxu0
      %v1768 = vpop.f32.mrb[0].mxu0
      %v1769 = vpop.f32.mrb[0].mxu0
      %1770 = vdwg.mxu0
      %v1771 = vadd.f32 %v1664, %v1766
      %v1772 = vld [vmem:[%s1558] sm:$0x7]
      %v1773 = vld [vmem:[%s774] sm:$0xf]
      %v1774 = vld [vmem:[%s774 + $0x4] sm:$0xf]
      %v1775 = vld [vmem:[%s774 + $0x8] sm:$0xf]
      %v1776 = vld [vmem:[%s774 + $0xc] sm:$0xf]
      %v1777 = vld [vmem:[%s774 + $0x10] sm:$0xf]
      %v1778 = vld [vmem:[%s774 + $0x14] sm:$0xf]
      %v1779 = vld [vmem:[%s774 + $0x18] sm:$0xf]
      %v1780 = vld [vmem:[%s774 + $0x1c] sm:$0xf]
      %v1781 = vld [vmem:[%s774 + $0x20] sm:$0xf]
      %v1782 = vld [vmem:[%s774 + $0x24] sm:$0xf]
      %v1783 = vld [vmem:[%s774 + $0x28] sm:$0xf]
      %v1784 = vld [vmem:[%s774 + $0x2c] sm:$0xf]
      %v1785 = vld [vmem:[%s774 + $0x30] sm:$0xf]
      %v1786 = vld [vmem:[%s774 + $0x34] sm:$0xf]
      %v1787 = vld [vmem:[%s774 + $0x38] sm:$0xf]
      %v1788 = vld [vmem:[%s774 + $0x3c] sm:$0xf]
      %v1790 = vunpack.c.l.b16 %v1772
      %v1791 = vpack.c.b16 %v1790, %v1790
      %v1793 = vshrl.u32 %v1791, 16
      %v1795 = vshll.u32 %v1791, 16
      %v1797 = vrot.slane %v1795, 1
      %v1798 = vor.u32 %v1793, %v1797
      %v1816 = vunpack.c.l.b16 %v1773
      %v1817 = vunpack.c.l.b16 %v1774
      %v1818 = vunpack.c.l.b16 %v1775
      %v1819 = vunpack.c.l.b16 %v1776
      %v1820 = vunpack.c.l.b16 %v1777
      %v1821 = vunpack.c.l.b16 %v1778
      %v1822 = vunpack.c.l.b16 %v1779
      %v1823 = vunpack.c.l.b16 %v1780
      %v1824 = vunpack.c.l.b16 %v1781
      %v1825 = vunpack.c.l.b16 %v1782
      %v1826 = vunpack.c.l.b16 %v1783
      %v1827 = vunpack.c.l.b16 %v1784
      %v1828 = vunpack.c.l.b16 %v1785
      %v1829 = vunpack.c.l.b16 %v1786
      %v1830 = vunpack.c.l.b16 %v1787
      %v1831 = vunpack.c.l.b16 %v1788
      %v1832 = vpack.c.b16 %v1817, %v1816
      %v1833 = vpack.c.b16 %v1819, %v1818
      %v1834 = vpack.c.b16 %v1821, %v1820
      %v1835 = vpack.c.b16 %v1823, %v1822
      %v1836 = vpack.c.b16 %v1825, %v1824
      %v1837 = vpack.c.b16 %v1827, %v1826
      %v1838 = vpack.c.b16 %v1829, %v1828
      %v1839 = vpack.c.b16 %v1831, %v1830
      %1848 = vmatprep.subr.bf16.mxu0 0
      %1849 = vmatpush1.bf16.msra.mxu0 %v1832
      %1850 = vmatprep.subr.bf16.mxu0 0
      %1851 = vmatpush1.bf16.msra.mxu0 %v1833
      %1852 = vmatprep.subr.bf16.mxu0 0
      %1853 = vmatpush1.bf16.msra.mxu0 %v1834
      %1854 = vmatprep.subr.bf16.mxu0 0
      %1855 = vmatpush1.bf16.msra.mxu0 %v1835
      %1856 = vmatprep.subr.bf16.mxu0 0
      %1857 = vmatpush1.bf16.msra.mxu0 %v1836
      %1858 = vmatprep.subr.bf16.mxu0 0
      %1859 = vmatpush1.bf16.msra.mxu0 %v1837
      %1860 = vmatprep.subr.bf16.mxu0 0
      %1861 = vmatpush1.bf16.msra.mxu0 %v1838
      %1862 = vmatprep.subr.bf16.mxu0 0
      %1863 = vmatpush1.bf16.msra.mxu0 %v1839
      %1864 = vmatprep.subr.bf16.mxu0 0
      %1865 = vmatpush1.bf16.msra.mxu0 0
      %1866 = vmatprep.subr.bf16.mxu0 0
      %1867 = vmatpush1.bf16.msra.mxu0 0
      %1868 = vmatprep.subr.bf16.mxu0 0
      %1869 = vmatpush1.bf16.msra.mxu0 0
      %1870 = vmatprep.subr.bf16.mxu0 0
      %1871 = vmatpush1.bf16.msra.mxu0 0
      %1872 = vmatprep.subr.bf16.mxu0 0
      %1873 = vmatpush1.bf16.msra.mxu0 0
      %1874 = vmatprep.subr.bf16.mxu0 0
      %1875 = vmatpush1.bf16.msra.mxu0 0
      %1876 = vmatprep.subr.bf16.mxu0 0
      %1877 = vmatpush1.bf16.msra.mxu0 0
      %1878 = vmatprep.subr.bf16.mxu0 0
      %1879 = vmatpush1.bf16.msra.mxu0 0
      %1880 = vmatprep.mubr.bf16.mxu0 0
      %1881 = vmatmul.mubr.bf16.gmra.mrb[0].mxu0 %v1798
      %v1882 = vpop.f32.mrb[0].mxu0
      %v1883 = vadd.f32 0.0, %v1882
      %v1884 = vpop.f32.mrb[0].mxu0
      %v1885 = vpop.f32.mrb[0].mxu0
      %v1886 = vpop.f32.mrb[0].mxu0
      %1887 = vdwg.mxu0
      %v1888 = vadd.f32 %v1771, %v1883
      %s1889 = scalar_lea.vmem %s207, 16
      %v1890 = vld [vmem:[%s1889] sm:$0x3]
      %v1891 = vld [vmem:[%s893] sm:$0xf]
      %v1892 = vld [vmem:[%s893 + $0x4] sm:$0xf]
      %v1893 = vld [vmem:[%s893 + $0x8] sm:$0xf]
      %v1894 = vld [vmem:[%s893 + $0xc] sm:$0xf]
      %v1895 = vld [vmem:[%s893 + $0x10] sm:$0xf]
      %v1896 = vld [vmem:[%s893 + $0x14] sm:$0xf]
      %v1897 = vld [vmem:[%s893 + $0x18] sm:$0xf]
      %v1898 = vld [vmem:[%s893 + $0x1c] sm:$0xf]
      %v1899 = vld [vmem:[%s893 + $0x20] sm:$0xf]
      %v1900 = vld [vmem:[%s893 + $0x24] sm:$0xf]
      %v1901 = vld [vmem:[%s893 + $0x28] sm:$0xf]
      %v1902 = vld [vmem:[%s893 + $0x2c] sm:$0xf]
      %v1903 = vld [vmem:[%s893 + $0x30] sm:$0xf]
      %v1904 = vld [vmem:[%s893 + $0x34] sm:$0xf]
      %v1905 = vld [vmem:[%s893 + $0x38] sm:$0xf]
      %v1906 = vld [vmem:[%s893 + $0x3c] sm:$0xf]
      %v1923 = vunpack.c.l.b16 %v1891
      %v1924 = vunpack.c.l.b16 %v1892
      %v1925 = vunpack.c.l.b16 %v1893
      %v1926 = vunpack.c.l.b16 %v1894
      %v1927 = vunpack.c.l.b16 %v1895
      %v1928 = vunpack.c.l.b16 %v1896
      %v1929 = vunpack.c.l.b16 %v1897
      %v1930 = vunpack.c.l.b16 %v1898
      %v1931 = vunpack.c.l.b16 %v1899
      %v1932 = vunpack.c.l.b16 %v1900
      %v1933 = vunpack.c.l.b16 %v1901
      %v1934 = vunpack.c.l.b16 %v1902
      %v1935 = vunpack.c.l.b16 %v1903
      %v1936 = vunpack.c.l.b16 %v1904
      %v1937 = vunpack.c.l.b16 %v1905
      %v1938 = vunpack.c.l.b16 %v1906
      %v1939 = vpack.c.b16 %v1924, %v1923
      %v1940 = vpack.c.b16 %v1926, %v1925
      %v1941 = vpack.c.b16 %v1928, %v1927
      %v1942 = vpack.c.b16 %v1930, %v1929
      %v1943 = vpack.c.b16 %v1932, %v1931
      %v1944 = vpack.c.b16 %v1934, %v1933
      %v1945 = vpack.c.b16 %v1936, %v1935
      %v1946 = vpack.c.b16 %v1938, %v1937
      %1955 = vmatprep.subr.bf16.mxu0 0
      %1956 = vmatpush1.bf16.msra.mxu0 %v1939
      %1957 = vmatprep.subr.bf16.mxu0 0
      %1958 = vmatpush1.bf16.msra.mxu0 %v1940
      %1959 = vmatprep.subr.bf16.mxu0 0
      %1960 = vmatpush1.bf16.msra.mxu0 %v1941
      %1961 = vmatprep.subr.bf16.mxu0 0
      %1962 = vmatpush1.bf16.msra.mxu0 %v1942
      %1963 = vmatprep.subr.bf16.mxu0 0
      %1964 = vmatpush1.bf16.msra.mxu0 %v1943
      %1965 = vmatprep.subr.bf16.mxu0 0
      %1966 = vmatpush1.bf16.msra.mxu0 %v1944
      %1967 = vmatprep.subr.bf16.mxu0 0
      %1968 = vmatpush1.bf16.msra.mxu0 %v1945
      %1969 = vmatprep.subr.bf16.mxu0 0
      %1970 = vmatpush1.bf16.msra.mxu0 %v1946
      %1971 = vmatprep.subr.bf16.mxu0 0
      %1972 = vmatpush1.bf16.msra.mxu0 0
      %1973 = vmatprep.subr.bf16.mxu0 0
      %1974 = vmatpush1.bf16.msra.mxu0 0
      %1975 = vmatprep.subr.bf16.mxu0 0
      %1976 = vmatpush1.bf16.msra.mxu0 0
      %1977 = vmatprep.subr.bf16.mxu0 0
      %1978 = vmatpush1.bf16.msra.mxu0 0
      %1979 = vmatprep.subr.bf16.mxu0 0
      %1980 = vmatpush1.bf16.msra.mxu0 0
      %1981 = vmatprep.subr.bf16.mxu0 0
      %1982 = vmatpush1.bf16.msra.mxu0 0
      %1983 = vmatprep.subr.bf16.mxu0 0
      %1984 = vmatpush1.bf16.msra.mxu0 0
      %1985 = vmatprep.subr.bf16.mxu0 0
      %1986 = vmatpush1.bf16.msra.mxu0 0
      %1987 = vmatprep.mubr.bf16.mxu0 0
      %1988 = vmatmul.mubr.bf16.gmra.mrb[0].mxu0 %v1890
      %v1989 = vpop.f32.mrb[0].mxu0
      %v1990 = vadd.f32 0.0, %v1989
      %v1991 = vpop.f32.mrb[0].mxu0
      %v1992 = vpop.f32.mrb[0].mxu0
      %v1993 = vpop.f32.mrb[0].mxu0
      %1994 = vdwg.mxu0
      %v1995 = vadd.f32 %v1888, %v1990
      %s1996 = scalar_lea.vmem %s212, 16
      %v1997 = vld [vmem:[%s1996] sm:$0x3]
      %v1998 = vld [vmem:[%s1001] sm:$0xf]
      %v1999 = vld [vmem:[%s1001 + $0x4] sm:$0xf]
      %v2000 = vld [vmem:[%s1001 + $0x8] sm:$0xf]
      %v2001 = vld [vmem:[%s1001 + $0xc] sm:$0xf]
      %v2002 = vld [vmem:[%s1001 + $0x10] sm:$0xf]
      %v2003 = vld [vmem:[%s1001 + $0x14] sm:$0xf]
      %v2004 = vld [vmem:[%s1001 + $0x18] sm:$0xf]
      %v2005 = vld [vmem:[%s1001 + $0x1c] sm:$0xf]
      %v2006 = vld [vmem:[%s1001 + $0x20] sm:$0xf]
      %v2007 = vld [vmem:[%s1001 + $0x24] sm:$0xf]
      %v2008 = vld [vmem:[%s1001 + $0x28] sm:$0xf]
      %v2009 = vld [vmem:[%s1001 + $0x2c] sm:$0xf]
      %v2010 = vld [vmem:[%s1001 + $0x30] sm:$0xf]
      %v2011 = vld [vmem:[%s1001 + $0x34] sm:$0xf]
      %v2012 = vld [vmem:[%s1001 + $0x38] sm:$0xf]
      %v2013 = vld [vmem:[%s1001 + $0x3c] sm:$0xf]
      %v2030 = vunpack.c.l.b16 %v1998
      %v2031 = vunpack.c.l.b16 %v1999
      %v2032 = vunpack.c.l.b16 %v2000
      %v2033 = vunpack.c.l.b16 %v2001
      %v2034 = vunpack.c.l.b16 %v2002
      %v2035 = vunpack.c.l.b16 %v2003
      %v2036 = vunpack.c.l.b16 %v2004
      %v2037 = vunpack.c.l.b16 %v2005
      %v2038 = vunpack.c.l.b16 %v2006
      %v2039 = vunpack.c.l.b16 %v2007
      %v2040 = vunpack.c.l.b16 %v2008
      %v2041 = vunpack.c.l.b16 %v2009
      %v2042 = vunpack.c.l.b16 %v2010
      %v2043 = vunpack.c.l.b16 %v2011
      %v2044 = vunpack.c.l.b16 %v2012
      %v2045 = vunpack.c.l.b16 %v2013
      %v2046 = vpack.c.b16 %v2031, %v2030
      %v2047 = vpack.c.b16 %v2033, %v2032
      %v2048 = vpack.c.b16 %v2035, %v2034
      %v2049 = vpack.c.b16 %v2037, %v2036
      %v2050 = vpack.c.b16 %v2039, %v2038
      %v2051 = vpack.c.b16 %v2041, %v2040
      %v2052 = vpack.c.b16 %v2043, %v2042
      %v2053 = vpack.c.b16 %v2045, %v2044
      %2062 = vmatprep.subr.bf16.mxu0 0
      %2063 = vmatpush1.bf16.msra.mxu0 %v2046
      %2064 = vmatprep.subr.bf16.mxu0 0
      %2065 = vmatpush1.bf16.msra.mxu0 %v2047
      %2066 = vmatprep.subr.bf16.mxu0 0
      %2067 = vmatpush1.bf16.msra.mxu0 %v2048
      %2068 = vmatprep.subr.bf16.mxu0 0
      %2069 = vmatpush1.bf16.msra.mxu0 %v2049
      %2070 = vmatprep.subr.bf16.mxu0 0
      %2071 = vmatpush1.bf16.msra.mxu0 %v2050
      %2072 = vmatprep.subr.bf16.mxu0 0
      %2073 = vmatpush1.bf16.msra.mxu0 %v2051
      %2074 = vmatprep.subr.bf16.mxu0 0
      %2075 = vmatpush1.bf16.msra.mxu0 %v2052
      %2076 = vmatprep.subr.bf16.mxu0 0
      %2077 = vmatpush1.bf16.msra.mxu0 %v2053
      %2078 = vmatprep.subr.bf16.mxu0 0
      %2079 = vmatpush1.bf16.msra.mxu0 0
      %2080 = vmatprep.subr.bf16.mxu0 0
      %2081 = vmatpush1.bf16.msra.mxu0 0
      %2082 = vmatprep.subr.bf16.mxu0 0
      %2083 = vmatpush1.bf16.msra.mxu0 0
      %2084 = vmatprep.subr.bf16.mxu0 0
      %2085 = vmatpush1.bf16.msra.mxu0 0
      %2086 = vmatprep.subr.bf16.mxu0 0
      %2087 = vmatpush1.bf16.msra.mxu0 0
      %2088 = vmatprep.subr.bf16.mxu0 0
      %2089 = vmatpush1.bf16.msra.mxu0 0
      %2090 = vmatprep.subr.bf16.mxu0 0
      %2091 = vmatpush1.bf16.msra.mxu0 0
      %2092 = vmatprep.subr.bf16.mxu0 0
      %2093 = vmatpush1.bf16.msra.mxu0 0
      %2094 = vmatprep.mubr.bf16.mxu0 0
      %2095 = vmatmul.mubr.bf16.gmra.mrb[0].mxu0 %v1997
      %v2096 = vpop.f32.mrb[0].mxu0
      %v2097 = vadd.f32 0.0, %v2096
      %v2098 = vpop.f32.mrb[0].mxu0
      %v2099 = vpop.f32.mrb[0].mxu0
      %v2100 = vpop.f32.mrb[0].mxu0
      %2101 = vdwg.mxu0
      %v2102 = vadd.f32 %v1995, %v2097
      %v2103 = vld [vmem:[%s1889] sm:$0x7]
      %v2104 = vld [vmem:[%s1108] sm:$0xf]
      %v2105 = vld [vmem:[%s1108 + $0x4] sm:$0xf]
      %v2106 = vld [vmem:[%s1108 + $0x8] sm:$0xf]
      %v2107 = vld [vmem:[%s1108 + $0xc] sm:$0xf]
      %v2108 = vld [vmem:[%s1108 + $0x10] sm:$0xf]
      %v2109 = vld [vmem:[%s1108 + $0x14] sm:$0xf]
      %v2110 = vld [vmem:[%s1108 + $0x18] sm:$0xf]
      %v2111 = vld [vmem:[%s1108 + $0x1c] sm:$0xf]
      %v2112 = vld [vmem:[%s1108 + $0x20] sm:$0xf]
      %v2113 = vld [vmem:[%s1108 + $0x24] sm:$0xf]
      %v2114 = vld [vmem:[%s1108 + $0x28] sm:$0xf]
      %v2115 = vld [vmem:[%s1108 + $0x2c] sm:$0xf]
      %v2116 = vld [vmem:[%s1108 + $0x30] sm:$0xf]
      %v2117 = vld [vmem:[%s1108 + $0x34] sm:$0xf]
      %v2118 = vld [vmem:[%s1108 + $0x38] sm:$0xf]
      %v2119 = vld [vmem:[%s1108 + $0x3c] sm:$0xf]
      %v2121 = vunpack.c.l.b16 %v2103
      %v2122 = vpack.c.b16 %v2121, %v2121
      %v2124 = vshrl.u32 %v2122, 16
      %v2126 = vshll.u32 %v2122, 16
      %v2128 = vrot.slane %v2126, 1
      %v2129 = vor.u32 %v2124, %v2128
      %v2147 = vunpack.c.l.b16 %v2104
      %v2148 = vunpack.c.l.b16 %v2105
      %v2149 = vunpack.c.l.b16 %v2106
      %v2150 = vunpack.c.l.b16 %v2107
      %v2151 = vunpack.c.l.b16 %v2108
      %v2152 = vunpack.c.l.b16 %v2109
      %v2153 = vunpack.c.l.b16 %v2110
      %v2154 = vunpack.c.l.b16 %v2111
      %v2155 = vunpack.c.l.b16 %v2112
      %v2156 = vunpack.c.l.b16 %v2113
      %v2157 = vunpack.c.l.b16 %v2114
      %v2158 = vunpack.c.l.b16 %v2115
      %v2159 = vunpack.c.l.b16 %v2116
      %v2160 = vunpack.c.l.b16 %v2117
      %v2161 = vunpack.c.l.b16 %v2118
      %v2162 = vunpack.c.l.b16 %v2119
      %v2163 = vpack.c.b16 %v2148, %v2147
      %v2164 = vpack.c.b16 %v2150, %v2149
      %v2165 = vpack.c.b16 %v2152, %v2151
      %v2166 = vpack.c.b16 %v2154, %v2153
      %v2167 = vpack.c.b16 %v2156, %v2155
      %v2168 = vpack.c.b16 %v2158, %v2157
      %v2169 = vpack.c.b16 %v2160, %v2159
      %v2170 = vpack.c.b16 %v2162, %v2161
      %2179 = vmatprep.subr.bf16.mxu0 0
      %2180 = vmatpush1.bf16.msra.mxu0 %v2163
      %2181 = vmatprep.subr.bf16.mxu0 0
      %2182 = vmatpush1.bf16.msra.mxu0 %v2164
      %2183 = vmatprep.subr.bf16.mxu0 0
      %2184 = vmatpush1.bf16.msra.mxu0 %v2165
      %2185 = vmatprep.subr.bf16.mxu0 0
      %2186 = vmatpush1.bf16.msra.mxu0 %v2166
      %2187 = vmatprep.subr.bf16.mxu0 0
      %2188 = vmatpush1.bf16.msra.mxu0 %v2167
      %2189 = vmatprep.subr.bf16.mxu0 0
      %2190 = vmatpush1.bf16.msra.mxu0 %v2168
      %2191 = vmatprep.subr.bf16.mxu0 0
      %2192 = vmatpush1.bf16.msra.mxu0 %v2169
      %2193 = vmatprep.subr.bf16.mxu0 0
      %2194 = vmatpush1.bf16.msra.mxu0 %v2170
      %2195 = vmatprep.subr.bf16.mxu0 0
      %2196 = vmatpush1.bf16.msra.mxu0 0
      %2197 = vmatprep.subr.bf16.mxu0 0
      %2198 = vmatpush1.bf16.msra.mxu0 0
      %2199 = vmatprep.subr.bf16.mxu0 0
      %2200 = vmatpush1.bf16.msra.mxu0 0
      %2201 = vmatprep.subr.bf16.mxu0 0
      %2202 = vmatpush1.bf16.msra.mxu0 0
      %2203 = vmatprep.subr.bf16.mxu0 0
      %2204 = vmatpush1.bf16.msra.mxu0 0
      %2205 = vmatprep.subr.bf16.mxu0 0
      %2206 = vmatpush1.bf16.msra.mxu0 0
      %2207 = vmatprep.subr.bf16.mxu0 0
      %2208 = vmatpush1.bf16.msra.mxu0 0
      %2209 = vmatprep.subr.bf16.mxu0 0
      %2210 = vmatpush1.bf16.msra.mxu0 0
      %2211 = vmatprep.mubr.bf16.mxu0 0
      %2212 = vmatmul.mubr.bf16.gmra.mrb[0].mxu0 %v2129
      %v2213 = vpop.f32.mrb[0].mxu0
      %v2214 = vadd.f32 0.0, %v2213
      %v2215 = vpop.f32.mrb[0].mxu0
      %v2216 = vpop.f32.mrb[0].mxu0
      %v2217 = vpop.f32.mrb[0].mxu0
      %2218 = vdwg.mxu0
      %v2219 = vadd.f32 %v2102, %v2214
      %v2220 = vmax.f32 %v2219, 0.0
      %v2221 = vmin.f32 %v2220, 6.0
      %v2222 = vpack.c.bf16 %v2221, %v2221
      %s2223 = scalar_lea.vmem %s217, 2
      %2224 = vst [vmem:[%s2223] sm:$0x3] %v2222
      %v2225 = vld [vmem:[%s1889] sm:$0x3]
      %v2226 = vld [vmem:[%s2] sm:$0xf]
      %v2227 = vld [vmem:[%s2 + $0x4] sm:$0xf]
      %v2228 = vld [vmem:[%s2 + $0x8] sm:$0xf]
      %v2229 = vld [vmem:[%s2 + $0xc] sm:$0xf]
      %v2230 = vld [vmem:[%s2 + $0x10] sm:$0xf]
      %v2231 = vld [vmem:[%s2 + $0x14] sm:$0xf]
      %v2232 = vld [vmem:[%s2 + $0x18] sm:$0xf]
      %v2233 = vld [vmem:[%s2 + $0x1c] sm:$0xf]
      %v2234 = vld [vmem:[%s2 + $0x20] sm:$0xf]
      %v2235 = vld [vmem:[%s2 + $0x24] sm:$0xf]
      %v2236 = vld [vmem:[%s2 + $0x28] sm:$0xf]
      %v2237 = vld [vmem:[%s2 + $0x2c] sm:$0xf]
      %v2238 = vld [vmem:[%s2 + $0x30] sm:$0xf]
      %v2239 = vld [vmem:[%s2 + $0x34] sm:$0xf]
      %v2240 = vld [vmem:[%s2 + $0x38] sm:$0xf]
      %v2241 = vld [vmem:[%s2 + $0x3c] sm:$0xf]
      %v2258 = vunpack.c.l.b16 %v2226
      %v2259 = vunpack.c.l.b16 %v2227
      %v2260 = vunpack.c.l.b16 %v2228
      %v2261 = vunpack.c.l.b16 %v2229
      %v2262 = vunpack.c.l.b16 %v2230
      %v2263 = vunpack.c.l.b16 %v2231
      %v2264 = vunpack.c.l.b16 %v2232
      %v2265 = vunpack.c.l.b16 %v2233
      %v2266 = vunpack.c.l.b16 %v2234
      %v2267 = vunpack.c.l.b16 %v2235
      %v2268 = vunpack.c.l.b16 %v2236
      %v2269 = vunpack.c.l.b16 %v2237
      %v2270 = vunpack.c.l.b16 %v2238
      %v2271 = vunpack.c.l.b16 %v2239
      %v2272 = vunpack.c.l.b16 %v2240
      %v2273 = vunpack.c.l.b16 %v2241
      %v2274 = vpack.c.b16 %v2259, %v2258
      %v2275 = vpack.c.b16 %v2261, %v2260
      %v2276 = vpack.c.b16 %v2263, %v2262
      %v2277 = vpack.c.b16 %v2265, %v2264
      %v2278 = vpack.c.b16 %v2267, %v2266
      %v2279 = vpack.c.b16 %v2269, %v2268
      %v2280 = vpack.c.b16 %v2271, %v2270
      %v2281 = vpack.c.b16 %v2273, %v2272
      %2290 = vmatprep.subr.bf16.mxu0 0
      %2291 = vmatpush1.bf16.msra.mxu0 %v2274
      %2292 = vmatprep.subr.bf16.mxu0 0
      %2293 = vmatpush1.bf16.msra.mxu0 %v2275
      %2294 = vmatprep.subr.bf16.mxu0 0
      %2295 = vmatpush1.bf16.msra.mxu0 %v2276
      %2296 = vmatprep.subr.bf16.mxu0 0
      %2297 = vmatpush1.bf16.msra.mxu0 %v2277
      %2298 = vmatprep.subr.bf16.mxu0 0
      %2299 = vmatpush1.bf16.msra.mxu0 %v2278
      %2300 = vmatprep.subr.bf16.mxu0 0
      %2301 = vmatpush1.bf16.msra.mxu0 %v2279
      %2302 = vmatprep.subr.bf16.mxu0 0
      %2303 = vmatpush1.bf16.msra.mxu0 %v2280
      %2304 = vmatprep.subr.bf16.mxu0 0
      %2305 = vmatpush1.bf16.msra.mxu0 %v2281
      %2306 = vmatprep.subr.bf16.mxu0 0
      %2307 = vmatpush1.bf16.msra.mxu0 0
      %2308 = vmatprep.subr.bf16.mxu0 0
      %2309 = vmatpush1.bf16.msra.mxu0 0
      %2310 = vmatprep.subr.bf16.mxu0 0
      %2311 = vmatpush1.bf16.msra.mxu0 0
      %2312 = vmatprep.subr.bf16.mxu0 0
      %2313 = vmatpush1.bf16.msra.mxu0 0
      %2314 = vmatprep.subr.bf16.mxu0 0
      %2315 = vmatpush1.bf16.msra.mxu0 0
      %2316 = vmatprep.subr.bf16.mxu0 0
      %2317 = vmatpush1.bf16.msra.mxu0 0
      %2318 = vmatprep.subr.bf16.mxu0 0
      %2319 = vmatpush1.bf16.msra.mxu0 0
      %2320 = vmatprep.subr.bf16.mxu0 0
      %2321 = vmatpush1.bf16.msra.mxu0 0
      %2322 = vmatprep.mubr.bf16.mxu0 0
      %2323 = vmatmul.mubr.bf16.gmra.mrb[0].mxu0 %v2225
      %v2324 = vpop.f32.mrb[0].mxu0
      %v2325 = vadd.f32 0.0, %v2324
      %v2326 = vpop.f32.mrb[0].mxu0
      %v2327 = vpop.f32.mrb[0].mxu0
      %v2328 = vpop.f32.mrb[0].mxu0
      %2329 = vdwg.mxu0
      %v2330 = vadd.f32 %v224, %v2325
      %v2331 = vld [vmem:[%s1996] sm:$0x3]
      %v2332 = vld [vmem:[%s333] sm:$0xf]
      %v2333 = vld [vmem:[%s333 + $0x4] sm:$0xf]
      %v2334 = vld [vmem:[%s333 + $0x8] sm:$0xf]
      %v2335 = vld [vmem:[%s333 + $0xc] sm:$0xf]
      %v2336 = vld [vmem:[%s333 + $0x10] sm:$0xf]
      %v2337 = vld [vmem:[%s333 + $0x14] sm:$0xf]
      %v2338 = vld [vmem:[%s333 + $0x18] sm:$0xf]
      %v2339 = vld [vmem:[%s333 + $0x1c] sm:$0xf]
      %v2340 = vld [vmem:[%s333 + $0x20] sm:$0xf]
      %v2341 = vld [vmem:[%s333 + $0x24] sm:$0xf]
      %v2342 = vld [vmem:[%s333 + $0x28] sm:$0xf]
      %v2343 = vld [vmem:[%s333 + $0x2c] sm:$0xf]
      %v2344 = vld [vmem:[%s333 + $0x30] sm:$0xf]
      %v2345 = vld [vmem:[%s333 + $0x34] sm:$0xf]
      %v2346 = vld [vmem:[%s333 + $0x38] sm:$0xf]
      %v2347 = vld [vmem:[%s333 + $0x3c] sm:$0xf]
      %v2364 = vunpack.c.l.b16 %v2332
      %v2365 = vunpack.c.l.b16 %v2333
      %v2366 = vunpack.c.l.b16 %v2334
      %v2367 = vunpack.c.l.b16 %v2335
      %v2368 = vunpack.c.l.b16 %v2336
      %v2369 = vunpack.c.l.b16 %v2337
      %v2370 = vunpack.c.l.b16 %v2338
      %v2371 = vunpack.c.l.b16 %v2339
      %v2372 = vunpack.c.l.b16 %v2340
      %v2373 = vunpack.c.l.b16 %v2341
      %v2374 = vunpack.c.l.b16 %v2342
      %v2375 = vunpack.c.l.b16 %v2343
      %v2376 = vunpack.c.l.b16 %v2344
      %v2377 = vunpack.c.l.b16 %v2345
      %v2378 = vunpack.c.l.b16 %v2346
      %v2379 = vunpack.c.l.b16 %v2347
      %v2380 = vpack.c.b16 %v2365, %v2364
      %v2381 = vpack.c.b16 %v2367, %v2366
      %v2382 = vpack.c.b16 %v2369, %v2368
      %v2383 = vpack.c.b16 %v2371, %v2370
      %v2384 = vpack.c.b16 %v2373, %v2372
      %v2385 = vpack.c.b16 %v2375, %v2374
      %v2386 = vpack.c.b16 %v2377, %v2376
      %v2387 = vpack.c.b16 %v2379, %v2378
      %2396 = vmatprep.subr.bf16.mxu0 0
      %2397 = vmatpush1.bf16.msra.mxu0 %v2380
      %2398 = vmatprep.subr.bf16.mxu0 0
      %2399 = vmatpush1.bf16.msra.mxu0 %v2381
      %2400 = vmatprep.subr.bf16.mxu0 0
      %2401 = vmatpush1.bf16.msra.mxu0 %v2382
      %2402 = vmatprep.subr.bf16.mxu0 0
      %2403 = vmatpush1.bf16.msra.mxu0 %v2383
      %2404 = vmatprep.subr.bf16.mxu0 0
      %2405 = vmatpush1.bf16.msra.mxu0 %v2384
      %2406 = vmatprep.subr.bf16.mxu0 0
      %2407 = vmatpush1.bf16.msra.mxu0 %v2385
      %2408 = vmatprep.subr.bf16.mxu0 0
      %2409 = vmatpush1.bf16.msra.mxu0 %v2386
      %2410 = vmatprep.subr.bf16.mxu0 0
      %2411 = vmatpush1.bf16.msra.mxu0 %v2387
      %2412 = vmatprep.subr.bf16.mxu0 0
      %2413 = vmatpush1.bf16.msra.mxu0 0
      %2414 = vmatprep.subr.bf16.mxu0 0
      %2415 = vmatpush1.bf16.msra.mxu0 0
      %2416 = vmatprep.subr.bf16.mxu0 0
      %2417 = vmatpush1.bf16.msra.mxu0 0
      %2418 = vmatprep.subr.bf16.mxu0 0
      %2419 = vmatpush1.bf16.msra.mxu0 0
      %2420 = vmatprep.subr.bf16.mxu0 0
      %2421 = vmatpush1.bf16.msra.mxu0 0
      %2422 = vmatprep.subr.bf16.mxu0 0
      %2423 = vmatpush1.bf16.msra.mxu0 0
      %2424 = vmatprep.subr.bf16.mxu0 0
      %2425 = vmatpush1.bf16.msra.mxu0 0
      %2426 = vmatprep.subr.bf16.mxu0 0
      %2427 = vmatpush1.bf16.msra.mxu0 0
      %2428 = vmatprep.mubr.bf16.mxu0 0
      %2429 = vmatmul.mubr.bf16.gmra.mrb[0].mxu0 %v2331
      %v2430 = vpop.f32.mrb[0].mxu0
      %v2431 = vadd.f32 0.0, %v2430
      %v2432 = vpop.f32.mrb[0].mxu0
      %v2433 = vpop.f32.mrb[0].mxu0
      %v2434 = vpop.f32.mrb[0].mxu0
      %2435 = vdwg.mxu0
      %v2436 = vadd.f32 %v2330, %v2431
      %v2437 = vld [vmem:[%s1889] sm:$0x7]
      %v2438 = vld [vmem:[%s440] sm:$0xf]
      %v2439 = vld [vmem:[%s440 + $0x4] sm:$0xf]
      %v2440 = vld [vmem:[%s440 + $0x8] sm:$0xf]
      %v2441 = vld [vmem:[%s440 + $0xc] sm:$0xf]
      %v2442 = vld [vmem:[%s440 + $0x10] sm:$0xf]
      %v2443 = vld [vmem:[%s440 + $0x14] sm:$0xf]
      %v2444 = vld [vmem:[%s440 + $0x18] sm:$0xf]
      %v2445 = vld [vmem:[%s440 + $0x1c] sm:$0xf]
      %v2446 = vld [vmem:[%s440 + $0x20] sm:$0xf]
      %v2447 = vld [vmem:[%s440 + $0x24] sm:$0xf]
      %v2448 = vld [vmem:[%s440 + $0x28] sm:$0xf]
      %v2449 = vld [vmem:[%s440 + $0x2c] sm:$0xf]
      %v2450 = vld [vmem:[%s440 + $0x30] sm:$0xf]
      %v2451 = vld [vmem:[%s440 + $0x34] sm:$0xf]
      %v2452 = vld [vmem:[%s440 + $0x38] sm:$0xf]
      %v2453 = vld [vmem:[%s440 + $0x3c] sm:$0xf]
      %v2455 = vunpack.c.l.b16 %v2437
      %v2456 = vpack.c.b16 %v2455, %v2455
      %v2458 = vshrl.u32 %v2456, 16
      %v2460 = vshll.u32 %v2456, 16
      %v2462 = vrot.slane %v2460, 1
      %v2463 = vor.u32 %v2458, %v2462
      %v2481 = vunpack.c.l.b16 %v2438
      %v2482 = vunpack.c.l.b16 %v2439
      %v2483 = vunpack.c.l.b16 %v2440
      %v2484 = vunpack.c.l.b16 %v2441
      %v2485 = vunpack.c.l.b16 %v2442
      %v2486 = vunpack.c.l.b16 %v2443
      %v2487 = vunpack.c.l.b16 %v2444
      %v2488 = vunpack.c.l.b16 %v2445
      %v2489 = vunpack.c.l.b16 %v2446
      %v2490 = vunpack.c.l.b16 %v2447
      %v2491 = vunpack.c.l.b16 %v2448
      %v2492 = vunpack.c.l.b16 %v2449
      %v2493 = vunpack.c.l.b16 %v2450
      %v2494 = vunpack.c.l.b16 %v2451
      %v2495 = vunpack.c.l.b16 %v2452
      %v2496 = vunpack.c.l.b16 %v2453
      %v2497 = vpack.c.b16 %v2482, %v2481
      %v2498 = vpack.c.b16 %v2484, %v2483
      %v2499 = vpack.c.b16 %v2486, %v2485
      %v2500 = vpack.c.b16 %v2488, %v2487
      %v2501 = vpack.c.b16 %v2490, %v2489
      %v2502 = vpack.c.b16 %v2492, %v2491
      %v2503 = vpack.c.b16 %v2494, %v2493
      %v2504 = vpack.c.b16 %v2496, %v2495
      %2513 = vmatprep.subr.bf16.mxu0 0
      %2514 = vmatpush1.bf16.msra.mxu0 %v2497
      %2515 = vmatprep.subr.bf16.mxu0 0
      %2516 = vmatpush1.bf16.msra.mxu0 %v2498
      %2517 = vmatprep.subr.bf16.mxu0 0
      %2518 = vmatpush1.bf16.msra.mxu0 %v2499
      %2519 = vmatprep.subr.bf16.mxu0 0
      %2520 = vmatpush1.bf16.msra.mxu0 %v2500
      %2521 = vmatprep.subr.bf16.mxu0 0
      %2522 = vmatpush1.bf16.msra.mxu0 %v2501
      %2523 = vmatprep.subr.bf16.mxu0 0
      %2524 = vmatpush1.bf16.msra.mxu0 %v2502
      %2525 = vmatprep.subr.bf16.mxu0 0
      %2526 = vmatpush1.bf16.msra.mxu0 %v2503
      %2527 = vmatprep.subr.bf16.mxu0 0
      %2528 = vmatpush1.bf16.msra.mxu0 %v2504
      %2529 = vmatprep.subr.bf16.mxu0 0
      %2530 = vmatpush1.bf16.msra.mxu0 0
      %2531 = vmatprep.subr.bf16.mxu0 0
      %2532 = vmatpush1.bf16.msra.mxu0 0
      %2533 = vmatprep.subr.bf16.mxu0 0
      %2534 = vmatpush1.bf16.msra.mxu0 0
      %2535 = vmatprep.subr.bf16.mxu0 0
      %2536 = vmatpush1.bf16.msra.mxu0 0
      %2537 = vmatprep.subr.bf16.mxu0 0
      %2538 = vmatpush1.bf16.msra.mxu0 0
      %2539 = vmatprep.subr.bf16.mxu0 0
      %2540 = vmatpush1.bf16.msra.mxu0 0
      %2541 = vmatprep.subr.bf16.mxu0 0
      %2542 = vmatpush1.bf16.msra.mxu0 0
      %2543 = vmatprep.subr.bf16.mxu0 0
      %2544 = vmatpush1.bf16.msra.mxu0 0
      %2545 = vmatprep.mubr.bf16.mxu0 0
      %2546 = vmatmul.mubr.bf16.gmra.mrb[0].mxu0 %v2463
      %v2547 = vpop.f32.mrb[0].mxu0
      %v2548 = vadd.f32 0.0, %v2547
      %v2549 = vpop.f32.mrb[0].mxu0
      %v2550 = vpop.f32.mrb[0].mxu0
      %v2551 = vpop.f32.mrb[0].mxu0
      %2552 = vdwg.mxu0
      %v2553 = vadd.f32 %v2436, %v2548
      %s2554 = scalar_lea.vmem %s207, 20
      %v2555 = vld [vmem:[%s2554] sm:$0x3]
      %v2556 = vld [vmem:[%s559] sm:$0xf]
      %v2557 = vld [vmem:[%s559 + $0x4] sm:$0xf]
      %v2558 = vld [vmem:[%s559 + $0x8] sm:$0xf]
      %v2559 = vld [vmem:[%s559 + $0xc] sm:$0xf]
      %v2560 = vld [vmem:[%s559 + $0x10] sm:$0xf]
      %v2561 = vld [vmem:[%s559 + $0x14] sm:$0xf]
      %v2562 = vld [vmem:[%s559 + $0x18] sm:$0xf]
      %v2563 = vld [vmem:[%s559 + $0x1c] sm:$0xf]
      %v2564 = vld [vmem:[%s559 + $0x20] sm:$0xf]
      %v2565 = vld [vmem:[%s559 + $0x24] sm:$0xf]
      %v2566 = vld [vmem:[%s559 + $0x28] sm:$0xf]
      %v2567 = vld [vmem:[%s559 + $0x2c] sm:$0xf]
      %v2568 = vld [vmem:[%s559 + $0x30] sm:$0xf]
      %v2569 = vld [vmem:[%s559 + $0x34] sm:$0xf]
      %v2570 = vld [vmem:[%s559 + $0x38] sm:$0xf]
      %v2571 = vld [vmem:[%s559 + $0x3c] sm:$0xf]
      %v2588 = vunpack.c.l.b16 %v2556
      %v2589 = vunpack.c.l.b16 %v2557
      %v2590 = vunpack.c.l.b16 %v2558
      %v2591 = vunpack.c.l.b16 %v2559
      %v2592 = vunpack.c.l.b16 %v2560
      %v2593 = vunpack.c.l.b16 %v2561
      %v2594 = vunpack.c.l.b16 %v2562
      %v2595 = vunpack.c.l.b16 %v2563
      %v2596 = vunpack.c.l.b16 %v2564
      %v2597 = vunpack.c.l.b16 %v2565
      %v2598 = vunpack.c.l.b16 %v2566
      %v2599 = vunpack.c.l.b16 %v2567
      %v2600 = vunpack.c.l.b16 %v2568
      %v2601 = vunpack.c.l.b16 %v2569
      %v2602 = vunpack.c.l.b16 %v2570
      %v2603 = vunpack.c.l.b16 %v2571
      %v2604 = vpack.c.b16 %v2589, %v2588
      %v2605 = vpack.c.b16 %v2591, %v2590
      %v2606 = vpack.c.b16 %v2593, %v2592
      %v2607 = vpack.c.b16 %v2595, %v2594
      %v2608 = vpack.c.b16 %v2597, %v2596
      %v2609 = vpack.c.b16 %v2599, %v2598
      %v2610 = vpack.c.b16 %v2601, %v2600
      %v2611 = vpack.c.b16 %v2603, %v2602
      %2620 = vmatprep.subr.bf16.mxu0 0
      %2621 = vmatpush1.bf16.msra.mxu0 %v2604
      %2622 = vmatprep.subr.bf16.mxu0 0
      %2623 = vmatpush1.bf16.msra.mxu0 %v2605
      %2624 = vmatprep.subr.bf16.mxu0 0
      %2625 = vmatpush1.bf16.msra.mxu0 %v2606
      %2626 = vmatprep.subr.bf16.mxu0 0
      %2627 = vmatpush1.bf16.msra.mxu0 %v2607
      %2628 = vmatprep.subr.bf16.mxu0 0
      %2629 = vmatpush1.bf16.msra.mxu0 %v2608
      %2630 = vmatprep.subr.bf16.mxu0 0
      %2631 = vmatpush1.bf16.msra.mxu0 %v2609
      %2632 = vmatprep.subr.bf16.mxu0 0
      %2633 = vmatpush1.bf16.msra.mxu0 %v2610
      %2634 = vmatprep.subr.bf16.mxu0 0
      %2635 = vmatpush1.bf16.msra.mxu0 %v2611
      %2636 = vmatprep.subr.bf16.mxu0 0
      %2637 = vmatpush1.bf16.msra.mxu0 0
      %2638 = vmatprep.subr.bf16.mxu0 0
      %2639 = vmatpush1.bf16.msra.mxu0 0
      %2640 = vmatprep.subr.bf16.mxu0 0
      %2641 = vmatpush1.bf16.msra.mxu0 0
      %2642 = vmatprep.subr.bf16.mxu0 0
      %2643 = vmatpush1.bf16.msra.mxu0 0
      %2644 = vmatprep.subr.bf16.mxu0 0
      %2645 = vmatpush1.bf16.msra.mxu0 0
      %2646 = vmatprep.subr.bf16.mxu0 0
      %2647 = vmatpush1.bf16.msra.mxu0 0
      %2648 = vmatprep.subr.bf16.mxu0 0
      %2649 = vmatpush1.bf16.msra.mxu0 0
      %2650 = vmatprep.subr.bf16.mxu0 0
      %2651 = vmatpush1.bf16.msra.mxu0 0
      %2652 = vmatprep.mubr.bf16.mxu0 0
      %2653 = vmatmul.mubr.bf16.gmra.mrb[0].mxu0 %v2555
      %v2654 = vpop.f32.mrb[0].mxu0
      %v2655 = vadd.f32 0.0, %v2654
      %v2656 = vpop.f32.mrb[0].mxu0
      %v2657 = vpop.f32.mrb[0].mxu0
      %v2658 = vpop.f32.mrb[0].mxu0
      %2659 = vdwg.mxu0
      %v2660 = vadd.f32 %v2553, %v2655
      %s2661 = scalar_lea.vmem %s212, 20
      %v2662 = vld [vmem:[%s2661] sm:$0x3]
      %v2663 = vld [vmem:[%s667] sm:$0xf]
      %v2664 = vld [vmem:[%s667 + $0x4] sm:$0xf]
      %v2665 = vld [vmem:[%s667 + $0x8] sm:$0xf]
      %v2666 = vld [vmem:[%s667 + $0xc] sm:$0xf]
      %v2667 = vld [vmem:[%s667 + $0x10] sm:$0xf]
      %v2668 = vld [vmem:[%s667 + $0x14] sm:$0xf]
      %v2669 = vld [vmem:[%s667 + $0x18] sm:$0xf]
      %v2670 = vld [vmem:[%s667 + $0x1c] sm:$0xf]
      %v2671 = vld [vmem:[%s667 + $0x20] sm:$0xf]
      %v2672 = vld [vmem:[%s667 + $0x24] sm:$0xf]
      %v2673 = vld [vmem:[%s667 + $0x28] sm:$0xf]
      %v2674 = vld [vmem:[%s667 + $0x2c] sm:$0xf]
      %v2675 = vld [vmem:[%s667 + $0x30] sm:$0xf]
      %v2676 = vld [vmem:[%s667 + $0x34] sm:$0xf]
      %v2677 = vld [vmem:[%s667 + $0x38] sm:$0xf]
      %v2678 = vld [vmem:[%s667 + $0x3c] sm:$0xf]
      %v2695 = vunpack.c.l.b16 %v2663
      %v2696 = vunpack.c.l.b16 %v2664
      %v2697 = vunpack.c.l.b16 %v2665
      %v2698 = vunpack.c.l.b16 %v2666
      %v2699 = vunpack.c.l.b16 %v2667
      %v2700 = vunpack.c.l.b16 %v2668
      %v2701 = vunpack.c.l.b16 %v2669
      %v2702 = vunpack.c.l.b16 %v2670
      %v2703 = vunpack.c.l.b16 %v2671
      %v2704 = vunpack.c.l.b16 %v2672
      %v2705 = vunpack.c.l.b16 %v2673
      %v2706 = vunpack.c.l.b16 %v2674
      %v2707 = vunpack.c.l.b16 %v2675
      %v2708 = vunpack.c.l.b16 %v2676
      %v2709 = vunpack.c.l.b16 %v2677
      %v2710 = vunpack.c.l.b16 %v2678
      %v2711 = vpack.c.b16 %v2696, %v2695
      %v2712 = vpack.c.b16 %v2698, %v2697
      %v2713 = vpack.c.b16 %v2700, %v2699
      %v2714 = vpack.c.b16 %v2702, %v2701
      %v2715 = vpack.c.b16 %v2704, %v2703
      %v2716 = vpack.c.b16 %v2706, %v2705
      %v2717 = vpack.c.b16 %v2708, %v2707
      %v2718 = vpack.c.b16 %v2710, %v2709
      %2727 = vmatprep.subr.bf16.mxu0 0
      %2728 = vmatpush1.bf16.msra.mxu0 %v2711
      %2729 = vmatprep.subr.bf16.mxu0 0
      %2730 = vmatpush1.bf16.msra.mxu0 %v2712
      %2731 = vmatprep.subr.bf16.mxu0 0
      %2732 = vmatpush1.bf16.msra.mxu0 %v2713
      %2733 = vmatprep.subr.bf16.mxu0 0
      %2734 = vmatpush1.bf16.msra.mxu0 %v2714
      %2735 = vmatprep.subr.bf16.mxu0 0
      %2736 = vmatpush1.bf16.msra.mxu0 %v2715
      %2737 = vmatprep.subr.bf16.mxu0 0
      %2738 = vmatpush1.bf16.msra.mxu0 %v2716
      %2739 = vmatprep.subr.bf16.mxu0 0
      %2740 = vmatpush1.bf16.msra.mxu0 %v2717
      %2741 = vmatprep.subr.bf16.mxu0 0
      %2742 = vmatpush1.bf16.msra.mxu0 %v2718
      %2743 = vmatprep.subr.bf16.mxu0 0
      %2744 = vmatpush1.bf16.msra.mxu0 0
      %2745 = vmatprep.subr.bf16.mxu0 0
      %2746 = vmatpush1.bf16.msra.mxu0 0
      %2747 = vmatprep.subr.bf16.mxu0 0
      %2748 = vmatpush1.bf16.msra.mxu0 0
      %2749 = vmatprep.subr.bf16.mxu0 0
      %2750 = vmatpush1.bf16.msra.mxu0 0
      %2751 = vmatprep.subr.bf16.mxu0 0
      %2752 = vmatpush1.bf16.msra.mxu0 0
      %2753 = vmatprep.subr.bf16.mxu0 0
      %2754 = vmatpush1.bf16.msra.mxu0 0
      %2755 = vmatprep.subr.bf16.mxu0 0
      %2756 = vmatpush1.bf16.msra.mxu0 0
      %2757 = vmatprep.subr.bf16.mxu0 0
      %2758 = vmatpush1.bf16.msra.mxu0 0
      %2759 = vmatprep.mubr.bf16.mxu0 0
      %2760 = vmatmul.mubr.bf16.gmra.mrb[0].mxu0 %v2662
      %v2761 = vpop.f32.mrb[0].mxu0
      %v2762 = vadd.f32 0.0, %v2761
      %v2763 = vpop.f32.mrb[0].mxu0
      %v2764 = vpop.f32.mrb[0].mxu0
      %v2765 = vpop.f32.mrb[0].mxu0
      %2766 = vdwg.mxu0
      %v2767 = vadd.f32 %v2660, %v2762
      %v2768 = vld [vmem:[%s2554] sm:$0x7]
      %v2769 = vld [vmem:[%s774] sm:$0xf]
      %v2770 = vld [vmem:[%s774 + $0x4] sm:$0xf]
      %v2771 = vld [vmem:[%s774 + $0x8] sm:$0xf]
      %v2772 = vld [vmem:[%s774 + $0xc] sm:$0xf]
      %v2773 = vld [vmem:[%s774 + $0x10] sm:$0xf]
      %v2774 = vld [vmem:[%s774 + $0x14] sm:$0xf]
      %v2775 = vld [vmem:[%s774 + $0x18] sm:$0xf]
      %v2776 = vld [vmem:[%s774 + $0x1c] sm:$0xf]
      %v2777 = vld [vmem:[%s774 + $0x20] sm:$0xf]
      %v2778 = vld [vmem:[%s774 + $0x24] sm:$0xf]
      %v2779 = vld [vmem:[%s774 + $0x28] sm:$0xf]
      %v2780 = vld [vmem:[%s774 + $0x2c] sm:$0xf]
      %v2781 = vld [vmem:[%s774 + $0x30] sm:$0xf]
      %v2782 = vld [vmem:[%s774 + $0x34] sm:$0xf]
      %v2783 = vld [vmem:[%s774 + $0x38] sm:$0xf]
      %v2784 = vld [vmem:[%s774 + $0x3c] sm:$0xf]
      %v2786 = vunpack.c.l.b16 %v2768
      %v2787 = vpack.c.b16 %v2786, %v2786
      %v2789 = vshrl.u32 %v2787, 16
      %v2791 = vshll.u32 %v2787, 16
      %v2793 = vrot.slane %v2791, 1
      %v2794 = vor.u32 %v2789, %v2793
      %v2812 = vunpack.c.l.b16 %v2769
      %v2813 = vunpack.c.l.b16 %v2770
      %v2814 = vunpack.c.l.b16 %v2771
      %v2815 = vunpack.c.l.b16 %v2772
      %v2816 = vunpack.c.l.b16 %v2773
      %v2817 = vunpack.c.l.b16 %v2774
      %v2818 = vunpack.c.l.b16 %v2775
      %v2819 = vunpack.c.l.b16 %v2776
      %v2820 = vunpack.c.l.b16 %v2777
      %v2821 = vunpack.c.l.b16 %v2778
      %v2822 = vunpack.c.l.b16 %v2779
      %v2823 = vunpack.c.l.b16 %v2780
      %v2824 = vunpack.c.l.b16 %v2781
      %v2825 = vunpack.c.l.b16 %v2782
      %v2826 = vunpack.c.l.b16 %v2783
      %v2827 = vunpack.c.l.b16 %v2784
      %v2828 = vpack.c.b16 %v2813, %v2812
      %v2829 = vpack.c.b16 %v2815, %v2814
      %v2830 = vpack.c.b16 %v2817, %v2816
      %v2831 = vpack.c.b16 %v2819, %v2818
      %v2832 = vpack.c.b16 %v2821, %v2820
      %v2833 = vpack.c.b16 %v2823, %v2822
      %v2834 = vpack.c.b16 %v2825, %v2824
      %v2835 = vpack.c.b16 %v2827, %v2826
      %2844 = vmatprep.subr.bf16.mxu0 0
      %2845 = vmatpush1.bf16.msra.mxu0 %v2828
      %2846 = vmatprep.subr.bf16.mxu0 0
      %2847 = vmatpush1.bf16.msra.mxu0 %v2829
      %2848 = vmatprep.subr.bf16.mxu0 0
      %2849 = vmatpush1.bf16.msra.mxu0 %v2830
      %2850 = vmatprep.subr.bf16.mxu0 0
      %2851 = vmatpush1.bf16.msra.mxu0 %v2831
      %2852 = vmatprep.subr.bf16.mxu0 0
      %2853 = vmatpush1.bf16.msra.mxu0 %v2832
      %2854 = vmatprep.subr.bf16.mxu0 0
      %2855 = vmatpush1.bf16.msra.mxu0 %v2833
      %2856 = vmatprep.subr.bf16.mxu0 0
      %2857 = vmatpush1.bf16.msra.mxu0 %v2834
      %2858 = vmatprep.subr.bf16.mxu0 0
      %2859 = vmatpush1.bf16.msra.mxu0 %v2835
      %2860 = vmatprep.subr.bf16.mxu0 0
      %2861 = vmatpush1.bf16.msra.mxu0 0
      %2862 = vmatprep.subr.bf16.mxu0 0
      %2863 = vmatpush1.bf16.msra.mxu0 0
      %2864 = vmatprep.subr.bf16.mxu0 0
      %2865 = vmatpush1.bf16.msra.mxu0 0
      %2866 = vmatprep.subr.bf16.mxu0 0
      %2867 = vmatpush1.bf16.msra.mxu0 0
      %2868 = vmatprep.subr.bf16.mxu0 0
      %2869 = vmatpush1.bf16.msra.mxu0 0
      %2870 = vmatprep.subr.bf16.mxu0 0
      %2871 = vmatpush1.bf16.msra.mxu0 0
      %2872 = vmatprep.subr.bf16.mxu0 0
      %2873 = vmatpush1.bf16.msra.mxu0 0
      %2874 = vmatprep.subr.bf16.mxu0 0
      %2875 = vmatpush1.bf16.msra.mxu0 0
      %2876 = vmatprep.mubr.bf16.mxu0 0
      %2877 = vmatmul.mubr.bf16.gmra.mrb[0].mxu0 %v2794
      %v2878 = vpop.f32.mrb[0].mxu0
      %v2879 = vadd.f32 0.0, %v2878
      %v2880 = vpop.f32.mrb[0].mxu0
      %v2881 = vpop.f32.mrb[0].mxu0
      %v2882 = vpop.f32.mrb[0].mxu0
      %2883 = vdwg.mxu0
      %v2884 = vadd.f32 %v2767, %v2879
      %s2885 = scalar_lea.vmem %s207, 24
      %v2886 = vld [vmem:[%s2885] sm:$0x3]
      %v2887 = vld [vmem:[%s893] sm:$0xf]
      %v2888 = vld [vmem:[%s893 + $0x4] sm:$0xf]
      %v2889 = vld [vmem:[%s893 + $0x8] sm:$0xf]
      %v2890 = vld [vmem:[%s893 + $0xc] sm:$0xf]
      %v2891 = vld [vmem:[%s893 + $0x10] sm:$0xf]
      %v2892 = vld [vmem:[%s893 + $0x14] sm:$0xf]
      %v2893 = vld [vmem:[%s893 + $0x18] sm:$0xf]
      %v2894 = vld [vmem:[%s893 + $0x1c] sm:$0xf]
      %v2895 = vld [vmem:[%s893 + $0x20] sm:$0xf]
      %v2896 = vld [vmem:[%s893 + $0x24] sm:$0xf]
      %v2897 = vld [vmem:[%s893 + $0x28] sm:$0xf]
      %v2898 = vld [vmem:[%s893 + $0x2c] sm:$0xf]
      %v2899 = vld [vmem:[%s893 + $0x30] sm:$0xf]
      %v2900 = vld [vmem:[%s893 + $0x34] sm:$0xf]
      %v2901 = vld [vmem:[%s893 + $0x38] sm:$0xf]
      %v2902 = vld [vmem:[%s893 + $0x3c] sm:$0xf]
      %v2919 = vunpack.c.l.b16 %v2887
      %v2920 = vunpack.c.l.b16 %v2888
      %v2921 = vunpack.c.l.b16 %v2889
      %v2922 = vunpack.c.l.b16 %v2890
      %v2923 = vunpack.c.l.b16 %v2891
      %v2924 = vunpack.c.l.b16 %v2892
      %v2925 = vunpack.c.l.b16 %v2893
      %v2926 = vunpack.c.l.b16 %v2894
      %v2927 = vunpack.c.l.b16 %v2895
      %v2928 = vunpack.c.l.b16 %v2896
      %v2929 = vunpack.c.l.b16 %v2897
      %v2930 = vunpack.c.l.b16 %v2898
      %v2931 = vunpack.c.l.b16 %v2899
      %v2932 = vunpack.c.l.b16 %v2900
      %v2933 = vunpack.c.l.b16 %v2901
      %v2934 = vunpack.c.l.b16 %v2902
      %v2935 = vpack.c.b16 %v2920, %v2919
      %v2936 = vpack.c.b16 %v2922, %v2921
      %v2937 = vpack.c.b16 %v2924, %v2923
      %v2938 = vpack.c.b16 %v2926, %v2925
      %v2939 = vpack.c.b16 %v2928, %v2927
      %v2940 = vpack.c.b16 %v2930, %v2929
      %v2941 = vpack.c.b16 %v2932, %v2931
      %v2942 = vpack.c.b16 %v2934, %v2933
      %2951 = vmatprep.subr.bf16.mxu0 0
      %2952 = vmatpush1.bf16.msra.mxu0 %v2935
      %2953 = vmatprep.subr.bf16.mxu0 0
      %2954 = vmatpush1.bf16.msra.mxu0 %v2936
      %2955 = vmatprep.subr.bf16.mxu0 0
      %2956 = vmatpush1.bf16.msra.mxu0 %v2937
      %2957 = vmatprep.subr.bf16.mxu0 0
      %2958 = vmatpush1.bf16.msra.mxu0 %v2938
      %2959 = vmatprep.subr.bf16.mxu0 0
      %2960 = vmatpush1.bf16.msra.mxu0 %v2939
      %2961 = vmatprep.subr.bf16.mxu0 0
      %2962 = vmatpush1.bf16.msra.mxu0 %v2940
      %2963 = vmatprep.subr.bf16.mxu0 0
      %2964 = vmatpush1.bf16.msra.mxu0 %v2941
      %2965 = vmatprep.subr.bf16.mxu0 0
      %2966 = vmatpush1.bf16.msra.mxu0 %v2942
      %2967 = vmatprep.subr.bf16.mxu0 0
      %2968 = vmatpush1.bf16.msra.mxu0 0
      %2969 = vmatprep.subr.bf16.mxu0 0
      %2970 = vmatpush1.bf16.msra.mxu0 0
      %2971 = vmatprep.subr.bf16.mxu0 0
      %2972 = vmatpush1.bf16.msra.mxu0 0
      %2973 = vmatprep.subr.bf16.mxu0 0
      %2974 = vmatpush1.bf16.msra.mxu0 0
      %2975 = vmatprep.subr.bf16.mxu0 0
      %2976 = vmatpush1.bf16.msra.mxu0 0
      %2977 = vmatprep.subr.bf16.mxu0 0
      %2978 = vmatpush1.bf16.msra.mxu0 0
      %2979 = vmatprep.subr.bf16.mxu0 0
      %2980 = vmatpush1.bf16.msra.mxu0 0
      %2981 = vmatprep.subr.bf16.mxu0 0
      %2982 = vmatpush1.bf16.msra.mxu0 0
      %2983 = vmatprep.mubr.bf16.mxu0 0
      %2984 = vmatmul.mubr.bf16.gmra.mrb[0].mxu0 %v2886
      %v2985 = vpop.f32.mrb[0].mxu0
      %v2986 = vadd.f32 0.0, %v2985
      %v2987 = vpop.f32.mrb[0].mxu0
      %v2988 = vpop.f32.mrb[0].mxu0
      %v2989 = vpop.f32.mrb[0].mxu0
      %2990 = vdwg.mxu0
      %v2991 = vadd.f32 %v2884, %v2986
      %s2992 = scalar_lea.vmem %s212, 24
      %v2993 = vld [vmem:[%s2992] sm:$0x3]
      %v2994 = vld [vmem:[%s1001] sm:$0xf]
      %v2995 = vld [vmem:[%s1001 + $0x4] sm:$0xf]
      %v2996 = vld [vmem:[%s1001 + $0x8] sm:$0xf]
      %v2997 = vld [vmem:[%s1001 + $0xc] sm:$0xf]
      %v2998 = vld [vmem:[%s1001 + $0x10] sm:$0xf]
      %v2999 = vld [vmem:[%s1001 + $0x14] sm:$0xf]
      %v3000 = vld [vmem:[%s1001 + $0x18] sm:$0xf]
      %v3001 = vld [vmem:[%s1001 + $0x1c] sm:$0xf]
      %v3002 = vld [vmem:[%s1001 + $0x20] sm:$0xf]
      %v3003 = vld [vmem:[%s1001 + $0x24] sm:$0xf]
      %v3004 = vld [vmem:[%s1001 + $0x28] sm:$0xf]
      %v3005 = vld [vmem:[%s1001 + $0x2c] sm:$0xf]
      %v3006 = vld [vmem:[%s1001 + $0x30] sm:$0xf]
      %v3007 = vld [vmem:[%s1001 + $0x34] sm:$0xf]
      %v3008 = vld [vmem:[%s1001 + $0x38] sm:$0xf]
      %v3009 = vld [vmem:[%s1001 + $0x3c] sm:$0xf]
      %v3026 = vunpack.c.l.b16 %v2994
      %v3027 = vunpack.c.l.b16 %v2995
      %v3028 = vunpack.c.l.b16 %v2996
      %v3029 = vunpack.c.l.b16 %v2997
      %v3030 = vunpack.c.l.b16 %v2998
      %v3031 = vunpack.c.l.b16 %v2999
      %v3032 = vunpack.c.l.b16 %v3000
      %v3033 = vunpack.c.l.b16 %v3001
      %v3034 = vunpack.c.l.b16 %v3002
      %v3035 = vunpack.c.l.b16 %v3003
      %v3036 = vunpack.c.l.b16 %v3004
      %v3037 = vunpack.c.l.b16 %v3005
      %v3038 = vunpack.c.l.b16 %v3006
      %v3039 = vunpack.c.l.b16 %v3007
      %v3040 = vunpack.c.l.b16 %v3008
      %v3041 = vunpack.c.l.b16 %v3009
      %v3042 = vpack.c.b16 %v3027, %v3026
      %v3043 = vpack.c.b16 %v3029, %v3028
      %v3044 = vpack.c.b16 %v3031, %v3030
      %v3045 = vpack.c.b16 %v3033, %v3032
      %v3046 = vpack.c.b16 %v3035, %v3034
      %v3047 = vpack.c.b16 %v3037, %v3036
      %v3048 = vpack.c.b16 %v3039, %v3038
      %v3049 = vpack.c.b16 %v3041, %v3040
      %3058 = vmatprep.subr.bf16.mxu0 0
      %3059 = vmatpush1.bf16.msra.mxu0 %v3042
      %3060 = vmatprep.subr.bf16.mxu0 0
      %3061 = vmatpush1.bf16.msra.mxu0 %v3043
      %3062 = vmatprep.subr.bf16.mxu0 0
      %3063 = vmatpush1.bf16.msra.mxu0 %v3044
      %3064 = vmatprep.subr.bf16.mxu0 0
      %3065 = vmatpush1.bf16.msra.mxu0 %v3045
      %3066 = vmatprep.subr.bf16.mxu0 0
      %3067 = vmatpush1.bf16.msra.mxu0 %v3046
      %3068 = vmatprep.subr.bf16.mxu0 0
      %3069 = vmatpush1.bf16.msra.mxu0 %v3047
      %3070 = vmatprep.subr.bf16.mxu0 0
      %3071 = vmatpush1.bf16.msra.mxu0 %v3048
      %3072 = vmatprep.subr.bf16.mxu0 0
      %3073 = vmatpush1.bf16.msra.mxu0 %v3049
      %3074 = vmatprep.subr.bf16.mxu0 0
      %3075 = vmatpush1.bf16.msra.mxu0 0
      %3076 = vmatprep.subr.bf16.mxu0 0
      %3077 = vmatpush1.bf16.msra.mxu0 0
      %3078 = vmatprep.subr.bf16.mxu0 0
      %3079 = vmatpush1.bf16.msra.mxu0 0
      %3080 = vmatprep.subr.bf16.mxu0 0
      %3081 = vmatpush1.bf16.msra.mxu0 0
      %3082 = vmatprep.subr.bf16.mxu0 0
      %3083 = vmatpush1.bf16.msra.mxu0 0
      %3084 = vmatprep.subr.bf16.mxu0 0
      %3085 = vmatpush1.bf16.msra.mxu0 0
      %3086 = vmatprep.subr.bf16.mxu0 0
      %3087 = vmatpush1.bf16.msra.mxu0 0
      %3088 = vmatprep.subr.bf16.mxu0 0
      %3089 = vmatpush1.bf16.msra.mxu0 0
      %3090 = vmatprep.mubr.bf16.mxu0 0
      %3091 = vmatmul.mubr.bf16.gmra.mrb[0].mxu0 %v2993
      %v3092 = vpop.f32.mrb[0].mxu0
      %v3093 = vadd.f32 0.0, %v3092
      %v3094 = vpop.f32.mrb[0].mxu0
      %v3095 = vpop.f32.mrb[0].mxu0
      %v3096 = vpop.f32.mrb[0].mxu0
      %3097 = vdwg.mxu0
      %v3098 = vadd.f32 %v2991, %v3093
      %v3099 = vld [vmem:[%s2885] sm:$0x7]
      %v3100 = vld [vmem:[%s1108] sm:$0xf]
      %v3101 = vld [vmem:[%s1108 + $0x4] sm:$0xf]
      %v3102 = vld [vmem:[%s1108 + $0x8] sm:$0xf]
      %v3103 = vld [vmem:[%s1108 + $0xc] sm:$0xf]
      %v3104 = vld [vmem:[%s1108 + $0x10] sm:$0xf]
      %v3105 = vld [vmem:[%s1108 + $0x14] sm:$0xf]
      %v3106 = vld [vmem:[%s1108 + $0x18] sm:$0xf]
      %v3107 = vld [vmem:[%s1108 + $0x1c] sm:$0xf]
      %v3108 = vld [vmem:[%s1108 + $0x20] sm:$0xf]
      %v3109 = vld [vmem:[%s1108 + $0x24] sm:$0xf]
      %v3110 = vld [vmem:[%s1108 + $0x28] sm:$0xf]
      %v3111 = vld [vmem:[%s1108 + $0x2c] sm:$0xf]
      %v3112 = vld [vmem:[%s1108 + $0x30] sm:$0xf]
      %v3113 = vld [vmem:[%s1108 + $0x34] sm:$0xf]
      %v3114 = vld [vmem:[%s1108 + $0x38] sm:$0xf]
      %v3115 = vld [vmem:[%s1108 + $0x3c] sm:$0xf]
      %v3117 = vunpack.c.l.b16 %v3099
      %v3118 = vpack.c.b16 %v3117, %v3117
      %v3120 = vshrl.u32 %v3118, 16
      %v3122 = vshll.u32 %v3118, 16
      %v3124 = vrot.slane %v3122, 1
      %v3125 = vor.u32 %v3120, %v3124
      %v3143 = vunpack.c.l.b16 %v3100
      %v3144 = vunpack.c.l.b16 %v3101
      %v3145 = vunpack.c.l.b16 %v3102
      %v3146 = vunpack.c.l.b16 %v3103
      %v3147 = vunpack.c.l.b16 %v3104
      %v3148 = vunpack.c.l.b16 %v3105
      %v3149 = vunpack.c.l.b16 %v3106
      %v3150 = vunpack.c.l.b16 %v3107
      %v3151 = vunpack.c.l.b16 %v3108
      %v3152 = vunpack.c.l.b16 %v3109
      %v3153 = vunpack.c.l.b16 %v3110
      %v3154 = vunpack.c.l.b16 %v3111
      %v3155 = vunpack.c.l.b16 %v3112
      %v3156 = vunpack.c.l.b16 %v3113
      %v3157 = vunpack.c.l.b16 %v3114
      %v3158 = vunpack.c.l.b16 %v3115
      %v3159 = vpack.c.b16 %v3144, %v3143
      %v3160 = vpack.c.b16 %v3146, %v3145
      %v3161 = vpack.c.b16 %v3148, %v3147
      %v3162 = vpack.c.b16 %v3150, %v3149
      %v3163 = vpack.c.b16 %v3152, %v3151
      %v3164 = vpack.c.b16 %v3154, %v3153
      %v3165 = vpack.c.b16 %v3156, %v3155
      %v3166 = vpack.c.b16 %v3158, %v3157
      %3175 = vmatprep.subr.bf16.mxu0 0
      %3176 = vmatpush1.bf16.msra.mxu0 %v3159
      %3177 = vmatprep.subr.bf16.mxu0 0
      %3178 = vmatpush1.bf16.msra.mxu0 %v3160
      %3179 = vmatprep.subr.bf16.mxu0 0
      %3180 = vmatpush1.bf16.msra.mxu0 %v3161
      %3181 = vmatprep.subr.bf16.mxu0 0
      %3182 = vmatpush1.bf16.msra.mxu0 %v3162
      %3183 = vmatprep.subr.bf16.mxu0 0
      %3184 = vmatpush1.bf16.msra.mxu0 %v3163
      %3185 = vmatprep.subr.bf16.mxu0 0
      %3186 = vmatpush1.bf16.msra.mxu0 %v3164
      %3187 = vmatprep.subr.bf16.mxu0 0
      %3188 = vmatpush1.bf16.msra.mxu0 %v3165
      %3189 = vmatprep.subr.bf16.mxu0 0
      %3190 = vmatpush1.bf16.msra.mxu0 %v3166
      %3191 = vmatprep.subr.bf16.mxu0 0
      %3192 = vmatpush1.bf16.msra.mxu0 0
      %3193 = vmatprep.subr.bf16.mxu0 0
      %3194 = vmatpush1.bf16.msra.mxu0 0
      %3195 = vmatprep.subr.bf16.mxu0 0
      %3196 = vmatpush1.bf16.msra.mxu0 0
      %3197 = vmatprep.subr.bf16.mxu0 0
      %3198 = vmatpush1.bf16.msra.mxu0 0
      %3199 = vmatprep.subr.bf16.mxu0 0
      %3200 = vmatpush1.bf16.msra.mxu0 0
      %3201 = vmatprep.subr.bf16.mxu0 0
      %3202 = vmatpush1.bf16.msra.mxu0 0
      %3203 = vmatprep.subr.bf16.mxu0 0
      %3204 = vmatpush1.bf16.msra.mxu0 0
      %3205 = vmatprep.subr.bf16.mxu0 0
      %3206 = vmatpush1.bf16.msra.mxu0 0
      %3207 = vmatprep.mubr.bf16.mxu0 0
      %3208 = vmatmul.mubr.bf16.gmra.mrb[0].mxu0 %v3125
      %v3209 = vpop.f32.mrb[0].mxu0
      %v3210 = vadd.f32 0.0, %v3209
      %v3211 = vpop.f32.mrb[0].mxu0
      %v3212 = vpop.f32.mrb[0].mxu0
      %v3213 = vpop.f32.mrb[0].mxu0
      %3214 = vdwg.mxu0
      %v3215 = vadd.f32 %v3098, %v3210
      %v3216 = vmax.f32 %v3215, 0.0
      %v3217 = vmin.f32 %v3216, 6.0
      %v3218 = vpack.c.bf16 %v3217, %v3217
      %s3219 = scalar_lea.vmem %s217, 4
      %3220 = vst [vmem:[%s3219] sm:$0x3] %v3218
      %v3221 = vld [vmem:[%s2885] sm:$0x3]
      %v3222 = vld [vmem:[%s2] sm:$0xf]
      %v3223 = vld [vmem:[%s2 + $0x4] sm:$0xf]
      %v3224 = vld [vmem:[%s2 + $0x8] sm:$0xf]
      %v3225 = vld [vmem:[%s2 + $0xc] sm:$0xf]
      %v3226 = vld [vmem:[%s2 + $0x10] sm:$0xf]
      %v3227 = vld [vmem:[%s2 + $0x14] sm:$0xf]
      %v3228 = vld [vmem:[%s2 + $0x18] sm:$0xf]
      %v3229 = vld [vmem:[%s2 + $0x1c] sm:$0xf]
      %v3230 = vld [vmem:[%s2 + $0x20] sm:$0xf]
      %v3231 = vld [vmem:[%s2 + $0x24] sm:$0xf]
      %v3232 = vld [vmem:[%s2 + $0x28] sm:$0xf]
      %v3233 = vld [vmem:[%s2 + $0x2c] sm:$0xf]
      %v3234 = vld [vmem:[%s2 + $0x30] sm:$0xf]
      %v3235 = vld [vmem:[%s2 + $0x34] sm:$0xf]
      %v3236 = vld [vmem:[%s2 + $0x38] sm:$0xf]
      %v3237 = vld [vmem:[%s2 + $0x3c] sm:$0xf]
      %v3254 = vunpack.c.l.b16 %v3222
      %v3255 = vunpack.c.l.b16 %v3223
      %v3256 = vunpack.c.l.b16 %v3224
      %v3257 = vunpack.c.l.b16 %v3225
      %v3258 = vunpack.c.l.b16 %v3226
      %v3259 = vunpack.c.l.b16 %v3227
      %v3260 = vunpack.c.l.b16 %v3228
      %v3261 = vunpack.c.l.b16 %v3229
      %v3262 = vunpack.c.l.b16 %v3230
      %v3263 = vunpack.c.l.b16 %v3231
      %v3264 = vunpack.c.l.b16 %v3232
      %v3265 = vunpack.c.l.b16 %v3233
      %v3266 = vunpack.c.l.b16 %v3234
      %v3267 = vunpack.c.l.b16 %v3235
      %v3268 = vunpack.c.l.b16 %v3236
      %v3269 = vunpack.c.l.b16 %v3237
      %v3270 = vpack.c.b16 %v3255, %v3254
      %v3271 = vpack.c.b16 %v3257, %v3256
      %v3272 = vpack.c.b16 %v3259, %v3258
      %v3273 = vpack.c.b16 %v3261, %v3260
      %v3274 = vpack.c.b16 %v3263, %v3262
      %v3275 = vpack.c.b16 %v3265, %v3264
      %v3276 = vpack.c.b16 %v3267, %v3266
      %v3277 = vpack.c.b16 %v3269, %v3268
      %3286 = vmatprep.subr.bf16.mxu0 0
      %3287 = vmatpush1.bf16.msra.mxu0 %v3270
      %3288 = vmatprep.subr.bf16.mxu0 0
      %3289 = vmatpush1.bf16.msra.mxu0 %v3271
      %3290 = vmatprep.subr.bf16.mxu0 0
      %3291 = vmatpush1.bf16.msra.mxu0 %v3272
      %3292 = vmatprep.subr.bf16.mxu0 0
      %3293 = vmatpush1.bf16.msra.mxu0 %v3273
      %3294 = vmatprep.subr.bf16.mxu0 0
      %3295 = vmatpush1.bf16.msra.mxu0 %v3274
      %3296 = vmatprep.subr.bf16.mxu0 0
      %3297 = vmatpush1.bf16.msra.mxu0 %v3275
      %3298 = vmatprep.subr.bf16.mxu0 0
      %3299 = vmatpush1.bf16.msra.mxu0 %v3276
      %3300 = vmatprep.subr.bf16.mxu0 0
      %3301 = vmatpush1.bf16.msra.mxu0 %v3277
      %3302 = vmatprep.subr.bf16.mxu0 0
      %3303 = vmatpush1.bf16.msra.mxu0 0
      %3304 = vmatprep.subr.bf16.mxu0 0
      %3305 = vmatpush1.bf16.msra.mxu0 0
      %3306 = vmatprep.subr.bf16.mxu0 0
      %3307 = vmatpush1.bf16.msra.mxu0 0
      %3308 = vmatprep.subr.bf16.mxu0 0
      %3309 = vmatpush1.bf16.msra.mxu0 0
      %3310 = vmatprep.subr.bf16.mxu0 0
      %3311 = vmatpush1.bf16.msra.mxu0 0
      %3312 = vmatprep.subr.bf16.mxu0 0
      %3313 = vmatpush1.bf16.msra.mxu0 0
      %3314 = vmatprep.subr.bf16.mxu0 0
      %3315 = vmatpush1.bf16.msra.mxu0 0
      %3316 = vmatprep.subr.bf16.mxu0 0
      %3317 = vmatpush1.bf16.msra.mxu0 0
      %3318 = vmatprep.mubr.bf16.mxu0 0
      %3319 = vmatmul.mubr.bf16.gmra.mrb[0].mxu0 %v3221
      %v3320 = vpop.f32.mrb[0].mxu0
      %v3321 = vadd.f32 0.0, %v3320
      %v3322 = vpop.f32.mrb[0].mxu0
      %v3323 = vpop.f32.mrb[0].mxu0
      %v3324 = vpop.f32.mrb[0].mxu0
      %3325 = vdwg.mxu0
      %v3326 = vadd.f32 %v224, %v3321
      %v3327 = vld [vmem:[%s2992] sm:$0x3]
      %v3328 = vld [vmem:[%s333] sm:$0xf]
      %v3329 = vld [vmem:[%s333 + $0x4] sm:$0xf]
      %v3330 = vld [vmem:[%s333 + $0x8] sm:$0xf]
      %v3331 = vld [vmem:[%s333 + $0xc] sm:$0xf]
      %v3332 = vld [vmem:[%s333 + $0x10] sm:$0xf]
      %v3333 = vld [vmem:[%s333 + $0x14] sm:$0xf]
      %v3334 = vld [vmem:[%s333 + $0x18] sm:$0xf]
      %v3335 = vld [vmem:[%s333 + $0x1c] sm:$0xf]
      %v3336 = vld [vmem:[%s333 + $0x20] sm:$0xf]
      %v3337 = vld [vmem:[%s333 + $0x24] sm:$0xf]
      %v3338 = vld [vmem:[%s333 + $0x28] sm:$0xf]
      %v3339 = vld [vmem:[%s333 + $0x2c] sm:$0xf]
      %v3340 = vld [vmem:[%s333 + $0x30] sm:$0xf]
      %v3341 = vld [vmem:[%s333 + $0x34] sm:$0xf]
      %v3342 = vld [vmem:[%s333 + $0x38] sm:$0xf]
      %v3343 = vld [vmem:[%s333 + $0x3c] sm:$0xf]
      %v3360 = vunpack.c.l.b16 %v3328
      %v3361 = vunpack.c.l.b16 %v3329
      %v3362 = vunpack.c.l.b16 %v3330
      %v3363 = vunpack.c.l.b16 %v3331
      %v3364 = vunpack.c.l.b16 %v3332
      %v3365 = vunpack.c.l.b16 %v3333
      %v3366 = vunpack.c.l.b16 %v3334
      %v3367 = vunpack.c.l.b16 %v3335
      %v3368 = vunpack.c.l.b16 %v3336
      %v3369 = vunpack.c.l.b16 %v3337
      %v3370 = vunpack.c.l.b16 %v3338
      %v3371 = vunpack.c.l.b16 %v3339
      %v3372 = vunpack.c.l.b16 %v3340
      %v3373 = vunpack.c.l.b16 %v3341
      %v3374 = vunpack.c.l.b16 %v3342
      %v3375 = vunpack.c.l.b16 %v3343
      %v3376 = vpack.c.b16 %v3361, %v3360
      %v3377 = vpack.c.b16 %v3363, %v3362
      %v3378 = vpack.c.b16 %v3365, %v3364
      %v3379 = vpack.c.b16 %v3367, %v3366
      %v3380 = vpack.c.b16 %v3369, %v3368
      %v3381 = vpack.c.b16 %v3371, %v3370
      %v3382 = vpack.c.b16 %v3373, %v3372
      %v3383 = vpack.c.b16 %v3375, %v3374
      %3392 = vmatprep.subr.bf16.mxu0 0
      %3393 = vmatpush1.bf16.msra.mxu0 %v3376
      %3394 = vmatprep.subr.bf16.mxu0 0
      %3395 = vmatpush1.bf16.msra.mxu0 %v3377
      %3396 = vmatprep.subr.bf16.mxu0 0
      %3397 = vmatpush1.bf16.msra.mxu0 %v3378
      %3398 = vmatprep.subr.bf16.mxu0 0
      %3399 = vmatpush1.bf16.msra.mxu0 %v3379
      %3400 = vmatprep.subr.bf16.mxu0 0
      %3401 = vmatpush1.bf16.msra.mxu0 %v3380
      %3402 = vmatprep.subr.bf16.mxu0 0
      %3403 = vmatpush1.bf16.msra.mxu0 %v3381
      %3404 = vmatprep.subr.bf16.mxu0 0
      %3405 = vmatpush1.bf16.msra.mxu0 %v3382
      %3406 = vmatprep.subr.bf16.mxu0 0
      %3407 = vmatpush1.bf16.msra.mxu0 %v3383
      %3408 = vmatprep.subr.bf16.mxu0 0
      %3409 = vmatpush1.bf16.msra.mxu0 0
      %3410 = vmatprep.subr.bf16.mxu0 0
      %3411 = vmatpush1.bf16.msra.mxu0 0
      %3412 = vmatprep.subr.bf16.mxu0 0
      %3413 = vmatpush1.bf16.msra.mxu0 0
      %3414 = vmatprep.subr.bf16.mxu0 0
      %3415 = vmatpush1.bf16.msra.mxu0 0
      %3416 = vmatprep.subr.bf16.mxu0 0
      %3417 = vmatpush1.bf16.msra.mxu0 0
      %3418 = vmatprep.subr.bf16.mxu0 0
      %3419 = vmatpush1.bf16.msra.mxu0 0
      %3420 = vmatprep.subr.bf16.mxu0 0
      %3421 = vmatpush1.bf16.msra.mxu0 0
      %3422 = vmatprep.subr.bf16.mxu0 0
      %3423 = vmatpush1.bf16.msra.mxu0 0
      %3424 = vmatprep.mubr.bf16.mxu0 0
      %3425 = vmatmul.mubr.bf16.gmra.mrb[0].mxu0 %v3327
      %v3426 = vpop.f32.mrb[0].mxu0
      %v3427 = vadd.f32 0.0, %v3426
      %v3428 = vpop.f32.mrb[0].mxu0
      %v3429 = vpop.f32.mrb[0].mxu0
      %v3430 = vpop.f32.mrb[0].mxu0
      %3431 = vdwg.mxu0
      %v3432 = vadd.f32 %v3326, %v3427
      %v3433 = vld [vmem:[%s2885] sm:$0x7]
      %v3434 = vld [vmem:[%s440] sm:$0xf]
      %v3435 = vld [vmem:[%s440 + $0x4] sm:$0xf]
      %v3436 = vld [vmem:[%s440 + $0x8] sm:$0xf]
      %v3437 = vld [vmem:[%s440 + $0xc] sm:$0xf]
      %v3438 = vld [vmem:[%s440 + $0x10] sm:$0xf]
      %v3439 = vld [vmem:[%s440 + $0x14] sm:$0xf]
      %v3440 = vld [vmem:[%s440 + $0x18] sm:$0xf]
      %v3441 = vld [vmem:[%s440 + $0x1c] sm:$0xf]
      %v3442 = vld [vmem:[%s440 + $0x20] sm:$0xf]
      %v3443 = vld [vmem:[%s440 + $0x24] sm:$0xf]
      %v3444 = vld [vmem:[%s440 + $0x28] sm:$0xf]
      %v3445 = vld [vmem:[%s440 + $0x2c] sm:$0xf]
      %v3446 = vld [vmem:[%s440 + $0x30] sm:$0xf]
      %v3447 = vld [vmem:[%s440 + $0x34] sm:$0xf]
      %v3448 = vld [vmem:[%s440 + $0x38] sm:$0xf]
      %v3449 = vld [vmem:[%s440 + $0x3c] sm:$0xf]
      %v3451 = vunpack.c.l.b16 %v3433
      %v3452 = vpack.c.b16 %v3451, %v3451
      %v3454 = vshrl.u32 %v3452, 16
      %v3456 = vshll.u32 %v3452, 16
      %v3458 = vrot.slane %v3456, 1
      %v3459 = vor.u32 %v3454, %v3458
      %v3477 = vunpack.c.l.b16 %v3434
      %v3478 = vunpack.c.l.b16 %v3435
      %v3479 = vunpack.c.l.b16 %v3436
      %v3480 = vunpack.c.l.b16 %v3437
      %v3481 = vunpack.c.l.b16 %v3438
      %v3482 = vunpack.c.l.b16 %v3439
      %v3483 = vunpack.c.l.b16 %v3440
      %v3484 = vunpack.c.l.b16 %v3441
      %v3485 = vunpack.c.l.b16 %v3442
      %v3486 = vunpack.c.l.b16 %v3443
      %v3487 = vunpack.c.l.b16 %v3444
      %v3488 = vunpack.c.l.b16 %v3445
      %v3489 = vunpack.c.l.b16 %v3446
      %v3490 = vunpack.c.l.b16 %v3447
      %v3491 = vunpack.c.l.b16 %v3448
      %v3492 = vunpack.c.l.b16 %v3449
      %v3493 = vpack.c.b16 %v3478, %v3477
      %v3494 = vpack.c.b16 %v3480, %v3479
      %v3495 = vpack.c.b16 %v3482, %v3481
      %v3496 = vpack.c.b16 %v3484, %v3483
      %v3497 = vpack.c.b16 %v3486, %v3485
      %v3498 = vpack.c.b16 %v3488, %v3487
      %v3499 = vpack.c.b16 %v3490, %v3489
      %v3500 = vpack.c.b16 %v3492, %v3491
      %3509 = vmatprep.subr.bf16.mxu0 0
      %3510 = vmatpush1.bf16.msra.mxu0 %v3493
      %3511 = vmatprep.subr.bf16.mxu0 0
      %3512 = vmatpush1.bf16.msra.mxu0 %v3494
      %3513 = vmatprep.subr.bf16.mxu0 0
      %3514 = vmatpush1.bf16.msra.mxu0 %v3495
      %3515 = vmatprep.subr.bf16.mxu0 0
      %3516 = vmatpush1.bf16.msra.mxu0 %v3496
      %3517 = vmatprep.subr.bf16.mxu0 0
      %3518 = vmatpush1.bf16.msra.mxu0 %v3497
      %3519 = vmatprep.subr.bf16.mxu0 0
      %3520 = vmatpush1.bf16.msra.mxu0 %v3498
      %3521 = vmatprep.subr.bf16.mxu0 0
      %3522 = vmatpush1.bf16.msra.mxu0 %v3499
      %3523 = vmatprep.subr.bf16.mxu0 0
      %3524 = vmatpush1.bf16.msra.mxu0 %v3500
      %3525 = vmatprep.subr.bf16.mxu0 0
      %3526 = vmatpush1.bf16.msra.mxu0 0
      %3527 = vmatprep.subr.bf16.mxu0 0
      %3528 = vmatpush1.bf16.msra.mxu0 0
      %3529 = vmatprep.subr.bf16.mxu0 0
      %3530 = vmatpush1.bf16.msra.mxu0 0
      %3531 = vmatprep.subr.bf16.mxu0 0
      %3532 = vmatpush1.bf16.msra.mxu0 0
      %3533 = vmatprep.subr.bf16.mxu0 0
      %3534 = vmatpush1.bf16.msra.mxu0 0
      %3535 = vmatprep.subr.bf16.mxu0 0
      %3536 = vmatpush1.bf16.msra.mxu0 0
      %3537 = vmatprep.subr.bf16.mxu0 0
      %3538 = vmatpush1.bf16.msra.mxu0 0
      %3539 = vmatprep.subr.bf16.mxu0 0
      %3540 = vmatpush1.bf16.msra.mxu0 0
      %3541 = vmatprep.mubr.bf16.mxu0 0
      %3542 = vmatmul.mubr.bf16.gmra.mrb[0].mxu0 %v3459
      %v3543 = vpop.f32.mrb[0].mxu0
      %v3544 = vadd.f32 0.0, %v3543
      %v3545 = vpop.f32.mrb[0].mxu0
      %v3546 = vpop.f32.mrb[0].mxu0
      %v3547 = vpop.f32.mrb[0].mxu0
      %3548 = vdwg.mxu0
      %v3549 = vadd.f32 %v3432, %v3544
      %s3550 = scalar_lea.vmem %s207, 28
      %v3551 = vld [vmem:[%s3550] sm:$0x3]
      %v3552 = vld [vmem:[%s559] sm:$0xf]
      %v3553 = vld [vmem:[%s559 + $0x4] sm:$0xf]
      %v3554 = vld [vmem:[%s559 + $0x8] sm:$0xf]
      %v3555 = vld [vmem:[%s559 + $0xc] sm:$0xf]
      %v3556 = vld [vmem:[%s559 + $0x10] sm:$0xf]
      %v3557 = vld [vmem:[%s559 + $0x14] sm:$0xf]
      %v3558 = vld [vmem:[%s559 + $0x18] sm:$0xf]
      %v3559 = vld [vmem:[%s559 + $0x1c] sm:$0xf]
      %v3560 = vld [vmem:[%s559 + $0x20] sm:$0xf]
      %v3561 = vld [vmem:[%s559 + $0x24] sm:$0xf]
      %v3562 = vld [vmem:[%s559 + $0x28] sm:$0xf]
      %v3563 = vld [vmem:[%s559 + $0x2c] sm:$0xf]
      %v3564 = vld [vmem:[%s559 + $0x30] sm:$0xf]
      %v3565 = vld [vmem:[%s559 + $0x34] sm:$0xf]
      %v3566 = vld [vmem:[%s559 + $0x38] sm:$0xf]
      %v3567 = vld [vmem:[%s559 + $0x3c] sm:$0xf]
      %v3584 = vunpack.c.l.b16 %v3552
      %v3585 = vunpack.c.l.b16 %v3553
      %v3586 = vunpack.c.l.b16 %v3554
      %v3587 = vunpack.c.l.b16 %v3555
      %v3588 = vunpack.c.l.b16 %v3556
      %v3589 = vunpack.c.l.b16 %v3557
      %v3590 = vunpack.c.l.b16 %v3558
      %v3591 = vunpack.c.l.b16 %v3559
      %v3592 = vunpack.c.l.b16 %v3560
      %v3593 = vunpack.c.l.b16 %v3561
      %v3594 = vunpack.c.l.b16 %v3562
      %v3595 = vunpack.c.l.b16 %v3563
      %v3596 = vunpack.c.l.b16 %v3564
      %v3597 = vunpack.c.l.b16 %v3565
      %v3598 = vunpack.c.l.b16 %v3566
      %v3599 = vunpack.c.l.b16 %v3567
      %v3600 = vpack.c.b16 %v3585, %v3584
      %v3601 = vpack.c.b16 %v3587, %v3586
      %v3602 = vpack.c.b16 %v3589, %v3588
      %v3603 = vpack.c.b16 %v3591, %v3590
      %v3604 = vpack.c.b16 %v3593, %v3592
      %v3605 = vpack.c.b16 %v3595, %v3594
      %v3606 = vpack.c.b16 %v3597, %v3596
      %v3607 = vpack.c.b16 %v3599, %v3598
      %3616 = vmatprep.subr.bf16.mxu0 0
      %3617 = vmatpush1.bf16.msra.mxu0 %v3600
      %3618 = vmatprep.subr.bf16.mxu0 0
      %3619 = vmatpush1.bf16.msra.mxu0 %v3601
      %3620 = vmatprep.subr.bf16.mxu0 0
      %3621 = vmatpush1.bf16.msra.mxu0 %v3602
      %3622 = vmatprep.subr.bf16.mxu0 0
      %3623 = vmatpush1.bf16.msra.mxu0 %v3603
      %3624 = vmatprep.subr.bf16.mxu0 0
      %3625 = vmatpush1.bf16.msra.mxu0 %v3604
      %3626 = vmatprep.subr.bf16.mxu0 0
      %3627 = vmatpush1.bf16.msra.mxu0 %v3605
      %3628 = vmatprep.subr.bf16.mxu0 0
      %3629 = vmatpush1.bf16.msra.mxu0 %v3606
      %3630 = vmatprep.subr.bf16.mxu0 0
      %3631 = vmatpush1.bf16.msra.mxu0 %v3607
      %3632 = vmatprep.subr.bf16.mxu0 0
      %3633 = vmatpush1.bf16.msra.mxu0 0
      %3634 = vmatprep.subr.bf16.mxu0 0
      %3635 = vmatpush1.bf16.msra.mxu0 0
      %3636 = vmatprep.subr.bf16.mxu0 0
      %3637 = vmatpush1.bf16.msra.mxu0 0
      %3638 = vmatprep.subr.bf16.mxu0 0
      %3639 = vmatpush1.bf16.msra.mxu0 0
      %3640 = vmatprep.subr.bf16.mxu0 0
      %3641 = vmatpush1.bf16.msra.mxu0 0
      %3642 = vmatprep.subr.bf16.mxu0 0
      %3643 = vmatpush1.bf16.msra.mxu0 0
      %3644 = vmatprep.subr.bf16.mxu0 0
      %3645 = vmatpush1.bf16.msra.mxu0 0
      %3646 = vmatprep.subr.bf16.mxu0 0
      %3647 = vmatpush1.bf16.msra.mxu0 0
      %3648 = vmatprep.mubr.bf16.mxu0 0
      %3649 = vmatmul.mubr.bf16.gmra.mrb[0].mxu0 %v3551
      %v3650 = vpop.f32.mrb[0].mxu0
      %v3651 = vadd.f32 0.0, %v3650
      %v3652 = vpop.f32.mrb[0].mxu0
      %v3653 = vpop.f32.mrb[0].mxu0
      %v3654 = vpop.f32.mrb[0].mxu0
      %3655 = vdwg.mxu0
      %v3656 = vadd.f32 %v3549, %v3651
      %s3657 = scalar_lea.vmem %s212, 28
      %v3658 = vld [vmem:[%s3657] sm:$0x3]
      %v3659 = vld [vmem:[%s667] sm:$0xf]
      %v3660 = vld [vmem:[%s667 + $0x4] sm:$0xf]
      %v3661 = vld [vmem:[%s667 + $0x8] sm:$0xf]
      %v3662 = vld [vmem:[%s667 + $0xc] sm:$0xf]
      %v3663 = vld [vmem:[%s667 + $0x10] sm:$0xf]
      %v3664 = vld [vmem:[%s667 + $0x14] sm:$0xf]
      %v3665 = vld [vmem:[%s667 + $0x18] sm:$0xf]
      %v3666 = vld [vmem:[%s667 + $0x1c] sm:$0xf]
      %v3667 = vld [vmem:[%s667 + $0x20] sm:$0xf]
      %v3668 = vld [vmem:[%s667 + $0x24] sm:$0xf]
      %v3669 = vld [vmem:[%s667 + $0x28] sm:$0xf]
      %v3670 = vld [vmem:[%s667 + $0x2c] sm:$0xf]
      %v3671 = vld [vmem:[%s667 + $0x30] sm:$0xf]
      %v3672 = vld [vmem:[%s667 + $0x34] sm:$0xf]
      %v3673 = vld [vmem:[%s667 + $0x38] sm:$0xf]
      %v3674 = vld [vmem:[%s667 + $0x3c] sm:$0xf]
      %v3691 = vunpack.c.l.b16 %v3659
      %v3692 = vunpack.c.l.b16 %v3660
      %v3693 = vunpack.c.l.b16 %v3661
      %v3694 = vunpack.c.l.b16 %v3662
      %v3695 = vunpack.c.l.b16 %v3663
      %v3696 = vunpack.c.l.b16 %v3664
      %v3697 = vunpack.c.l.b16 %v3665
      %v3698 = vunpack.c.l.b16 %v3666
      %v3699 = vunpack.c.l.b16 %v3667
      %v3700 = vunpack.c.l.b16 %v3668
      %v3701 = vunpack.c.l.b16 %v3669
      %v3702 = vunpack.c.l.b16 %v3670
      %v3703 = vunpack.c.l.b16 %v3671
      %v3704 = vunpack.c.l.b16 %v3672
      %v3705 = vunpack.c.l.b16 %v3673
      %v3706 = vunpack.c.l.b16 %v3674
      %v3707 = vpack.c.b16 %v3692, %v3691
      %v3708 = vpack.c.b16 %v3694, %v3693
      %v3709 = vpack.c.b16 %v3696, %v3695
      %v3710 = vpack.c.b16 %v3698, %v3697
      %v3711 = vpack.c.b16 %v3700, %v3699
      %v3712 = vpack.c.b16 %v3702, %v3701
      %v3713 = vpack.c.b16 %v3704, %v3703
      %v3714 = vpack.c.b16 %v3706, %v3705
      %3723 = vmatprep.subr.bf16.mxu0 0
      %3724 = vmatpush1.bf16.msra.mxu0 %v3707
      %3725 = vmatprep.subr.bf16.mxu0 0
      %3726 = vmatpush1.bf16.msra.mxu0 %v3708
      %3727 = vmatprep.subr.bf16.mxu0 0
      %3728 = vmatpush1.bf16.msra.mxu0 %v3709
      %3729 = vmatprep.subr.bf16.mxu0 0
      %3730 = vmatpush1.bf16.msra.mxu0 %v3710
      %3731 = vmatprep.subr.bf16.mxu0 0
      %3732 = vmatpush1.bf16.msra.mxu0 %v3711
      %3733 = vmatprep.subr.bf16.mxu0 0
      %3734 = vmatpush1.bf16.msra.mxu0 %v3712
      %3735 = vmatprep.subr.bf16.mxu0 0
      %3736 = vmatpush1.bf16.msra.mxu0 %v3713
      %3737 = vmatprep.subr.bf16.mxu0 0
      %3738 = vmatpush1.bf16.msra.mxu0 %v3714
      %3739 = vmatprep.subr.bf16.mxu0 0
      %3740 = vmatpush1.bf16.msra.mxu0 0
      %3741 = vmatprep.subr.bf16.mxu0 0
      %3742 = vmatpush1.bf16.msra.mxu0 0
      %3743 = vmatprep.subr.bf16.mxu0 0
      %3744 = vmatpush1.bf16.msra.mxu0 0
      %3745 = vmatprep.subr.bf16.mxu0 0
      %3746 = vmatpush1.bf16.msra.mxu0 0
      %3747 = vmatprep.subr.bf16.mxu0 0
      %3748 = vmatpush1.bf16.msra.mxu0 0
      %3749 = vmatprep.subr.bf16.mxu0 0
      %3750 = vmatpush1.bf16.msra.mxu0 0
      %3751 = vmatprep.subr.bf16.mxu0 0
      %3752 = vmatpush1.bf16.msra.mxu0 0
      %3753 = vmatprep.subr.bf16.mxu0 0
      %3754 = vmatpush1.bf16.msra.mxu0 0
      %3755 = vmatprep.mubr.bf16.mxu0 0
      %3756 = vmatmul.mubr.bf16.gmra.mrb[0].mxu0 %v3658
      %v3757 = vpop.f32.mrb[0].mxu0
      %v3758 = vadd.f32 0.0, %v3757
      %v3759 = vpop.f32.mrb[0].mxu0
      %v3760 = vpop.f32.mrb[0].mxu0
      %v3761 = vpop.f32.mrb[0].mxu0
      %3762 = vdwg.mxu0
      %v3763 = vadd.f32 %v3656, %v3758
      %v3764 = vld [vmem:[%s3550] sm:$0x7]
      %v3765 = vld [vmem:[%s774] sm:$0xf]
      %v3766 = vld [vmem:[%s774 + $0x4] sm:$0xf]
      %v3767 = vld [vmem:[%s774 + $0x8] sm:$0xf]
      %v3768 = vld [vmem:[%s774 + $0xc] sm:$0xf]
      %v3769 = vld [vmem:[%s774 + $0x10] sm:$0xf]
      %v3770 = vld [vmem:[%s774 + $0x14] sm:$0xf]
      %v3771 = vld [vmem:[%s774 + $0x18] sm:$0xf]
      %v3772 = vld [vmem:[%s774 + $0x1c] sm:$0xf]
      %v3773 = vld [vmem:[%s774 + $0x20] sm:$0xf]
      %v3774 = vld [vmem:[%s774 + $0x24] sm:$0xf]
      %v3775 = vld [vmem:[%s774 + $0x28] sm:$0xf]
      %v3776 = vld [vmem:[%s774 + $0x2c] sm:$0xf]
      %v3777 = vld [vmem:[%s774 + $0x30] sm:$0xf]
      %v3778 = vld [vmem:[%s774 + $0x34] sm:$0xf]
      %v3779 = vld [vmem:[%s774 + $0x38] sm:$0xf]
      %v3780 = vld [vmem:[%s774 + $0x3c] sm:$0xf]
      %v3782 = vunpack.c.l.b16 %v3764
      %v3783 = vpack.c.b16 %v3782, %v3782
      %v3785 = vshrl.u32 %v3783, 16
      %v3787 = vshll.u32 %v3783, 16
      %v3789 = vrot.slane %v3787, 1
      %v3790 = vor.u32 %v3785, %v3789
      %v3808 = vunpack.c.l.b16 %v3765
      %v3809 = vunpack.c.l.b16 %v3766
      %v3810 = vunpack.c.l.b16 %v3767
      %v3811 = vunpack.c.l.b16 %v3768
      %v3812 = vunpack.c.l.b16 %v3769
      %v3813 = vunpack.c.l.b16 %v3770
      %v3814 = vunpack.c.l.b16 %v3771
      %v3815 = vunpack.c.l.b16 %v3772
      %v3816 = vunpack.c.l.b16 %v3773
      %v3817 = vunpack.c.l.b16 %v3774
      %v3818 = vunpack.c.l.b16 %v3775
      %v3819 = vunpack.c.l.b16 %v3776
      %v3820 = vunpack.c.l.b16 %v3777
      %v3821 = vunpack.c.l.b16 %v3778
      %v3822 = vunpack.c.l.b16 %v3779
      %v3823 = vunpack.c.l.b16 %v3780
      %v3824 = vpack.c.b16 %v3809, %v3808
      %v3825 = vpack.c.b16 %v3811, %v3810
      %v3826 = vpack.c.b16 %v3813, %v3812
      %v3827 = vpack.c.b16 %v3815, %v3814
      %v3828 = vpack.c.b16 %v3817, %v3816
      %v3829 = vpack.c.b16 %v3819, %v3818
      %v3830 = vpack.c.b16 %v3821, %v3820
      %v3831 = vpack.c.b16 %v3823, %v3822
      %3840 = vmatprep.subr.bf16.mxu0 0
      %3841 = vmatpush1.bf16.msra.mxu0 %v3824
      %3842 = vmatprep.subr.bf16.mxu0 0
      %3843 = vmatpush1.bf16.msra.mxu0 %v3825
      %3844 = vmatprep.subr.bf16.mxu0 0
      %3845 = vmatpush1.bf16.msra.mxu0 %v3826
      %3846 = vmatprep.subr.bf16.mxu0 0
      %3847 = vmatpush1.bf16.msra.mxu0 %v3827
      %3848 = vmatprep.subr.bf16.mxu0 0
      %3849 = vmatpush1.bf16.msra.mxu0 %v3828
      %3850 = vmatprep.subr.bf16.mxu0 0
      %3851 = vmatpush1.bf16.msra.mxu0 %v3829
      %3852 = vmatprep.subr.bf16.mxu0 0
      %3853 = vmatpush1.bf16.msra.mxu0 %v3830
      %3854 = vmatprep.subr.bf16.mxu0 0
      %3855 = vmatpush1.bf16.msra.mxu0 %v3831
      %3856 = vmatprep.subr.bf16.mxu0 0
      %3857 = vmatpush1.bf16.msra.mxu0 0
      %3858 = vmatprep.subr.bf16.mxu0 0
      %3859 = vmatpush1.bf16.msra.mxu0 0
      %3860 = vmatprep.subr.bf16.mxu0 0
      %3861 = vmatpush1.bf16.msra.mxu0 0
      %3862 = vmatprep.subr.bf16.mxu0 0
      %3863 = vmatpush1.bf16.msra.mxu0 0
      %3864 = vmatprep.subr.bf16.mxu0 0
      %3865 = vmatpush1.bf16.msra.mxu0 0
      %3866 = vmatprep.subr.bf16.mxu0 0
      %3867 = vmatpush1.bf16.msra.mxu0 0
      %3868 = vmatprep.subr.bf16.mxu0 0
      %3869 = vmatpush1.bf16.msra.mxu0 0
      %3870 = vmatprep.subr.bf16.mxu0 0
      %3871 = vmatpush1.bf16.msra.mxu0 0
      %3872 = vmatprep.mubr.bf16.mxu0 0
      %3873 = vmatmul.mubr.bf16.gmra.mrb[0].mxu0 %v3790
      %v3874 = vpop.f32.mrb[0].mxu0
      %v3875 = vadd.f32 0.0, %v3874
      %v3876 = vpop.f32.mrb[0].mxu0
      %v3877 = vpop.f32.mrb[0].mxu0
      %v3878 = vpop.f32.mrb[0].mxu0
      %3879 = vdwg.mxu0
      %v3880 = vadd.f32 %v3763, %v3875
      %s3881 = scalar_lea.vmem %s207, 32
      %v3882 = vld [vmem:[%s3881] sm:$0x3]
      %v3883 = vld [vmem:[%s893] sm:$0xf]
      %v3884 = vld [vmem:[%s893 + $0x4] sm:$0xf]
      %v3885 = vld [vmem:[%s893 + $0x8] sm:$0xf]
      %v3886 = vld [vmem:[%s893 + $0xc] sm:$0xf]
      %v3887 = vld [vmem:[%s893 + $0x10] sm:$0xf]
      %v3888 = vld [vmem:[%s893 + $0x14] sm:$0xf]
      %v3889 = vld [vmem:[%s893 + $0x18] sm:$0xf]
      %v3890 = vld [vmem:[%s893 + $0x1c] sm:$0xf]
      %v3891 = vld [vmem:[%s893 + $0x20] sm:$0xf]
      %v3892 = vld [vmem:[%s893 + $0x24] sm:$0xf]
      %v3893 = vld [vmem:[%s893 + $0x28] sm:$0xf]
      %v3894 = vld [vmem:[%s893 + $0x2c] sm:$0xf]
      %v3895 = vld [vmem:[%s893 + $0x30] sm:$0xf]
      %v3896 = vld [vmem:[%s893 + $0x34] sm:$0xf]
      %v3897 = vld [vmem:[%s893 + $0x38] sm:$0xf]
      %v3898 = vld [vmem:[%s893 + $0x3c] sm:$0xf]
      %v3915 = vunpack.c.l.b16 %v3883
      %v3916 = vunpack.c.l.b16 %v3884
      %v3917 = vunpack.c.l.b16 %v3885
      %v3918 = vunpack.c.l.b16 %v3886
      %v3919 = vunpack.c.l.b16 %v3887
      %v3920 = vunpack.c.l.b16 %v3888
      %v3921 = vunpack.c.l.b16 %v3889
      %v3922 = vunpack.c.l.b16 %v3890
      %v3923 = vunpack.c.l.b16 %v3891
      %v3924 = vunpack.c.l.b16 %v3892
      %v3925 = vunpack.c.l.b16 %v3893
      %v3926 = vunpack.c.l.b16 %v3894
      %v3927 = vunpack.c.l.b16 %v3895
      %v3928 = vunpack.c.l.b16 %v3896
      %v3929 = vunpack.c.l.b16 %v3897
      %v3930 = vunpack.c.l.b16 %v3898
      %v3931 = vpack.c.b16 %v3916, %v3915
      %v3932 = vpack.c.b16 %v3918, %v3917
      %v3933 = vpack.c.b16 %v3920, %v3919
      %v3934 = vpack.c.b16 %v3922, %v3921
      %v3935 = vpack.c.b16 %v3924, %v3923
      %v3936 = vpack.c.b16 %v3926, %v3925
      %v3937 = vpack.c.b16 %v3928, %v3927
      %v3938 = vpack.c.b16 %v3930, %v3929
      %3947 = vmatprep.subr.bf16.mxu0 0
      %3948 = vmatpush1.bf16.msra.mxu0 %v3931
      %3949 = vmatprep.subr.bf16.mxu0 0
      %3950 = vmatpush1.bf16.msra.mxu0 %v3932
      %3951 = vmatprep.subr.bf16.mxu0 0
      %3952 = vmatpush1.bf16.msra.mxu0 %v3933
      %3953 = vmatprep.subr.bf16.mxu0 0
      %3954 = vmatpush1.bf16.msra.mxu0 %v3934
      %3955 = vmatprep.subr.bf16.mxu0 0
      %3956 = vmatpush1.bf16.msra.mxu0 %v3935
      %3957 = vmatprep.subr.bf16.mxu0 0
      %3958 = vmatpush1.bf16.msra.mxu0 %v3936
      %3959 = vmatprep.subr.bf16.mxu0 0
      %3960 = vmatpush1.bf16.msra.mxu0 %v3937
      %3961 = vmatprep.subr.bf16.mxu0 0
      %3962 = vmatpush1.bf16.msra.mxu0 %v3938
      %3963 = vmatprep.subr.bf16.mxu0 0
      %3964 = vmatpush1.bf16.msra.mxu0 0
      %3965 = vmatprep.subr.bf16.mxu0 0
      %3966 = vmatpush1.bf16.msra.mxu0 0
      %3967 = vmatprep.subr.bf16.mxu0 0
      %3968 = vmatpush1.bf16.msra.mxu0 0
      %3969 = vmatprep.subr.bf16.mxu0 0
      %3970 = vmatpush1.bf16.msra.mxu0 0
      %3971 = vmatprep.subr.bf16.mxu0 0
      %3972 = vmatpush1.bf16.msra.mxu0 0
      %3973 = vmatprep.subr.bf16.mxu0 0
      %3974 = vmatpush1.bf16.msra.mxu0 0
      %3975 = vmatprep.subr.bf16.mxu0 0
      %3976 = vmatpush1.bf16.msra.mxu0 0
      %3977 = vmatprep.subr.bf16.mxu0 0
      %3978 = vmatpush1.bf16.msra.mxu0 0
      %3979 = vmatprep.mubr.bf16.mxu0 0
      %3980 = vmatmul.mubr.bf16.gmra.mrb[0].mxu0 %v3882
      %v3981 = vpop.f32.mrb[0].mxu0
      %v3982 = vadd.f32 0.0, %v3981
      %v3983 = vpop.f32.mrb[0].mxu0
      %v3984 = vpop.f32.mrb[0].mxu0
      %v3985 = vpop.f32.mrb[0].mxu0
      %3986 = vdwg.mxu0
      %v3987 = vadd.f32 %v3880, %v3982
      %s3988 = scalar_lea.vmem %s212, 32
      %v3989 = vld [vmem:[%s3988] sm:$0x3]
      %v3990 = vld [vmem:[%s1001] sm:$0xf]
      %v3991 = vld [vmem:[%s1001 + $0x4] sm:$0xf]
      %v3992 = vld [vmem:[%s1001 + $0x8] sm:$0xf]
      %v3993 = vld [vmem:[%s1001 + $0xc] sm:$0xf]
      %v3994 = vld [vmem:[%s1001 + $0x10] sm:$0xf]
      %v3995 = vld [vmem:[%s1001 + $0x14] sm:$0xf]
      %v3996 = vld [vmem:[%s1001 + $0x18] sm:$0xf]
      %v3997 = vld [vmem:[%s1001 + $0x1c] sm:$0xf]
      %v3998 = vld [vmem:[%s1001 + $0x20] sm:$0xf]
      %v3999 = vld [vmem:[%s1001 + $0x24] sm:$0xf]
      %v4000 = vld [vmem:[%s1001 + $0x28] sm:$0xf]
      %v4001 = vld [vmem:[%s1001 + $0x2c] sm:$0xf]
      %v4002 = vld [vmem:[%s1001 + $0x30] sm:$0xf]
      %v4003 = vld [vmem:[%s1001 + $0x34] sm:$0xf]
      %v4004 = vld [vmem:[%s1001 + $0x38] sm:$0xf]
      %v4005 = vld [vmem:[%s1001 + $0x3c] sm:$0xf]
      %v4022 = vunpack.c.l.b16 %v3990
      %v4023 = vunpack.c.l.b16 %v3991
      %v4024 = vunpack.c.l.b16 %v3992
      %v4025 = vunpack.c.l.b16 %v3993
      %v4026 = vunpack.c.l.b16 %v3994
      %v4027 = vunpack.c.l.b16 %v3995
      %v4028 = vunpack.c.l.b16 %v3996
      %v4029 = vunpack.c.l.b16 %v3997
      %v4030 = vunpack.c.l.b16 %v3998
      %v4031 = vunpack.c.l.b16 %v3999
      %v4032 = vunpack.c.l.b16 %v4000
      %v4033 = vunpack.c.l.b16 %v4001
      %v4034 = vunpack.c.l.b16 %v4002
      %v4035 = vunpack.c.l.b16 %v4003
      %v4036 = vunpack.c.l.b16 %v4004
      %v4037 = vunpack.c.l.b16 %v4005
      %v4038 = vpack.c.b16 %v4023, %v4022
      %v4039 = vpack.c.b16 %v4025, %v4024
      %v4040 = vpack.c.b16 %v4027, %v4026
      %v4041 = vpack.c.b16 %v4029, %v4028
      %v4042 = vpack.c.b16 %v4031, %v4030
      %v4043 = vpack.c.b16 %v4033, %v4032
      %v4044 = vpack.c.b16 %v4035, %v4034
      %v4045 = vpack.c.b16 %v4037, %v4036
      %4054 = vmatprep.subr.bf16.mxu0 0
      %4055 = vmatpush1.bf16.msra.mxu0 %v4038
      %4056 = vmatprep.subr.bf16.mxu0 0
      %4057 = vmatpush1.bf16.msra.mxu0 %v4039
      %4058 = vmatprep.subr.bf16.mxu0 0
      %4059 = vmatpush1.bf16.msra.mxu0 %v4040
      %4060 = vmatprep.subr.bf16.mxu0 0
      %4061 = vmatpush1.bf16.msra.mxu0 %v4041
      %4062 = vmatprep.subr.bf16.mxu0 0
      %4063 = vmatpush1.bf16.msra.mxu0 %v4042
      %4064 = vmatprep.subr.bf16.mxu0 0
      %4065 = vmatpush1.bf16.msra.mxu0 %v4043
      %4066 = vmatprep.subr.bf16.mxu0 0
      %4067 = vmatpush1.bf16.msra.mxu0 %v4044
      %4068 = vmatprep.subr.bf16.mxu0 0
      %4069 = vmatpush1.bf16.msra.mxu0 %v4045
      %4070 = vmatprep.subr.bf16.mxu0 0
      %4071 = vmatpush1.bf16.msra.mxu0 0
      %4072 = vmatprep.subr.bf16.mxu0 0
      %4073 = vmatpush1.bf16.msra.mxu0 0
      %4074 = vmatprep.subr.bf16.mxu0 0
      %4075 = vmatpush1.bf16.msra.mxu0 0
      %4076 = vmatprep.subr.bf16.mxu0 0
      %4077 = vmatpush1.bf16.msra.mxu0 0
      %4078 = vmatprep.subr.bf16.mxu0 0
      %4079 = vmatpush1.bf16.msra.mxu0 0
      %4080 = vmatprep.subr.bf16.mxu0 0
      %4081 = vmatpush1.bf16.msra.mxu0 0
      %4082 = vmatprep.subr.bf16.mxu0 0
      %4083 = vmatpush1.bf16.msra.mxu0 0
      %4084 = vmatprep.subr.bf16.mxu0 0
      %4085 = vmatpush1.bf16.msra.mxu0 0
      %4086 = vmatprep.mubr.bf16.mxu0 0
      %4087 = vmatmul.mubr.bf16.gmra.mrb[0].mxu0 %v3989
      %v4088 = vpop.f32.mrb[0].mxu0
      %v4089 = vadd.f32 0.0, %v4088
      %v4090 = vpop.f32.mrb[0].mxu0
      %v4091 = vpop.f32.mrb[0].mxu0
      %v4092 = vpop.f32.mrb[0].mxu0
      %4093 = vdwg.mxu0
      %v4094 = vadd.f32 %v3987, %v4089
      %v4095 = vld [vmem:[%s3881] sm:$0x7]
      %v4096 = vld [vmem:[%s1108] sm:$0xf]
      %v4097 = vld [vmem:[%s1108 + $0x4] sm:$0xf]
      %v4098 = vld [vmem:[%s1108 + $0x8] sm:$0xf]
      %v4099 = vld [vmem:[%s1108 + $0xc] sm:$0xf]
      %v4100 = vld [vmem:[%s1108 + $0x10] sm:$0xf]
      %v4101 = vld [vmem:[%s1108 + $0x14] sm:$0xf]
      %v4102 = vld [vmem:[%s1108 + $0x18] sm:$0xf]
      %v4103 = vld [vmem:[%s1108 + $0x1c] sm:$0xf]
      %v4104 = vld [vmem:[%s1108 + $0x20] sm:$0xf]
      %v4105 = vld [vmem:[%s1108 + $0x24] sm:$0xf]
      %v4106 = vld [vmem:[%s1108 + $0x28] sm:$0xf]
      %v4107 = vld [vmem:[%s1108 + $0x2c] sm:$0xf]
      %v4108 = vld [vmem:[%s1108 + $0x30] sm:$0xf]
      %v4109 = vld [vmem:[%s1108 + $0x34] sm:$0xf]
      %v4110 = vld [vmem:[%s1108 + $0x38] sm:$0xf]
      %v4111 = vld [vmem:[%s1108 + $0x3c] sm:$0xf]
      %v4113 = vunpack.c.l.b16 %v4095
      %v4114 = vpack.c.b16 %v4113, %v4113
      %v4116 = vshrl.u32 %v4114, 16
      %v4118 = vshll.u32 %v4114, 16
      %v4120 = vrot.slane %v4118, 1
      %v4121 = vor.u32 %v4116, %v4120
      %v4139 = vunpack.c.l.b16 %v4096
      %v4140 = vunpack.c.l.b16 %v4097
      %v4141 = vunpack.c.l.b16 %v4098
      %v4142 = vunpack.c.l.b16 %v4099
      %v4143 = vunpack.c.l.b16 %v4100
      %v4144 = vunpack.c.l.b16 %v4101
      %v4145 = vunpack.c.l.b16 %v4102
      %v4146 = vunpack.c.l.b16 %v4103
      %v4147 = vunpack.c.l.b16 %v4104
      %v4148 = vunpack.c.l.b16 %v4105
      %v4149 = vunpack.c.l.b16 %v4106
      %v4150 = vunpack.c.l.b16 %v4107
      %v4151 = vunpack.c.l.b16 %v4108
      %v4152 = vunpack.c.l.b16 %v4109
      %v4153 = vunpack.c.l.b16 %v4110
      %v4154 = vunpack.c.l.b16 %v4111
      %v4155 = vpack.c.b16 %v4140, %v4139
      %v4156 = vpack.c.b16 %v4142, %v4141
      %v4157 = vpack.c.b16 %v4144, %v4143
      %v4158 = vpack.c.b16 %v4146, %v4145
      %v4159 = vpack.c.b16 %v4148, %v4147
      %v4160 = vpack.c.b16 %v4150, %v4149
      %v4161 = vpack.c.b16 %v4152, %v4151
      %v4162 = vpack.c.b16 %v4154, %v4153
      %4171 = vmatprep.subr.bf16.mxu0 0
      %4172 = vmatpush1.bf16.msra.mxu0 %v4155
      %4173 = vmatprep.subr.bf16.mxu0 0
      %4174 = vmatpush1.bf16.msra.mxu0 %v4156
      %4175 = vmatprep.subr.bf16.mxu0 0
      %4176 = vmatpush1.bf16.msra.mxu0 %v4157
      %4177 = vmatprep.subr.bf16.mxu0 0
      %4178 = vmatpush1.bf16.msra.mxu0 %v4158
      %4179 = vmatprep.subr.bf16.mxu0 0
      %4180 = vmatpush1.bf16.msra.mxu0 %v4159
      %4181 = vmatprep.subr.bf16.mxu0 0
      %4182 = vmatpush1.bf16.msra.mxu0 %v4160
      %4183 = vmatprep.subr.bf16.mxu0 0
      %4184 = vmatpush1.bf16.msra.mxu0 %v4161
      %4185 = vmatprep.subr.bf16.mxu0 0
      %4186 = vmatpush1.bf16.msra.mxu0 %v4162
      %4187 = vmatprep.subr.bf16.mxu0 0
      %4188 = vmatpush1.bf16.msra.mxu0 0
      %4189 = vmatprep.subr.bf16.mxu0 0
      %4190 = vmatpush1.bf16.msra.mxu0 0
      %4191 = vmatprep.subr.bf16.mxu0 0
      %4192 = vmatpush1.bf16.msra.mxu0 0
      %4193 = vmatprep.subr.bf16.mxu0 0
      %4194 = vmatpush1.bf16.msra.mxu0 0
      %4195 = vmatprep.subr.bf16.mxu0 0
      %4196 = vmatpush1.bf16.msra.mxu0 0
      %4197 = vmatprep.subr.bf16.mxu0 0
      %4198 = vmatpush1.bf16.msra.mxu0 0
      %4199 = vmatprep.subr.bf16.mxu0 0
      %4200 = vmatpush1.bf16.msra.mxu0 0
      %4201 = vmatprep.subr.bf16.mxu0 0
      %4202 = vmatpush1.bf16.msra.mxu0 0
      %4203 = vmatprep.mubr.bf16.mxu0 0
      %4204 = vmatmul.mubr.bf16.gmra.mrb[0].mxu0 %v4121
      %v4205 = vpop.f32.mrb[0].mxu0
      %v4206 = vadd.f32 0.0, %v4205
      %v4207 = vpop.f32.mrb[0].mxu0
      %v4208 = vpop.f32.mrb[0].mxu0
      %v4209 = vpop.f32.mrb[0].mxu0
      %4210 = vdwg.mxu0
      %v4211 = vadd.f32 %v4094, %v4206
      %v4212 = vmax.f32 %v4211, 0.0
      %v4213 = vmin.f32 %v4212, 6.0
      %v4214 = vpack.c.bf16 %v4213, %v4213
      %s4215 = scalar_lea.vmem %s217, 6
      %4216 = vst [vmem:[%s4215] sm:$0x3] %v4214
      %p4217 = scmp.lt.s32.totalorder %s15, 1
      %s4218 = scalar_select %p4217, %s15, 1
      %s4219 = smul.addr %s4218, 4
      %s4220 = smul.addr %s4219, 2
      %s4221 = scalar_lea.vmem %s4, %s4220
      // Predicated region
      $region37: #{_lambda_.4} parent=35 // pred_check
        %p4222 = pneg %p127
      $region38: #{_lambda_.4} parent=35 // pred_check_branch
        %4224 = sbr.rel (%p4222) target = $region40
      $region39: #{_lambda_.4} parent=35 // pred_region
        _
      $region40: #{_lambda_.4} parent=35 // pred_fallthru
        _
    $region36: #{_lambda_.4} parent=5 // pred_fallthru
      _
    %p4225 = scmp.le.s32.totalorder 2, %s10
    // Predicated region
    $region41: #{_lambda_.4} parent=5 // pred_check
      %p4226 = pneg %p4225
    $region42: #{_lambda_.4} parent=5 // pred_check_branch
      %4228 = sbr.rel (%p4226) target = $region44
    $region43: #{_lambda_.4} parent=5 // pred_region
      %s4229 = ssub.s32 %s10, 2
      // Predicated region
      $region45: #{_lambda_.4} parent=43 // pred_check
        %p4230 = pneg %p133
      $region46: #{_lambda_.4} parent=43 // pred_check_branch
        %4232 = sbr.rel (%p4230) target = $region48
      $region47: #{_lambda_.4} parent=43 // pred_region
        %p4233 = scmp.lt.s32.totalorder %s16, 1
        %s4234 = scalar_select %p4233, %s16, 1
        %s4235 = smul.addr %s4234, 4
        %s4236 = smul.addr %s4235, 2
        %s4237 = scalar_lea.vmem %s4, %s4236
      $region48: #{_lambda_.4} parent=43 // pred_fallthru
        _
    $region44: #{_lambda_.4} parent=5 // pred_fallthru
      _
  $region6: #{_lambda_.4} parent=0 // loop_footer
    %s14 = sadd.s32 1, %s10
  $region7: #{_lambda_.4} parent=0 // loop_footer_branch
    %9 = sbr.rel target = $region3
  $region8: #{_lambda_.4} parent=0 // loop_exit
    _

</llo_original>
